<compile_context>
chip_gen: v5e
topology: v5e:2x2
jax: 0.10.0
libtpu: 0.0.40
codegen_flags: <defaults>
</compile_context>

<pallas_src>
import functools

import numpy as np
import jax
import jax.numpy as jnp
from jax import lax
from jax.experimental import pallas as pl
from jax.experimental.pallas import tpu as pltpu

NEG_SLOPE = 0.2      # LeakyReLU(0.2)  == get_non_linearity('lrelu')
BN_EPS = 1e-5        # nn.BatchNorm2d default eps
F32 = jnp.float32
BF16 = jnp.bfloat16


def _vmem():
    return pl.BlockSpec(memory_space=pltpu.MemorySpace.VMEM)


# ----------------------------- Pallas kernels --------------------------------

def _fc_lrelu_kernel(x_ref, w_ref, b_ref, o_ref, *, neg_slope):
    y = jnp.dot(x_ref[...], w_ref[...], preferred_element_type=jnp.float32)
    y = y + b_ref[...]
    o_ref[...] = jnp.where(y >= 0.0, y, neg_slope * y).astype(o_ref.dtype)


def _conv_rows(x, w, b, out_rows):
    """Accumulate the 3 row-taps of a banded conv for batch element b."""
    acc = None
    for dy in range(3):
        win = x[b, dy:dy + out_rows, :]                       # (Ho, Wp*Cin)
        d = jnp.dot(win, w[dy], preferred_element_type=jnp.float32)
        acc = d if acc is None else acc + d
    return acc                                                # (Ho, Wtot) f32


def _conv_bn_lrelu_kernel(x_ref, w_ref, gamma_ref, beta_ref, s_ref, o_ref, *,
                          batch, out_rows, inv_count, eps, neg_slope):
    """Fused (conv3x3 | sub-pixel deconv) + train-mode BatchNorm + LeakyReLU."""
    x = x_ref[...]                                            # (B, Hp, Wp*Cin) bf16
    w = w_ref[...]                                            # (3, Wp*Cin, Wtot) bf16
    accs = [_conv_rows(x, w, b, out_rows) for b in range(batch)]

    # Column sums / sums of squares (f32), folded per channel with a single
    # constant matmul  S[i, j] = (i % Cout == j % Cout).
    rsum = accs[0].sum(axis=0, keepdims=True)
    rsq = (accs[0] * accs[0]).sum(axis=0, keepdims=True)
    for b in range(1, batch):
        rsum = rsum + accs[b].sum(axis=0, keepdims=True)
        rsq = rsq + (accs[b] * accs[b]).sum(axis=0, keepdims=True)
    s = s_ref[...]
    mean = jnp.dot(rsum, s, preferred_element_type=jnp.float32) * inv_count
    ex2 = jnp.dot(rsq, s, preferred_element_type=jnp.float32) * inv_count
    var = jnp.maximum(ex2 - mean * mean, 0.0)
    scale = lax.rsqrt(var + eps) * gamma_ref[...]
    shift = beta_ref[...] - mean * scale

    for b in range(batch):
        y = accs[b] * scale + shift
        y = jnp.where(y >= 0.0, y, neg_slope * y)
        o_ref[b * out_rows:(b + 1) * out_rows, :] = y.astype(o_ref.dtype)


def _conv_bias_kernel(x_ref, w_ref, bias_ref, o_ref, *, batch, out_rows):
    """Fused conv3x3 + bias (final layer: no norm, no activation)."""
    x = x_ref[...]
    w = w_ref[...]
    bias = bias_ref[...]
    for b in range(batch):
        acc = _conv_rows(x, w, b, out_rows)
        o_ref[b * out_rows:(b + 1) * out_rows, :] = (acc + bias).astype(o_ref.dtype)


# ------------------------ XLA glue (static slices only) ----------------------

def _bilinear_up2(x):
    """nn.Upsample(scale_factor=2, mode='bilinear', align_corners=False),
    using only static slices + fixed 0.25/0.75 lerps (no gathers)."""
    def up_axis(x, axis):
        n = x.shape[axis]
        first = lax.slice_in_dim(x, 0, 1, axis=axis)
        last = lax.slice_in_dim(x, n - 1, n, axis=axis)
        prv = lax.slice_in_dim(jnp.concatenate([first, x], axis=axis), 0, n, axis=axis)
        nxt = lax.slice_in_dim(jnp.concatenate([x, last], axis=axis), 1, n + 1, axis=axis)
        even = 0.25 * prv + 0.75 * x
        odd = 0.75 * x + 0.25 * nxt
        y = jnp.stack([even, odd], axis=axis + 1)
        shape = list(x.shape)
        shape[axis] = 2 * n
        return y.reshape(shape)
    return up_axis(up_axis(x, 1), 2)


def _unphase(y, b, ho, wo, cout):
    """(B*Ho, Wo*4*Cout) phase-blocked deconv output -> (B, 2Ho, 2Wo, Cout)."""
    y = y.reshape(b, ho, wo, 2, 2, cout)
    y = jnp.transpose(y, (0, 1, 3, 2, 4, 5))
    return y.reshape(b, 2 * ho, 2 * wo, cout)


# ------------------------- weight pre-packing (init) -------------------------

# Sub-pixel decomposition of ConvTranspose2d(k=4, s=2, p=1), per axis:
#   output phase r=0 uses kernel taps {3, 1}, phase r=1 uses {2, 0}.
_KTAP = ({0: 3, 1: 1, 2: None},    # phase r=0: padded tap offset dy -> kernel row
         {0: None, 1: 2, 2: 0})    # phase r=1


def _banded(taps33, w_out, cin, nout):
    """Fold the horizontal (dx) taps and per-output-column blocks into banded
    matmul operands: 3 matrices of shape (Wp*Cin, Wo*Nout), one per row tap."""
    wp = w_out + 2
    m = np.zeros((3, wp * cin, w_out * nout), np.float32)
    for dy in range(3):
        for dx in range(3):
            blk = taps33[dy][dx]
            for w in range(w_out):
                p = w + dx
                m[dy, p * cin:(p + 1) * cin, w * nout:(w + 1) * nout] += blk
    return jnp.asarray(m, dtype=BF16)


def _pack_conv3x3(w_oihw, w_out):
    """Conv2d weight (Cout, Cin, 3, 3) -> banded bf16 matmul operands."""
    w = np.asarray(w_oihw, np.float32)
    taps = [[w[:, :, dy, dx].T for dx in range(3)] for dy in range(3)]
    return _banded(taps, w_out, w.shape[1], w.shape[0])


def _pack_deconv4x4(w_iohw, w_out):
    """ConvTranspose2d(4,2,1) weight (Cin, Cout, 4, 4) -> banded bf16 operands
    for the 4-phase sub-pixel decomposition (phases packed into the lane dim)."""
    w = np.asarray(w_iohw, np.float32)
    cin, cout = w.shape[0], w.shape[1]

    def tap(dy, dx):
        blocks = []
        for ry in range(2):
            for rx in range(2):
                ky, kx = _KTAP[ry][dy], _KTAP[rx][dx]
                if ky is None or kx is None:
                    blocks.append(np.zeros((cin, cout), np.float32))
                else:
                    blocks.append(w[:, :, ky, kx])
        return np.concatenate(blocks, axis=1)                 # (Cin, 4*Cout)

    taps = [[tap(dy, dx) for dx in range(3)] for dy in range(3)]
    return _banded(taps, w_out, cin, 4 * cout)


# ---------------------------- layer call wrappers -----------------------------

def _run_conv_bn_lrelu(xpad, lyr):
    b, hp, wp, cin = xpad.shape
    m = lyr['meta']
    ho, wo, cout, nph = m['Ho'], m['Wo'], m['Cout'], m['n_phases']
    assert hp == ho + 2 and wp == wo + 2, (xpad.shape, m)
    wtot = wo * nph * cout
    x2 = xpad.astype(BF16).reshape(b, hp, wp * cin)           # halo tile, flattened lanes
    kern = functools.partial(_conv_bn_lrelu_kernel, batch=b, out_rows=ho,
                             inv_count=1.0 / float(b * ho * wo * nph),
                             eps=BN_EPS, neg_slope=NEG_SLOPE)
    return pl.pallas_call(
        kern,
        out_shape=jax.ShapeDtypeStruct((b * ho, wtot), BF16),
        in_specs=[_vmem() for _ in range(5)],
        out_specs=_vmem(),
    )(x2, lyr['wt'], lyr['gamma_t'], lyr['beta_t'], lyr['S'])


def _run_conv_bias(xpad, lyr):
    b, hp, wp, cin = xpad.shape
    m = lyr['meta']
    ho, wo, cout = m['Ho'], m['Wo'], m['Cout']
    assert hp == ho + 2 and wp == wo + 2, (xpad.shape, m)
    x2 = xpad.astype(BF16).reshape(b, hp, wp * cin)
    kern = functools.partial(_conv_bias_kernel, batch=b, out_rows=ho)
    return pl.pallas_call(
        kern,
        out_shape=jax.ShapeDtypeStruct((b * ho, wo * cout), F32),
        in_specs=[_vmem() for _ in range(3)],
        out_specs=_vmem(),
    )(x2, lyr['wt'], lyr['bias_t'])


# ------------------------------- depthDecoder --------------------------------

def init_depth_decoder(key, output_nc=1, nf=8, n_layers=4, n_bilinear_layers=3,
                       nz=16):
    keys = iter(jax.random.split(key, 3 * n_layers + 4))

    def nrm(shape, scale=0.05):
        return scale * jax.random.normal(next(keys), shape, dtype=F32)

    nf_mult = 4
    params = {
        'nf': nf,
        'output_nc': output_nc,
        'fc': {'w': nrm((nz, nf * nf_mult)).astype(BF16),     # Linear(nz, 4*nf)
               'b': nrm((1, nf * nf_mult))},
    }
    layers = []
    spatial = 1                                   # decoder starts from 1x1
    for n in range(1, n_layers + 1):
        nf_prev = nf_mult
        nf_mult = min(2 ** (n_layers - n - 1), 4)
        cin, cout = int(nf * nf_prev), int(nf * nf_mult)
        kind = 'bilinear' if (n_layers - n) < n_bilinear_layers else 'basic'
        if kind == 'basic':
            w = nrm((cin, cout, 4, 4))            # PyTorch ConvTranspose2d layout
            h_conv, nph = spatial, 4              # conv runs on the low-res grid
            wt = _pack_deconv4x4(w, h_conv)
        else:
            w = nrm((cout, cin, 3, 3))            # PyTorch Conv2d layout
            h_conv, nph = 2 * spatial, 1          # conv runs on the upsampled grid
            wt = _pack_conv3x3(w, h_conv)
        # NOTE: conv/deconv bias before BatchNorm is mathematically cancelled
        # by the mean subtraction -> dropped (dead work).
        gamma = 1.0 + nrm((cout,))                # BatchNorm2d affine params
        beta = nrm((cout,))
        wtot = h_conv * nph * cout
        cidx = np.arange(wtot) % cout
        layers.append({
            'kind': kind,
            'wt': wt,                                          # (3, Wp*Cin, Wtot) bf16
            'gamma_t': jnp.tile(gamma, h_conv * nph)[None, :],  # (1, Wtot) f32
            'beta_t': jnp.tile(beta, h_conv * nph)[None, :],
            'S': jnp.asarray((cidx[:, None] == cidx[None, :]).astype(np.float32)),
            'meta': {'Ho': h_conv, 'Wo': h_conv, 'Cout': cout, 'n_phases': nph},
        })
        spatial *= 2
    params['layers'] = layers
    cfin = int(nf * nf_mult)
    params['final'] = {
        'wt': _pack_conv3x3(nrm((output_nc, cfin, 3, 3)), spatial),
        'bias_t': jnp.tile(nrm((output_nc,)), spatial)[None, :],   # (1, W*out_nc)
        'meta': {'Ho': spatial, 'Wo': spatial, 'Cout': output_nc, 'n_phases': 1},
    }
    return params


def depth_decoder_forward(params, z):
    b = z.shape[0]
    nf = params['nf']
    fc = params['fc']
    # self.fc: Linear(nz, 4*nf) + LeakyReLU(0.2), then .view(B, 4*nf, 1, 1)
    feat = pl.pallas_call(
        functools.partial(_fc_lrelu_kernel, neg_slope=NEG_SLOPE),
        out_shape=jax.ShapeDtypeStruct((b, 4 * nf), BF16),
        in_specs=[_vmem() for _ in range(3)],
        out_specs=_vmem(),
    )(z.astype(BF16), fc['w'], fc['b'])
    x = feat.reshape(b, 1, 1, 4 * nf)                   # NHWC, 1x1 spatial

    # TODO(synk): at non-toy resolutions, tile these fused kernels over rows
    # with a grid + dimension_semantics=("parallel",) and a two-pass BN; at
    # this config every layer fits a single VMEM block with large headroom.
    for lyr in params['layers']:
        m = lyr['meta']
        if lyr['kind'] == 'basic':
            xp = jnp.pad(x, ((0, 0), (1, 1), (1, 1), (0, 0)))           # zero pad
            y = _run_conv_bn_lrelu(xp, lyr)                             # phase-blocked
            x = _unphase(y, b, m['Ho'], m['Wo'], m['Cout'])
        else:
            xu = _bilinear_up2(x)
            xp = jnp.pad(xu, ((0, 0), (1, 1), (1, 1), (0, 0)), mode='reflect')
            y = _run_conv_bn_lrelu(xp, lyr)
            x = y.reshape(b, m['Ho'], m['Wo'], m['Cout'])

    m = params['final']['meta']
    xp = jnp.pad(x, ((0, 0), (1, 1), (1, 1), (0, 0)))                   # Conv2d pad=1
    y = _run_conv_bias(xp, params['final'])
    out = y.reshape(b, m['Ho'], m['Wo'], m['Cout'])
    return jnp.transpose(out, (0, 3, 1, 2))             # NHWC -> NCHW (PyTorch)


if __name__ == "__main__":
    key = jax.random.PRNGKey(0)
    pkey, zkey = jax.random.split(key)
    # Small config consistent with the module structure:
    #   output_nc=1, nf=8, n_layers=4, n_bilinear_layers=3, nz=16, dropout=False
    # -> channels 32 -> 32 -> 16 -> 8 -> 4 -> 1, spatial 1 -> 2 -> 4 -> 8 -> 16
    params = init_depth_decoder(pkey, output_nc=1, nf=8, n_layers=4,
                                n_bilinear_layers=3, nz=16)
    z = jax.random.normal(zkey, (2, 16), dtype=F32)
    fwd = jax.jit(functools.partial(depth_decoder_forward, params))
    out = jax.block_until_ready(fwd(z))
    assert out.shape == (2, 1, 16, 16), out.shape
    assert bool(jnp.all(jnp.isfinite(out)))
    print("KERNEL_OK")
</pallas_src>

<mosaic_0001>
module attributes {stable_mosaic.version = 11 : i64} {
  func.func @_fc_lrelu_kernel(%arg0: memref<2x16xbf16, #tpu.memory_space<vmem>>, %arg1: memref<16x32xbf16, #tpu.memory_space<vmem>>, %arg2: memref<1x32xf32, #tpu.memory_space<vmem>>, %arg3: memref<2x32xbf16, #tpu.memory_space<vmem>>) attributes {dimension_semantics = [], scalar_prefetch = 0 : i64, scratch_operands = 0 : i64, tpu.core_type = #tpu.core_type<tc>} {
    %c0 = arith.constant 0 : index
    %c0_0 = arith.constant 0 : index
    %0 = vector.load %arg0[%c0, %c0_0] : memref<2x16xbf16, #tpu.memory_space<vmem>>, vector<2x16xbf16>
    %c0_1 = arith.constant 0 : index
    %c0_2 = arith.constant 0 : index
    %1 = vector.load %arg1[%c0_1, %c0_2] : memref<16x32xbf16, #tpu.memory_space<vmem>>, vector<16x32xbf16>
    %cst = arith.constant dense<0.000000e+00> : vector<2x32xf32>
    %2 = tpu.matmul %0, %1, %cst {dimension_numbers = #tpu.dot_dimension_numbers<[1], [0], [0], [1], [0, 0, 1, 1], [], []>} : vector<2x16xbf16>, vector<16x32xbf16>, vector<2x32xf32> -> vector<2x32xf32>
    %c0_3 = arith.constant 0 : index
    %c0_4 = arith.constant 0 : index
    %3 = vector.load %arg2[%c0_3, %c0_4] : memref<1x32xf32, #tpu.memory_space<vmem>>, vector<1x32xf32>
    %4 = vector.broadcast %3 : vector<1x32xf32> to vector<2x32xf32>
    %5 = arith.addf %2, %4 : vector<2x32xf32>
    %cst_5 = arith.constant 0.000000e+00 : f32
    %6 = vector.broadcast %cst_5 : f32 to vector<2x32xf32>
    %7 = arith.cmpf oge, %5, %6 : vector<2x32xf32>
    %cst_6 = arith.constant 2.000000e-01 : f32
    %8 = vector.broadcast %cst_6 : f32 to vector<2x32xf32>
    %9 = arith.mulf %8, %5 : vector<2x32xf32>
    %10 = arith.select %7, %5, %9 : vector<2x32xi1>, vector<2x32xf32>
    %11 = arith.truncf %10 : vector<2x32xf32> to vector<2x32xbf16>
    %c0_7 = arith.constant 0 : index
    %c0_8 = arith.constant 0 : index
    %12 = vector.load %arg3[%c0_7, %c0_8] : memref<2x32xbf16, #tpu.memory_space<vmem>>, vector<2x32xbf16>
    tpu.vector_store %arg3[%c0_7, %c0_8], %11 {strides = array<i32>} : memref<2x32xbf16, #tpu.memory_space<vmem>>, vector<2x32xbf16>,
    return
  }
}

module attributes {stable_mosaic.version = 11 : i64} {
  func.func @_conv_bn_lrelu_kernel(%arg0: memref<2x3x96xbf16, #tpu.memory_space<vmem>>, %arg1: memref<3x96x128xbf16, #tpu.memory_space<vmem>>, %arg2: memref<1x128xf32, #tpu.memory_space<vmem>>, %arg3: memref<1x128xf32, #tpu.memory_space<vmem>>, %arg4: memref<128x128xf32, #tpu.memory_space<vmem>>, %arg5: memref<2x128xbf16, #tpu.memory_space<vmem>>) attributes {dimension_semantics = [], scalar_prefetch = 0 : i64, scratch_operands = 0 : i64, tpu.core_type = #tpu.core_type<tc>} {
    %c0 = arith.constant 0 : index
    %c0_0 = arith.constant 0 : index
    %c0_1 = arith.constant 0 : index
    %0 = vector.load %arg0[%c0, %c0_0, %c0_1] : memref<2x3x96xbf16, #tpu.memory_space<vmem>>, vector<2x3x96xbf16>
    %c0_2 = arith.constant 0 : index
    %c0_3 = arith.constant 0 : index
    %c0_4 = arith.constant 0 : index
    %1 = vector.load %arg1[%c0_2, %c0_3, %c0_4] : memref<3x96x128xbf16, #tpu.memory_space<vmem>>, vector<3x96x128xbf16>
    %2 = vector.extract_strided_slice %0 {offsets = [0, 0, 0], sizes = [1, 1, 96], strides = [1, 1, 1]} : vector<2x3x96xbf16> to vector<1x1x96xbf16>
    %3 = vector.shape_cast %2 : vector<1x1x96xbf16> to vector<1x96xbf16>
    %4 = vector.extract_strided_slice %1 {offsets = [0, 0, 0], sizes = [1, 96, 128], strides = [1, 1, 1]} : vector<3x96x128xbf16> to vector<1x96x128xbf16>
    %5 = vector.shape_cast %4 : vector<1x96x128xbf16> to vector<96x128xbf16>
    %cst = arith.constant dense<0.000000e+00> : vector<1x128xf32>
    %6 = tpu.matmul %3, %5, %cst {dimension_numbers = #tpu.dot_dimension_numbers<[1], [0], [0], [1], [0, 0, 1, 1], [], []>} : vector<1x96xbf16>, vector<96x128xbf16>, vector<1x128xf32> -> vector<1x128xf32>
    %7 = vector.extract_strided_slice %0 {offsets = [0, 1, 0], sizes = [1, 1, 96], strides = [1, 1, 1]} : vector<2x3x96xbf16> to vector<1x1x96xbf16>
    %8 = vector.shape_cast %7 : vector<1x1x96xbf16> to vector<1x96xbf16>
    %9 = vector.extract_strided_slice %1 {offsets = [1, 0, 0], sizes = [1, 96, 128], strides = [1, 1, 1]} : vector<3x96x128xbf16> to vector<1x96x128xbf16>
    %10 = vector.shape_cast %9 : vector<1x96x128xbf16> to vector<96x128xbf16>
    %cst_5 = arith.constant dense<0.000000e+00> : vector<1x128xf32>
    %11 = tpu.matmul %8, %10, %cst_5 {dimension_numbers = #tpu.dot_dimension_numbers<[1], [0], [0], [1], [0, 0, 1, 1], [], []>} : vector<1x96xbf16>, vector<96x128xbf16>, vector<1x128xf32> -> vector<1x128xf32>
    %12 = arith.addf %6, %11 : vector<1x128xf32>
    %13 = vector.extract_strided_slice %0 {offsets = [0, 2, 0], sizes = [1, 1, 96], strides = [1, 1, 1]} : vector<2x3x96xbf16> to vector<1x1x96xbf16>
    %14 = vector.shape_cast %13 : vector<1x1x96xbf16> to vector<1x96xbf16>
    %15 = vector.extract_strided_slice %1 {offsets = [2, 0, 0], sizes = [1, 96, 128], strides = [1, 1, 1]} : vector<3x96x128xbf16> to vector<1x96x128xbf16>
    %16 = vector.shape_cast %15 : vector<1x96x128xbf16> to vector<96x128xbf16>
    %cst_6 = arith.constant dense<0.000000e+00> : vector<1x128xf32>
    %17 = tpu.matmul %14, %16, %cst_6 {dimension_numbers = #tpu.dot_dimension_numbers<[1], [0], [0], [1], [0, 0, 1, 1], [], []>} : vector<1x96xbf16>, vector<96x128xbf16>, vector<1x128xf32> -> vector<1x128xf32>
    %18 = arith.addf %12, %17 : vector<1x128xf32>
    %19 = vector.extract_strided_slice %0 {offsets = [1, 0, 0], sizes = [1, 1, 96], strides = [1, 1, 1]} : vector<2x3x96xbf16> to vector<1x1x96xbf16>
    %20 = vector.shape_cast %19 : vector<1x1x96xbf16> to vector<1x96xbf16>
    %21 = vector.extract_strided_slice %1 {offsets = [0, 0, 0], sizes = [1, 96, 128], strides = [1, 1, 1]} : vector<3x96x128xbf16> to vector<1x96x128xbf16>
    %22 = vector.shape_cast %21 : vector<1x96x128xbf16> to vector<96x128xbf16>
    %cst_7 = arith.constant dense<0.000000e+00> : vector<1x128xf32>
    %23 = tpu.matmul %20, %22, %cst_7 {dimension_numbers = #tpu.dot_dimension_numbers<[1], [0], [0], [1], [0, 0, 1, 1], [], []>} : vector<1x96xbf16>, vector<96x128xbf16>, vector<1x128xf32> -> vector<1x128xf32>
    %24 = vector.extract_strided_slice %0 {offsets = [1, 1, 0], sizes = [1, 1, 96], strides = [1, 1, 1]} : vector<2x3x96xbf16> to vector<1x1x96xbf16>
    %25 = vector.shape_cast %24 : vector<1x1x96xbf16> to vector<1x96xbf16>
    %26 = vector.extract_strided_slice %1 {offsets = [1, 0, 0], sizes = [1, 96, 128], strides = [1, 1, 1]} : vector<3x96x128xbf16> to vector<1x96x128xbf16>
    %27 = vector.shape_cast %26 : vector<1x96x128xbf16> to vector<96x128xbf16>
    %cst_8 = arith.constant dense<0.000000e+00> : vector<1x128xf32>
    %28 = tpu.matmul %25, %27, %cst_8 {dimension_numbers = #tpu.dot_dimension_numbers<[1], [0], [0], [1], [0, 0, 1, 1], [], []>} : vector<1x96xbf16>, vector<96x128xbf16>, vector<1x128xf32> -> vector<1x128xf32>
    %29 = arith.addf %23, %28 : vector<1x128xf32>
    %30 = vector.extract_strided_slice %0 {offsets = [1, 2, 0], sizes = [1, 1, 96], strides = [1, 1, 1]} : vector<2x3x96xbf16> to vector<1x1x96xbf16>
    %31 = vector.shape_cast %30 : vector<1x1x96xbf16> to vector<1x96xbf16>
    %32 = vector.extract_strided_slice %1 {offsets = [2, 0, 0], sizes = [1, 96, 128], strides = [1, 1, 1]} : vector<3x96x128xbf16> to vector<1x96x128xbf16>
    %33 = vector.shape_cast %32 : vector<1x96x128xbf16> to vector<96x128xbf16>
    %cst_9 = arith.constant dense<0.000000e+00> : vector<1x128xf32>
    %34 = tpu.matmul %31, %33, %cst_9 {dimension_numbers = #tpu.dot_dimension_numbers<[1], [0], [0], [1], [0, 0, 1, 1], [], []>} : vector<1x96xbf16>, vector<96x128xbf16>, vector<1x128xf32> -> vector<1x128xf32>
    %35 = arith.addf %29, %34 : vector<1x128xf32>
    %cst_10 = arith.constant dense<0.000000e+00> : vector<128xf32>
    %36 = vector.multi_reduction <add>, %18, %cst_10 [0] : vector<1x128xf32> to vector<128xf32>
    %37 = vector.shape_cast %36 : vector<128xf32> to vector<1x128xf32>
    %38 = arith.mulf %18, %18 : vector<1x128xf32>
    %cst_11 = arith.constant dense<0.000000e+00> : vector<128xf32>
    %39 = vector.multi_reduction <add>, %38, %cst_11 [0] : vector<1x128xf32> to vector<128xf32>
    %40 = vector.shape_cast %39 : vector<128xf32> to vector<1x128xf32>
    %cst_12 = arith.constant dense<0.000000e+00> : vector<128xf32>
    %41 = vector.multi_reduction <add>, %35, %cst_12 [0] : vector<1x128xf32> to vector<128xf32>
    %42 = vector.shape_cast %41 : vector<128xf32> to vector<1x128xf32>
    %43 = arith.addf %37, %42 : vector<1x128xf32>
    %44 = arith.mulf %35, %35 : vector<1x128xf32>
    %cst_13 = arith.constant dense<0.000000e+00> : vector<128xf32>
    %45 = vector.multi_reduction <add>, %44, %cst_13 [0] : vector<1x128xf32> to vector<128xf32>
    %46 = vector.shape_cast %45 : vector<128xf32> to vector<1x128xf32>
    %47 = arith.addf %40, %46 : vector<1x128xf32>
    %c0_14 = arith.constant 0 : index
    %c0_15 = arith.constant 0 : index
    %48 = vector.load %arg4[%c0_14, %c0_15] : memref<128x128xf32, #tpu.memory_space<vmem>>, vector<128x128xf32>
    %cst_16 = arith.constant dense<0.000000e+00> : vector<1x128xf32>
    %49 = tpu.matmul %43, %48, %cst_16 {dimension_numbers = #tpu.dot_dimension_numbers<[1], [0], [0], [1], [0, 0, 1, 1], [], []>} : vector<1x128xf32>, vector<128x128xf32>, vector<1x128xf32> -> vector<1x128xf32>
    %cst_17 = arith.constant 1.250000e-01 : f32
    %50 = vector.broadcast %cst_17 : f32 to vector<1x128xf32>
    %51 = arith.mulf %49, %50 : vector<1x128xf32>
    %cst_18 = arith.constant dense<0.000000e+00> : vector<1x128xf32>
    %52 = tpu.matmul %47, %48, %cst_18 {dimension_numbers = #tpu.dot_dimension_numbers<[1], [0], [0], [1], [0, 0, 1, 1], [], []>} : vector<1x128xf32>, vector<128x128xf32>, vector<1x128xf32> -> vector<1x128xf32>
    %cst_19 = arith.constant 1.250000e-01 : f32
    %53 = vector.broadcast %cst_19 : f32 to vector<1x128xf32>
    %54 = arith.mulf %52, %53 : vector<1x128xf32>
    %55 = arith.mulf %51, %51 : vector<1x128xf32>
    %56 = arith.subf %54, %55 : vector<1x128xf32>
    %cst_20 = arith.constant 0.000000e+00 : f32
    %57 = vector.broadcast %cst_20 : f32 to vector<1x128xf32>
    %58 = arith.maximumf %56, %57 : vector<1x128xf32>
    %cst_21 = arith.constant 9.99999974E-6 : f32
    %59 = vector.broadcast %cst_21 : f32 to vector<1x128xf32>
    %60 = arith.addf %58, %59 : vector<1x128xf32>
    %61 = math.rsqrt %60 : vector<1x128xf32>
    %c0_22 = arith.constant 0 : index
    %c0_23 = arith.constant 0 : index
    %62 = vector.load %arg2[%c0_22, %c0_23] : memref<1x128xf32, #tpu.memory_space<vmem>>, vector<1x128xf32>
    %63 = arith.mulf %61, %62 : vector<1x128xf32>
    %c0_24 = arith.constant 0 : index
    %c0_25 = arith.constant 0 : index
    %64 = vector.load %arg3[%c0_24, %c0_25] : memref<1x128xf32, #tpu.memory_space<vmem>>, vector<1x128xf32>
    %65 = arith.mulf %51, %63 : vector<1x128xf32>
    %66 = arith.subf %64, %65 : vector<1x128xf32>
    %67 = arith.mulf %18, %63 : vector<1x128xf32>
    %68 = arith.addf %67, %66 : vector<1x128xf32>
    %cst_26 = arith.constant 0.000000e+00 : f32
    %69 = vector.broadcast %cst_26 : f32 to vector<1x128xf32>
    %70 = arith.cmpf oge, %68, %69 : vector<1x128xf32>
    %cst_27 = arith.constant 2.000000e-01 : f32
    %71 = vector.broadcast %cst_27 : f32 to vector<1x128xf32>
    %72 = arith.mulf %71, %68 : vector<1x128xf32>
    %73 = arith.select %70, %68, %72 : vector<1x128xi1>, vector<1x128xf32>
    %74 = arith.truncf %73 : vector<1x128xf32> to vector<1x128xbf16>
    %c0_28 = arith.constant 0 : index
    %c0_29 = arith.constant 0 : index
    %75 = vector.load %arg5[%c0_28, %c0_29] : memref<2x128xbf16, #tpu.memory_space<vmem>>, vector<1x128xbf16>
    tpu.vector_store %arg5[%c0_28, %c0_29], %74 {strides = array<i32>} : memref<2x128xbf16, #tpu.memory_space<vmem>>, vector<1x128xbf16>,
    %76 = arith.mulf %35, %63 : vector<1x128xf32>
    %77 = arith.addf %76, %66 : vector<1x128xf32>
    %cst_30 = arith.constant 0.000000e+00 : f32
    %78 = vector.broadcast %cst_30 : f32 to vector<1x128xf32>
    %79 = arith.cmpf oge, %77, %78 : vector<1x128xf32>
    %cst_31 = arith.constant 2.000000e-01 : f32
    %80 = vector.broadcast %cst_31 : f32 to vector<1x128xf32>
    %81 = arith.mulf %80, %77 : vector<1x128xf32>
    %82 = arith.select %79, %77, %81 : vector<1x128xi1>, vector<1x128xf32>
    %83 = arith.truncf %82 : vector<1x128xf32> to vector<1x128xbf16>
    %c1 = arith.constant 1 : index
    %c0_32 = arith.constant 0 : index
    %84 = vector.load %arg5[%c1, %c0_32] : memref<2x128xbf16, #tpu.memory_space<vmem>>, vector<1x128xbf16>
    tpu.vector_store %arg5[%c1, %c0_32], %83 {strides = array<i32>} : memref<2x128xbf16, #tpu.memory_space<vmem>>, vector<1x128xbf16>,
    return
  }
}

module attributes {stable_mosaic.version = 11 : i64} {
  func.func @_conv_bn_lrelu_kernel(%arg0: memref<2x6x192xbf16, #tpu.memory_space<vmem>>, %arg1: memref<3x192x64xbf16, #tpu.memory_space<vmem>>, %arg2: memref<1x64xf32, #tpu.memory_space<vmem>>, %arg3: memref<1x64xf32, #tpu.memory_space<vmem>>, %arg4: memref<64x64xf32, #tpu.memory_space<vmem>>, %arg5: memref<8x64xbf16, #tpu.memory_space<vmem>>) attributes {dimension_semantics = [], scalar_prefetch = 0 : i64, scratch_operands = 0 : i64, tpu.core_type = #tpu.core_type<tc>} {
    %c0 = arith.constant 0 : index
    %c0_0 = arith.constant 0 : index
    %c0_1 = arith.constant 0 : index
    %0 = vector.load %arg0[%c0, %c0_0, %c0_1] : memref<2x6x192xbf16, #tpu.memory_space<vmem>>, vector<2x6x192xbf16>
    %c0_2 = arith.constant 0 : index
    %c0_3 = arith.constant 0 : index
    %c0_4 = arith.constant 0 : index
    %1 = vector.load %arg1[%c0_2, %c0_3, %c0_4] : memref<3x192x64xbf16, #tpu.memory_space<vmem>>, vector<3x192x64xbf16>
    %2 = vector.extract_strided_slice %0 {offsets = [0, 0, 0], sizes = [1, 4, 192], strides = [1, 1, 1]} : vector<2x6x192xbf16> to vector<1x4x192xbf16>
    %3 = vector.shape_cast %2 : vector<1x4x192xbf16> to vector<4x192xbf16>
    %4 = vector.extract_strided_slice %1 {offsets = [0, 0, 0], sizes = [1, 192, 64], strides = [1, 1, 1]} : vector<3x192x64xbf16> to vector<1x192x64xbf16>
    %5 = vector.shape_cast %4 : vector<1x192x64xbf16> to vector<192x64xbf16>
    %cst = arith.constant dense<0.000000e+00> : vector<4x64xf32>
    %6 = tpu.matmul %3, %5, %cst {dimension_numbers = #tpu.dot_dimension_numbers<[1], [0], [0], [1], [0, 0, 1, 1], [], []>} : vector<4x192xbf16>, vector<192x64xbf16>, vector<4x64xf32> -> vector<4x64xf32>
    %7 = vector.extract_strided_slice %0 {offsets = [0, 1, 0], sizes = [1, 4, 192], strides = [1, 1, 1]} : vector<2x6x192xbf16> to vector<1x4x192xbf16>
    %8 = vector.shape_cast %7 : vector<1x4x192xbf16> to vector<4x192xbf16>
    %9 = vector.extract_strided_slice %1 {offsets = [1, 0, 0], sizes = [1, 192, 64], strides = [1, 1, 1]} : vector<3x192x64xbf16> to vector<1x192x64xbf16>
    %10 = vector.shape_cast %9 : vector<1x192x64xbf16> to vector<192x64xbf16>
    %cst_5 = arith.constant dense<0.000000e+00> : vector<4x64xf32>
    %11 = tpu.matmul %8, %10, %cst_5 {dimension_numbers = #tpu.dot_dimension_numbers<[1], [0], [0], [1], [0, 0, 1, 1], [], []>} : vector<4x192xbf16>, vector<192x64xbf16>, vector<4x64xf32> -> vector<4x64xf32>
    %12 = arith.addf %6, %11 : vector<4x64xf32>
    %13 = vector.extract_strided_slice %0 {offsets = [0, 2, 0], sizes = [1, 4, 192], strides = [1, 1, 1]} : vector<2x6x192xbf16> to vector<1x4x192xbf16>
    %14 = vector.shape_cast %13 : vector<1x4x192xbf16> to vector<4x192xbf16>
    %15 = vector.extract_strided_slice %1 {offsets = [2, 0, 0], sizes = [1, 192, 64], strides = [1, 1, 1]} : vector<3x192x64xbf16> to vector<1x192x64xbf16>
    %16 = vector.shape_cast %15 : vector<1x192x64xbf16> to vector<192x64xbf16>
    %cst_6 = arith.constant dense<0.000000e+00> : vector<4x64xf32>
    %17 = tpu.matmul %14, %16, %cst_6 {dimension_numbers = #tpu.dot_dimension_numbers<[1], [0], [0], [1], [0, 0, 1, 1], [], []>} : vector<4x192xbf16>, vector<192x64xbf16>, vector<4x64xf32> -> vector<4x64xf32>
    %18 = arith.addf %12, %17 : vector<4x64xf32>
    %19 = vector.extract_strided_slice %0 {offsets = [1, 0, 0], sizes = [1, 4, 192], strides = [1, 1, 1]} : vector<2x6x192xbf16> to vector<1x4x192xbf16>
    %20 = vector.shape_cast %19 : vector<1x4x192xbf16> to vector<4x192xbf16>
    %21 = vector.extract_strided_slice %1 {offsets = [0, 0, 0], sizes = [1, 192, 64], strides = [1, 1, 1]} : vector<3x192x64xbf16> to vector<1x192x64xbf16>
    %22 = vector.shape_cast %21 : vector<1x192x64xbf16> to vector<192x64xbf16>
    %cst_7 = arith.constant dense<0.000000e+00> : vector<4x64xf32>
    %23 = tpu.matmul %20, %22, %cst_7 {dimension_numbers = #tpu.dot_dimension_numbers<[1], [0], [0], [1], [0, 0, 1, 1], [], []>} : vector<4x192xbf16>, vector<192x64xbf16>, vector<4x64xf32> -> vector<4x64xf32>
    %24 = vector.extract_strided_slice %0 {offsets = [1, 1, 0], sizes = [1, 4, 192], strides = [1, 1, 1]} : vector<2x6x192xbf16> to vector<1x4x192xbf16>
    %25 = vector.shape_cast %24 : vector<1x4x192xbf16> to vector<4x192xbf16>
    %26 = vector.extract_strided_slice %1 {offsets = [1, 0, 0], sizes = [1, 192, 64], strides = [1, 1, 1]} : vector<3x192x64xbf16> to vector<1x192x64xbf16>
    %27 = vector.shape_cast %26 : vector<1x192x64xbf16> to vector<192x64xbf16>
    %cst_8 = arith.constant dense<0.000000e+00> : vector<4x64xf32>
    %28 = tpu.matmul %25, %27, %cst_8 {dimension_numbers = #tpu.dot_dimension_numbers<[1], [0], [0], [1], [0, 0, 1, 1], [], []>} : vector<4x192xbf16>, vector<192x64xbf16>, vector<4x64xf32> -> vector<4x64xf32>
    %29 = arith.addf %23, %28 : vector<4x64xf32>
    %30 = vector.extract_strided_slice %0 {offsets = [1, 2, 0], sizes = [1, 4, 192], strides = [1, 1, 1]} : vector<2x6x192xbf16> to vector<1x4x192xbf16>
    %31 = vector.shape_cast %30 : vector<1x4x192xbf16> to vector<4x192xbf16>
    %32 = vector.extract_strided_slice %1 {offsets = [2, 0, 0], sizes = [1, 192, 64], strides = [1, 1, 1]} : vector<3x192x64xbf16> to vector<1x192x64xbf16>
    %33 = vector.shape_cast %32 : vector<1x192x64xbf16> to vector<192x64xbf16>
    %cst_9 = arith.constant dense<0.000000e+00> : vector<4x64xf32>
    %34 = tpu.matmul %31, %33, %cst_9 {dimension_numbers = #tpu.dot_dimension_numbers<[1], [0], [0], [1], [0, 0, 1, 1], [], []>} : vector<4x192xbf16>, vector<192x64xbf16>, vector<4x64xf32> -> vector<4x64xf32>
    %35 = arith.addf %29, %34 : vector<4x64xf32>
    %cst_10 = arith.constant dense<0.000000e+00> : vector<64xf32>
    %36 = vector.multi_reduction <add>, %18, %cst_10 [0] : vector<4x64xf32> to vector<64xf32>
    %37 = vector.shape_cast %36 : vector<64xf32> to vector<1x64xf32>
    %38 = arith.mulf %18, %18 : vector<4x64xf32>
    %cst_11 = arith.constant dense<0.000000e+00> : vector<64xf32>
    %39 = vector.multi_reduction <add>, %38, %cst_11 [0] : vector<4x64xf32> to vector<64xf32>
    %40 = vector.shape_cast %39 : vector<64xf32> to vector<1x64xf32>
    %cst_12 = arith.constant dense<0.000000e+00> : vector<64xf32>
    %41 = vector.multi_reduction <add>, %35, %cst_12 [0] : vector<4x64xf32> to vector<64xf32>
    %42 = vector.shape_cast %41 : vector<64xf32> to vector<1x64xf32>
    %43 = arith.addf %37, %42 : vector<1x64xf32>
    %44 = arith.mulf %35, %35 : vector<4x64xf32>
    %cst_13 = arith.constant dense<0.000000e+00> : vector<64xf32>
    %45 = vector.multi_reduction <add>, %44, %cst_13 [0] : vector<4x64xf32> to vector<64xf32>
    %46 = vector.shape_cast %45 : vector<64xf32> to vector<1x64xf32>
    %47 = arith.addf %40, %46 : vector<1x64xf32>
    %c0_14 = arith.constant 0 : index
    %c0_15 = arith.constant 0 : index
    %48 = vector.load %arg4[%c0_14, %c0_15] : memref<64x64xf32, #tpu.memory_space<vmem>>, vector<64x64xf32>
    %cst_16 = arith.constant dense<0.000000e+00> : vector<1x64xf32>
    %49 = tpu.matmul %43, %48, %cst_16 {dimension_numbers = #tpu.dot_dimension_numbers<[1], [0], [0], [1], [0, 0, 1, 1], [], []>} : vector<1x64xf32>, vector<64x64xf32>, vector<1x64xf32> -> vector<1x64xf32>
    %cst_17 = arith.constant 3.125000e-02 : f32
    %50 = vector.broadcast %cst_17 : f32 to vector<1x64xf32>
    %51 = arith.mulf %49, %50 : vector<1x64xf32>
    %cst_18 = arith.constant dense<0.000000e+00> : vector<1x64xf32>
    %52 = tpu.matmul %47, %48, %cst_18 {dimension_numbers = #tpu.dot_dimension_numbers<[1], [0], [0], [1], [0, 0, 1, 1], [], []>} : vector<1x64xf32>, vector<64x64xf32>, vector<1x64xf32> -> vector<1x64xf32>
    %cst_19 = arith.constant 3.125000e-02 : f32
    %53 = vector.broadcast %cst_19 : f32 to vector<1x64xf32>
    %54 = arith.mulf %52, %53 : vector<1x64xf32>
    %55 = arith.mulf %51, %51 : vector<1x64xf32>
    %56 = arith.subf %54, %55 : vector<1x64xf32>
    %cst_20 = arith.constant 0.000000e+00 : f32
    %57 = vector.broadcast %cst_20 : f32 to vector<1x64xf32>
    %58 = arith.maximumf %56, %57 : vector<1x64xf32>
    %cst_21 = arith.constant 9.99999974E-6 : f32
    %59 = vector.broadcast %cst_21 : f32 to vector<1x64xf32>
    %60 = arith.addf %58, %59 : vector<1x64xf32>
    %61 = math.rsqrt %60 : vector<1x64xf32>
    %c0_22 = arith.constant 0 : index
    %c0_23 = arith.constant 0 : index
    %62 = vector.load %arg2[%c0_22, %c0_23] : memref<1x64xf32, #tpu.memory_space<vmem>>, vector<1x64xf32>
    %63 = arith.mulf %61, %62 : vector<1x64xf32>
    %c0_24 = arith.constant 0 : index
    %c0_25 = arith.constant 0 : index
    %64 = vector.load %arg3[%c0_24, %c0_25] : memref<1x64xf32, #tpu.memory_space<vmem>>, vector<1x64xf32>
    %65 = arith.mulf %51, %63 : vector<1x64xf32>
    %66 = arith.subf %64, %65 : vector<1x64xf32>
    %67 = vector.broadcast %63 : vector<1x64xf32> to vector<4x64xf32>
    %68 = arith.mulf %18, %67 : vector<4x64xf32>
    %69 = vector.broadcast %66 : vector<1x64xf32> to vector<4x64xf32>
    %70 = arith.addf %68, %69 : vector<4x64xf32>
    %cst_26 = arith.constant 0.000000e+00 : f32
    %71 = vector.broadcast %cst_26 : f32 to vector<4x64xf32>
    %72 = arith.cmpf oge, %70, %71 : vector<4x64xf32>
    %cst_27 = arith.constant 2.000000e-01 : f32
    %73 = vector.broadcast %cst_27 : f32 to vector<4x64xf32>
    %74 = arith.mulf %73, %70 : vector<4x64xf32>
    %75 = arith.select %72, %70, %74 : vector<4x64xi1>, vector<4x64xf32>
    %76 = arith.truncf %75 : vector<4x64xf32> to vector<4x64xbf16>
    %c0_28 = arith.constant 0 : index
    %c0_29 = arith.constant 0 : index
    %77 = vector.load %arg5[%c0_28, %c0_29] : memref<8x64xbf16, #tpu.memory_space<vmem>>, vector<4x64xbf16>
    tpu.vector_store %arg5[%c0_28, %c0_29], %76 {strides = array<i32>} : memref<8x64xbf16, #tpu.memory_space<vmem>>, vector<4x64xbf16>,
    %78 = vector.broadcast %63 : vector<1x64xf32> to vector<4x64xf32>
    %79 = arith.mulf %35, %78 : vector<4x64xf32>
    %80 = vector.broadcast %66 : vector<1x64xf32> to vector<4x64xf32>
    %81 = arith.addf %79, %80 : vector<4x64xf32>
    %cst_30 = arith.constant 0.000000e+00 : f32
    %82 = vector.broadcast %cst_30 : f32 to vector<4x64xf32>
    %83 = arith.cmpf oge, %81, %82 : vector<4x64xf32>
    %cst_31 = arith.constant 2.000000e-01 : f32
    %84 = vector.broadcast %cst_31 : f32 to vector<4x64xf32>
    %85 = arith.mulf %84, %81 : vector<4x64xf32>
    %86 = arith.select %83, %81, %85 : vector<4x64xi1>, vector<4x64xf32>
    %87 = arith.truncf %86 : vector<4x64xf32> to vector<4x64xbf16>
    %c4 = arith.constant 4 : index
    %c0_32 = arith.constant 0 : index
    %88 = vector.load %arg5[%c4, %c0_32] : memref<8x64xbf16, #tpu.memory_space<vmem>>, vector<4x64xbf16>
    tpu.vector_store %arg5[%c4, %c0_32], %87 {strides = array<i32>} : memref<8x64xbf16, #tpu.memory_space<vmem>>, vector<4x64xbf16>,
    return
  }
}

module attributes {stable_mosaic.version = 11 : i64} {
  func.func @_conv_bn_lrelu_kernel(%arg0: memref<2x10x160xbf16, #tpu.memory_space<vmem>>, %arg1: memref<3x160x64xbf16, #tpu.memory_space<vmem>>, %arg2: memref<1x64xf32, #tpu.memory_space<vmem>>, %arg3: memref<1x64xf32, #tpu.memory_space<vmem>>, %arg4: memref<64x64xf32, #tpu.memory_space<vmem>>, %arg5: memref<16x64xbf16, #tpu.memory_space<vmem>>) attributes {dimension_semantics = [], scalar_prefetch = 0 : i64, scratch_operands = 0 : i64, tpu.core_type = #tpu.core_type<tc>} {
    %c0 = arith.constant 0 : index
    %c0_0 = arith.constant 0 : index
    %c0_1 = arith.constant 0 : index
    %0 = vector.load %arg0[%c0, %c0_0, %c0_1] : memref<2x10x160xbf16, #tpu.memory_space<vmem>>, vector<2x10x160xbf16>
    %c0_2 = arith.constant 0 : index
    %c0_3 = arith.constant 0 : index
    %c0_4 = arith.constant 0 : index
    %1 = vector.load %arg1[%c0_2, %c0_3, %c0_4] : memref<3x160x64xbf16, #tpu.memory_space<vmem>>, vector<3x160x64xbf16>
    %2 = vector.extract_strided_slice %0 {offsets = [0, 0, 0], sizes = [1, 8, 160], strides = [1, 1, 1]} : vector<2x10x160xbf16> to vector<1x8x160xbf16>
    %3 = vector.shape_cast %2 : vector<1x8x160xbf16> to vector<8x160xbf16>
    %4 = vector.extract_strided_slice %1 {offsets = [0, 0, 0], sizes = [1, 160, 64], strides = [1, 1, 1]} : vector<3x160x64xbf16> to vector<1x160x64xbf16>
    %5 = vector.shape_cast %4 : vector<1x160x64xbf16> to vector<160x64xbf16>
    %cst = arith.constant dense<0.000000e+00> : vector<8x64xf32>
    %6 = tpu.matmul %3, %5, %cst {dimension_numbers = #tpu.dot_dimension_numbers<[1], [0], [0], [1], [0, 0, 1, 1], [], []>} : vector<8x160xbf16>, vector<160x64xbf16>, vector<8x64xf32> -> vector<8x64xf32>
    %7 = vector.extract_strided_slice %0 {offsets = [0, 1, 0], sizes = [1, 8, 160], strides = [1, 1, 1]} : vector<2x10x160xbf16> to vector<1x8x160xbf16>
    %8 = vector.shape_cast %7 : vector<1x8x160xbf16> to vector<8x160xbf16>
    %9 = vector.extract_strided_slice %1 {offsets = [1, 0, 0], sizes = [1, 160, 64], strides = [1, 1, 1]} : vector<3x160x64xbf16> to vector<1x160x64xbf16>
    %10 = vector.shape_cast %9 : vector<1x160x64xbf16> to vector<160x64xbf16>
    %cst_5 = arith.constant dense<0.000000e+00> : vector<8x64xf32>
    %11 = tpu.matmul %8, %10, %cst_5 {dimension_numbers = #tpu.dot_dimension_numbers<[1], [0], [0], [1], [0, 0, 1, 1], [], []>} : vector<8x160xbf16>, vector<160x64xbf16>, vector<8x64xf32> -> vector<8x64xf32>
    %12 = arith.addf %6, %11 : vector<8x64xf32>
    %13 = vector.extract_strided_slice %0 {offsets = [0, 2, 0], sizes = [1, 8, 160], strides = [1, 1, 1]} : vector<2x10x160xbf16> to vector<1x8x160xbf16>
    %14 = vector.shape_cast %13 : vector<1x8x160xbf16> to vector<8x160xbf16>
    %15 = vector.extract_strided_slice %1 {offsets = [2, 0, 0], sizes = [1, 160, 64], strides = [1, 1, 1]} : vector<3x160x64xbf16> to vector<1x160x64xbf16>
    %16 = vector.shape_cast %15 : vector<1x160x64xbf16> to vector<160x64xbf16>
    %cst_6 = arith.constant dense<0.000000e+00> : vector<8x64xf32>
    %17 = tpu.matmul %14, %16, %cst_6 {dimension_numbers = #tpu.dot_dimension_numbers<[1], [0], [0], [1], [0, 0, 1, 1], [], []>} : vector<8x160xbf16>, vector<160x64xbf16>, vector<8x64xf32> -> vector<8x64xf32>
    %18 = arith.addf %12, %17 : vector<8x64xf32>
    %19 = vector.extract_strided_slice %0 {offsets = [1, 0, 0], sizes = [1, 8, 160], strides = [1, 1, 1]} : vector<2x10x160xbf16> to vector<1x8x160xbf16>
    %20 = vector.shape_cast %19 : vector<1x8x160xbf16> to vector<8x160xbf16>
    %21 = vector.extract_strided_slice %1 {offsets = [0, 0, 0], sizes = [1, 160, 64], strides = [1, 1, 1]} : vector<3x160x64xbf16> to vector<1x160x64xbf16>
    %22 = vector.shape_cast %21 : vector<1x160x64xbf16> to vector<160x64xbf16>
    %cst_7 = arith.constant dense<0.000000e+00> : vector<8x64xf32>
    %23 = tpu.matmul %20, %22, %cst_7 {dimension_numbers = #tpu.dot_dimension_numbers<[1], [0], [0], [1], [0, 0, 1, 1], [], []>} : vector<8x160xbf16>, vector<160x64xbf16>, vector<8x64xf32> -> vector<8x64xf32>
    %24 = vector.extract_strided_slice %0 {offsets = [1, 1, 0], sizes = [1, 8, 160], strides = [1, 1, 1]} : vector<2x10x160xbf16> to vector<1x8x160xbf16>
    %25 = vector.shape_cast %24 : vector<1x8x160xbf16> to vector<8x160xbf16>
    %26 = vector.extract_strided_slice %1 {offsets = [1, 0, 0], sizes = [1, 160, 64], strides = [1, 1, 1]} : vector<3x160x64xbf16> to vector<1x160x64xbf16>
    %27 = vector.shape_cast %26 : vector<1x160x64xbf16> to vector<160x64xbf16>
    %cst_8 = arith.constant dense<0.000000e+00> : vector<8x64xf32>
    %28 = tpu.matmul %25, %27, %cst_8 {dimension_numbers = #tpu.dot_dimension_numbers<[1], [0], [0], [1], [0, 0, 1, 1], [], []>} : vector<8x160xbf16>, vector<160x64xbf16>, vector<8x64xf32> -> vector<8x64xf32>
    %29 = arith.addf %23, %28 : vector<8x64xf32>
    %30 = vector.extract_strided_slice %0 {offsets = [1, 2, 0], sizes = [1, 8, 160], strides = [1, 1, 1]} : vector<2x10x160xbf16> to vector<1x8x160xbf16>
    %31 = vector.shape_cast %30 : vector<1x8x160xbf16> to vector<8x160xbf16>
    %32 = vector.extract_strided_slice %1 {offsets = [2, 0, 0], sizes = [1, 160, 64], strides = [1, 1, 1]} : vector<3x160x64xbf16> to vector<1x160x64xbf16>
    %33 = vector.shape_cast %32 : vector<1x160x64xbf16> to vector<160x64xbf16>
    %cst_9 = arith.constant dense<0.000000e+00> : vector<8x64xf32>
    %34 = tpu.matmul %31, %33, %cst_9 {dimension_numbers = #tpu.dot_dimension_numbers<[1], [0], [0], [1], [0, 0, 1, 1], [], []>} : vector<8x160xbf16>, vector<160x64xbf16>, vector<8x64xf32> -> vector<8x64xf32>
    %35 = arith.addf %29, %34 : vector<8x64xf32>
    %cst_10 = arith.constant dense<0.000000e+00> : vector<64xf32>
    %36 = vector.multi_reduction <add>, %18, %cst_10 [0] : vector<8x64xf32> to vector<64xf32>
    %37 = vector.shape_cast %36 : vector<64xf32> to vector<1x64xf32>
    %38 = arith.mulf %18, %18 : vector<8x64xf32>
    %cst_11 = arith.constant dense<0.000000e+00> : vector<64xf32>
    %39 = vector.multi_reduction <add>, %38, %cst_11 [0] : vector<8x64xf32> to vector<64xf32>
    %40 = vector.shape_cast %39 : vector<64xf32> to vector<1x64xf32>
    %cst_12 = arith.constant dense<0.000000e+00> : vector<64xf32>
    %41 = vector.multi_reduction <add>, %35, %cst_12 [0] : vector<8x64xf32> to vector<64xf32>
    %42 = vector.shape_cast %41 : vector<64xf32> to vector<1x64xf32>
    %43 = arith.addf %37, %42 : vector<1x64xf32>
    %44 = arith.mulf %35, %35 : vector<8x64xf32>
    %cst_13 = arith.constant dense<0.000000e+00> : vector<64xf32>
    %45 = vector.multi_reduction <add>, %44, %cst_13 [0] : vector<8x64xf32> to vector<64xf32>
    %46 = vector.shape_cast %45 : vector<64xf32> to vector<1x64xf32>
    %47 = arith.addf %40, %46 : vector<1x64xf32>
    %c0_14 = arith.constant 0 : index
    %c0_15 = arith.constant 0 : index
    %48 = vector.load %arg4[%c0_14, %c0_15] : memref<64x64xf32, #tpu.memory_space<vmem>>, vector<64x64xf32>
    %cst_16 = arith.constant dense<0.000000e+00> : vector<1x64xf32>
    %49 = tpu.matmul %43, %48, %cst_16 {dimension_numbers = #tpu.dot_dimension_numbers<[1], [0], [0], [1], [0, 0, 1, 1], [], []>} : vector<1x64xf32>, vector<64x64xf32>, vector<1x64xf32> -> vector<1x64xf32>
    %cst_17 = arith.constant 7.812500e-03 : f32
    %50 = vector.broadcast %cst_17 : f32 to vector<1x64xf32>
    %51 = arith.mulf %49, %50 : vector<1x64xf32>
    %cst_18 = arith.constant dense<0.000000e+00> : vector<1x64xf32>
    %52 = tpu.matmul %47, %48, %cst_18 {dimension_numbers = #tpu.dot_dimension_numbers<[1], [0], [0], [1], [0, 0, 1, 1], [], []>} : vector<1x64xf32>, vector<64x64xf32>, vector<1x64xf32> -> vector<1x64xf32>
    %cst_19 = arith.constant 7.812500e-03 : f32
    %53 = vector.broadcast %cst_19 : f32 to vector<1x64xf32>
    %54 = arith.mulf %52, %53 : vector<1x64xf32>
    %55 = arith.mulf %51, %51 : vector<1x64xf32>
    %56 = arith.subf %54, %55 : vector<1x64xf32>
    %cst_20 = arith.constant 0.000000e+00 : f32
    %57 = vector.broadcast %cst_20 : f32 to vector<1x64xf32>
    %58 = arith.maximumf %56, %57 : vector<1x64xf32>
    %cst_21 = arith.constant 9.99999974E-6 : f32
    %59 = vector.broadcast %cst_21 : f32 to vector<1x64xf32>
    %60 = arith.addf %58, %59 : vector<1x64xf32>
    %61 = math.rsqrt %60 : vector<1x64xf32>
    %c0_22 = arith.constant 0 : index
    %c0_23 = arith.constant 0 : index
    %62 = vector.load %arg2[%c0_22, %c0_23] : memref<1x64xf32, #tpu.memory_space<vmem>>, vector<1x64xf32>
    %63 = arith.mulf %61, %62 : vector<1x64xf32>
    %c0_24 = arith.constant 0 : index
    %c0_25 = arith.constant 0 : index
    %64 = vector.load %arg3[%c0_24, %c0_25] : memref<1x64xf32, #tpu.memory_space<vmem>>, vector<1x64xf32>
    %65 = arith.mulf %51, %63 : vector<1x64xf32>
    %66 = arith.subf %64, %65 : vector<1x64xf32>
    %67 = vector.broadcast %63 : vector<1x64xf32> to vector<8x64xf32>
    %68 = arith.mulf %18, %67 : vector<8x64xf32>
    %69 = vector.broadcast %66 : vector<1x64xf32> to vector<8x64xf32>
    %70 = arith.addf %68, %69 : vector<8x64xf32>
    %cst_26 = arith.constant 0.000000e+00 : f32
    %71 = vector.broadcast %cst_26 : f32 to vector<8x64xf32>
    %72 = arith.cmpf oge, %70, %71 : vector<8x64xf32>
    %cst_27 = arith.constant 2.000000e-01 : f32
    %73 = vector.broadcast %cst_27 : f32 to vector<8x64xf32>
    %74 = arith.mulf %73, %70 : vector<8x64xf32>
    %75 = arith.select %72, %70, %74 : vector<8x64xi1>, vector<8x64xf32>
    %76 = arith.truncf %75 : vector<8x64xf32> to vector<8x64xbf16>
    %c0_28 = arith.constant 0 : index
    %c0_29 = arith.constant 0 : index
    %77 = vector.load %arg5[%c0_28, %c0_29] : memref<16x64xbf16, #tpu.memory_space<vmem>>, vector<8x64xbf16>
    tpu.vector_store %arg5[%c0_28, %c0_29], %76 {strides = array<i32>} : memref<16x64xbf16, #tpu.memory_space<vmem>>, vector<8x64xbf16>,
    %78 = vector.broadcast %63 : vector<1x64xf32> to vector<8x64xf32>
    %79 = arith.mulf %35, %78 : vector<8x64xf32>
    %80 = vector.broadcast %66 : vector<1x64xf32> to vector<8x64xf32>
    %81 = arith.addf %79, %80 : vector<8x64xf32>
    %cst_30 = arith.constant 0.000000e+00 : f32
    %82 = vector.broadcast %cst_30 : f32 to vector<8x64xf32>
    %83 = arith.cmpf oge, %81, %82 : vector<8x64xf32>
    %cst_31 = arith.constant 2.000000e-01 : f32
    %84 = vector.broadcast %cst_31 : f32 to vector<8x64xf32>
    %85 = arith.mulf %84, %81 : vector<8x64xf32>
    %86 = arith.select %83, %81, %85 : vector<8x64xi1>, vector<8x64xf32>
    %87 = arith.truncf %86 : vector<8x64xf32> to vector<8x64xbf16>
    %c8 = arith.constant 8 : index
    %c0_32 = arith.constant 0 : index
    %88 = vector.load %arg5[%c8, %c0_32] : memref<16x64xbf16, #tpu.memory_space<vmem>>, vector<8x64xbf16>
    tpu.vector_store %arg5[%c8, %c0_32], %87 {strides = array<i32>} : memref<16x64xbf16, #tpu.memory_space<vmem>>, vector<8x64xbf16>,
    return
  }
}

module attributes {stable_mosaic.version = 11 : i64} {
  func.func @_conv_bn_lrelu_kernel(%arg0: memref<2x18x144xbf16, #tpu.memory_space<vmem>>, %arg1: memref<3x144x64xbf16, #tpu.memory_space<vmem>>, %arg2: memref<1x64xf32, #tpu.memory_space<vmem>>, %arg3: memref<1x64xf32, #tpu.memory_space<vmem>>, %arg4: memref<64x64xf32, #tpu.memory_space<vmem>>, %arg5: memref<32x64xbf16, #tpu.memory_space<vmem>>) attributes {dimension_semantics = [], scalar_prefetch = 0 : i64, scratch_operands = 0 : i64, tpu.core_type = #tpu.core_type<tc>} {
    %c0 = arith.constant 0 : index
    %c0_0 = arith.constant 0 : index
    %c0_1 = arith.constant 0 : index
    %0 = vector.load %arg0[%c0, %c0_0, %c0_1] : memref<2x18x144xbf16, #tpu.memory_space<vmem>>, vector<2x18x144xbf16>
    %c0_2 = arith.constant 0 : index
    %c0_3 = arith.constant 0 : index
    %c0_4 = arith.constant 0 : index
    %1 = vector.load %arg1[%c0_2, %c0_3, %c0_4] : memref<3x144x64xbf16, #tpu.memory_space<vmem>>, vector<3x144x64xbf16>
    %2 = vector.extract_strided_slice %0 {offsets = [0, 0, 0], sizes = [1, 16, 144], strides = [1, 1, 1]} : vector<2x18x144xbf16> to vector<1x16x144xbf16>
    %3 = vector.shape_cast %2 : vector<1x16x144xbf16> to vector<16x144xbf16>
    %4 = vector.extract_strided_slice %1 {offsets = [0, 0, 0], sizes = [1, 144, 64], strides = [1, 1, 1]} : vector<3x144x64xbf16> to vector<1x144x64xbf16>
    %5 = vector.shape_cast %4 : vector<1x144x64xbf16> to vector<144x64xbf16>
    %cst = arith.constant dense<0.000000e+00> : vector<16x64xf32>
    %6 = tpu.matmul %3, %5, %cst {dimension_numbers = #tpu.dot_dimension_numbers<[1], [0], [0], [1], [0, 0, 1, 1], [], []>} : vector<16x144xbf16>, vector<144x64xbf16>, vector<16x64xf32> -> vector<16x64xf32>
    %7 = vector.extract_strided_slice %0 {offsets = [0, 1, 0], sizes = [1, 16, 144], strides = [1, 1, 1]} : vector<2x18x144xbf16> to vector<1x16x144xbf16>
    %8 = vector.shape_cast %7 : vector<1x16x144xbf16> to vector<16x144xbf16>
    %9 = vector.extract_strided_slice %1 {offsets = [1, 0, 0], sizes = [1, 144, 64], strides = [1, 1, 1]} : vector<3x144x64xbf16> to vector<1x144x64xbf16>
    %10 = vector.shape_cast %9 : vector<1x144x64xbf16> to vector<144x64xbf16>
    %cst_5 = arith.constant dense<0.000000e+00> : vector<16x64xf32>
    %11 = tpu.matmul %8, %10, %cst_5 {dimension_numbers = #tpu.dot_dimension_numbers<[1], [0], [0], [1], [0, 0, 1, 1], [], []>} : vector<16x144xbf16>, vector<144x64xbf16>, vector<16x64xf32> -> vector<16x64xf32>
    %12 = arith.addf %6, %11 : vector<16x64xf32>
    %13 = vector.extract_strided_slice %0 {offsets = [0, 2, 0], sizes = [1, 16, 144], strides = [1, 1, 1]} : vector<2x18x144xbf16> to vector<1x16x144xbf16>
    %14 = vector.shape_cast %13 : vector<1x16x144xbf16> to vector<16x144xbf16>
    %15 = vector.extract_strided_slice %1 {offsets = [2, 0, 0], sizes = [1, 144, 64], strides = [1, 1, 1]} : vector<3x144x64xbf16> to vector<1x144x64xbf16>
    %16 = vector.shape_cast %15 : vector<1x144x64xbf16> to vector<144x64xbf16>
    %cst_6 = arith.constant dense<0.000000e+00> : vector<16x64xf32>
    %17 = tpu.matmul %14, %16, %cst_6 {dimension_numbers = #tpu.dot_dimension_numbers<[1], [0], [0], [1], [0, 0, 1, 1], [], []>} : vector<16x144xbf16>, vector<144x64xbf16>, vector<16x64xf32> -> vector<16x64xf32>
    %18 = arith.addf %12, %17 : vector<16x64xf32>
    %19 = vector.extract_strided_slice %0 {offsets = [1, 0, 0], sizes = [1, 16, 144], strides = [1, 1, 1]} : vector<2x18x144xbf16> to vector<1x16x144xbf16>
    %20 = vector.shape_cast %19 : vector<1x16x144xbf16> to vector<16x144xbf16>
    %21 = vector.extract_strided_slice %1 {offsets = [0, 0, 0], sizes = [1, 144, 64], strides = [1, 1, 1]} : vector<3x144x64xbf16> to vector<1x144x64xbf16>
    %22 = vector.shape_cast %21 : vector<1x144x64xbf16> to vector<144x64xbf16>
    %cst_7 = arith.constant dense<0.000000e+00> : vector<16x64xf32>
    %23 = tpu.matmul %20, %22, %cst_7 {dimension_numbers = #tpu.dot_dimension_numbers<[1], [0], [0], [1], [0, 0, 1, 1], [], []>} : vector<16x144xbf16>, vector<144x64xbf16>, vector<16x64xf32> -> vector<16x64xf32>
    %24 = vector.extract_strided_slice %0 {offsets = [1, 1, 0], sizes = [1, 16, 144], strides = [1, 1, 1]} : vector<2x18x144xbf16> to vector<1x16x144xbf16>
    %25 = vector.shape_cast %24 : vector<1x16x144xbf16> to vector<16x144xbf16>
    %26 = vector.extract_strided_slice %1 {offsets = [1, 0, 0], sizes = [1, 144, 64], strides = [1, 1, 1]} : vector<3x144x64xbf16> to vector<1x144x64xbf16>
    %27 = vector.shape_cast %26 : vector<1x144x64xbf16> to vector<144x64xbf16>
    %cst_8 = arith.constant dense<0.000000e+00> : vector<16x64xf32>
    %28 = tpu.matmul %25, %27, %cst_8 {dimension_numbers = #tpu.dot_dimension_numbers<[1], [0], [0], [1], [0, 0, 1, 1], [], []>} : vector<16x144xbf16>, vector<144x64xbf16>, vector<16x64xf32> -> vector<16x64xf32>
    %29 = arith.addf %23, %28 : vector<16x64xf32>
    %30 = vector.extract_strided_slice %0 {offsets = [1, 2, 0], sizes = [1, 16, 144], strides = [1, 1, 1]} : vector<2x18x144xbf16> to vector<1x16x144xbf16>
    %31 = vector.shape_cast %30 : vector<1x16x144xbf16> to vector<16x144xbf16>
    %32 = vector.extract_strided_slice %1 {offsets = [2, 0, 0], sizes = [1, 144, 64], strides = [1, 1, 1]} : vector<3x144x64xbf16> to vector<1x144x64xbf16>
    %33 = vector.shape_cast %32 : vector<1x144x64xbf16> to vector<144x64xbf16>
    %cst_9 = arith.constant dense<0.000000e+00> : vector<16x64xf32>
    %34 = tpu.matmul %31, %33, %cst_9 {dimension_numbers = #tpu.dot_dimension_numbers<[1], [0], [0], [1], [0, 0, 1, 1], [], []>} : vector<16x144xbf16>, vector<144x64xbf16>, vector<16x64xf32> -> vector<16x64xf32>
    %35 = arith.addf %29, %34 : vector<16x64xf32>
    %cst_10 = arith.constant dense<0.000000e+00> : vector<64xf32>
    %36 = vector.multi_reduction <add>, %18, %cst_10 [0] : vector<16x64xf32> to vector<64xf32>
    %37 = vector.shape_cast %36 : vector<64xf32> to vector<1x64xf32>
    %38 = arith.mulf %18, %18 : vector<16x64xf32>
    %cst_11 = arith.constant dense<0.000000e+00> : vector<64xf32>
    %39 = vector.multi_reduction <add>, %38, %cst_11 [0] : vector<16x64xf32> to vector<64xf32>
    %40 = vector.shape_cast %39 : vector<64xf32> to vector<1x64xf32>
    %cst_12 = arith.constant dense<0.000000e+00> : vector<64xf32>
    %41 = vector.multi_reduction <add>, %35, %cst_12 [0] : vector<16x64xf32> to vector<64xf32>
    %42 = vector.shape_cast %41 : vector<64xf32> to vector<1x64xf32>
    %43 = arith.addf %37, %42 : vector<1x64xf32>
    %44 = arith.mulf %35, %35 : vector<16x64xf32>
    %cst_13 = arith.constant dense<0.000000e+00> : vector<64xf32>
    %45 = vector.multi_reduction <add>, %44, %cst_13 [0] : vector<16x64xf32> to vector<64xf32>
    %46 = vector.shape_cast %45 : vector<64xf32> to vector<1x64xf32>
    %47 = arith.addf %40, %46 : vector<1x64xf32>
    %c0_14 = arith.constant 0 : index
    %c0_15 = arith.constant 0 : index
    %48 = vector.load %arg4[%c0_14, %c0_15] : memref<64x64xf32, #tpu.memory_space<vmem>>, vector<64x64xf32>
    %cst_16 = arith.constant dense<0.000000e+00> : vector<1x64xf32>
    %49 = tpu.matmul %43, %48, %cst_16 {dimension_numbers = #tpu.dot_dimension_numbers<[1], [0], [0], [1], [0, 0, 1, 1], [], []>} : vector<1x64xf32>, vector<64x64xf32>, vector<1x64xf32> -> vector<1x64xf32>
    %cst_17 = arith.constant 0.001953125 : f32
    %50 = vector.broadcast %cst_17 : f32 to vector<1x64xf32>
    %51 = arith.mulf %49, %50 : vector<1x64xf32>
    %cst_18 = arith.constant dense<0.000000e+00> : vector<1x64xf32>
    %52 = tpu.matmul %47, %48, %cst_18 {dimension_numbers = #tpu.dot_dimension_numbers<[1], [0], [0], [1], [0, 0, 1, 1], [], []>} : vector<1x64xf32>, vector<64x64xf32>, vector<1x64xf32> -> vector<1x64xf32>
    %cst_19 = arith.constant 0.001953125 : f32
    %53 = vector.broadcast %cst_19 : f32 to vector<1x64xf32>
    %54 = arith.mulf %52, %53 : vector<1x64xf32>
    %55 = arith.mulf %51, %51 : vector<1x64xf32>
    %56 = arith.subf %54, %55 : vector<1x64xf32>
    %cst_20 = arith.constant 0.000000e+00 : f32
    %57 = vector.broadcast %cst_20 : f32 to vector<1x64xf32>
    %58 = arith.maximumf %56, %57 : vector<1x64xf32>
    %cst_21 = arith.constant 9.99999974E-6 : f32
    %59 = vector.broadcast %cst_21 : f32 to vector<1x64xf32>
    %60 = arith.addf %58, %59 : vector<1x64xf32>
    %61 = math.rsqrt %60 : vector<1x64xf32>
    %c0_22 = arith.constant 0 : index
    %c0_23 = arith.constant 0 : index
    %62 = vector.load %arg2[%c0_22, %c0_23] : memref<1x64xf32, #tpu.memory_space<vmem>>, vector<1x64xf32>
    %63 = arith.mulf %61, %62 : vector<1x64xf32>
    %c0_24 = arith.constant 0 : index
    %c0_25 = arith.constant 0 : index
    %64 = vector.load %arg3[%c0_24, %c0_25] : memref<1x64xf32, #tpu.memory_space<vmem>>, vector<1x64xf32>
    %65 = arith.mulf %51, %63 : vector<1x64xf32>
    %66 = arith.subf %64, %65 : vector<1x64xf32>
    %67 = vector.broadcast %63 : vector<1x64xf32> to vector<16x64xf32>
    %68 = arith.mulf %18, %67 : vector<16x64xf32>
    %69 = vector.broadcast %66 : vector<1x64xf32> to vector<16x64xf32>
    %70 = arith.addf %68, %69 : vector<16x64xf32>
    %cst_26 = arith.constant 0.000000e+00 : f32
    %71 = vector.broadcast %cst_26 : f32 to vector<16x64xf32>
    %72 = arith.cmpf oge, %70, %71 : vector<16x64xf32>
    %cst_27 = arith.constant 2.000000e-01 : f32
    %73 = vector.broadcast %cst_27 : f32 to vector<16x64xf32>
    %74 = arith.mulf %73, %70 : vector<16x64xf32>
    %75 = arith.select %72, %70, %74 : vector<16x64xi1>, vector<16x64xf32>
    %76 = arith.truncf %75 : vector<16x64xf32> to vector<16x64xbf16>
    %c0_28 = arith.constant 0 : index
    %c0_29 = arith.constant 0 : index
    %77 = vector.load %arg5[%c0_28, %c0_29] : memref<32x64xbf16, #tpu.memory_space<vmem>>, vector<16x64xbf16>
    tpu.vector_store %arg5[%c0_28, %c0_29], %76 {strides = array<i32>} : memref<32x64xbf16, #tpu.memory_space<vmem>>, vector<16x64xbf16>,
    %78 = vector.broadcast %63 : vector<1x64xf32> to vector<16x64xf32>
    %79 = arith.mulf %35, %78 : vector<16x64xf32>
    %80 = vector.broadcast %66 : vector<1x64xf32> to vector<16x64xf32>
    %81 = arith.addf %79, %80 : vector<16x64xf32>
    %cst_30 = arith.constant 0.000000e+00 : f32
    %82 = vector.broadcast %cst_30 : f32 to vector<16x64xf32>
    %83 = arith.cmpf oge, %81, %82 : vector<16x64xf32>
    %cst_31 = arith.constant 2.000000e-01 : f32
    %84 = vector.broadcast %cst_31 : f32 to vector<16x64xf32>
    %85 = arith.mulf %84, %81 : vector<16x64xf32>
    %86 = arith.select %83, %81, %85 : vector<16x64xi1>, vector<16x64xf32>
    %87 = arith.truncf %86 : vector<16x64xf32> to vector<16x64xbf16>
    %c16 = arith.constant 16 : index
    %c0_32 = arith.constant 0 : index
    %88 = vector.load %arg5[%c16, %c0_32] : memref<32x64xbf16, #tpu.memory_space<vmem>>, vector<16x64xbf16>
    tpu.vector_store %arg5[%c16, %c0_32], %87 {strides = array<i32>} : memref<32x64xbf16, #tpu.memory_space<vmem>>, vector<16x64xbf16>,
    return
  }
}

module attributes {stable_mosaic.version = 11 : i64} {
  func.func @_conv_bias_kernel(%arg0: memref<2x18x72xbf16, #tpu.memory_space<vmem>>, %arg1: memref<3x72x16xbf16, #tpu.memory_space<vmem>>, %arg2: memref<1x16xf32, #tpu.memory_space<vmem>>, %arg3: memref<32x16xf32, #tpu.memory_space<vmem>>) attributes {dimension_semantics = [], scalar_prefetch = 0 : i64, scratch_operands = 0 : i64, tpu.core_type = #tpu.core_type<tc>} {
    %c0 = arith.constant 0 : index
    %c0_0 = arith.constant 0 : index
    %c0_1 = arith.constant 0 : index
    %0 = vector.load %arg0[%c0, %c0_0, %c0_1] : memref<2x18x72xbf16, #tpu.memory_space<vmem>>, vector<2x18x72xbf16>
    %c0_2 = arith.constant 0 : index
    %c0_3 = arith.constant 0 : index
    %c0_4 = arith.constant 0 : index
    %1 = vector.load %arg1[%c0_2, %c0_3, %c0_4] : memref<3x72x16xbf16, #tpu.memory_space<vmem>>, vector<3x72x16xbf16>
    %c0_5 = arith.constant 0 : index
    %c0_6 = arith.constant 0 : index
    %2 = vector.load %arg2[%c0_5, %c0_6] : memref<1x16xf32, #tpu.memory_space<vmem>>, vector<1x16xf32>
    %3 = vector.extract_strided_slice %0 {offsets = [0, 0, 0], sizes = [1, 16, 72], strides = [1, 1, 1]} : vector<2x18x72xbf16> to vector<1x16x72xbf16>
    %4 = vector.shape_cast %3 : vector<1x16x72xbf16> to vector<16x72xbf16>
    %5 = vector.extract_strided_slice %1 {offsets = [0, 0, 0], sizes = [1, 72, 16], strides = [1, 1, 1]} : vector<3x72x16xbf16> to vector<1x72x16xbf16>
    %6 = vector.shape_cast %5 : vector<1x72x16xbf16> to vector<72x16xbf16>
    %cst = arith.constant dense<0.000000e+00> : vector<16x16xf32>
    %7 = tpu.matmul %4, %6, %cst {dimension_numbers = #tpu.dot_dimension_numbers<[1], [0], [0], [1], [0, 0, 1, 1], [], []>} : vector<16x72xbf16>, vector<72x16xbf16>, vector<16x16xf32> -> vector<16x16xf32>
    %8 = vector.extract_strided_slice %0 {offsets = [0, 1, 0], sizes = [1, 16, 72], strides = [1, 1, 1]} : vector<2x18x72xbf16> to vector<1x16x72xbf16>
    %9 = vector.shape_cast %8 : vector<1x16x72xbf16> to vector<16x72xbf16>
    %10 = vector.extract_strided_slice %1 {offsets = [1, 0, 0], sizes = [1, 72, 16], strides = [1, 1, 1]} : vector<3x72x16xbf16> to vector<1x72x16xbf16>
    %11 = vector.shape_cast %10 : vector<1x72x16xbf16> to vector<72x16xbf16>
    %cst_7 = arith.constant dense<0.000000e+00> : vector<16x16xf32>
    %12 = tpu.matmul %9, %11, %cst_7 {dimension_numbers = #tpu.dot_dimension_numbers<[1], [0], [0], [1], [0, 0, 1, 1], [], []>} : vector<16x72xbf16>, vector<72x16xbf16>, vector<16x16xf32> -> vector<16x16xf32>
    %13 = arith.addf %7, %12 : vector<16x16xf32>
    %14 = vector.extract_strided_slice %0 {offsets = [0, 2, 0], sizes = [1, 16, 72], strides = [1, 1, 1]} : vector<2x18x72xbf16> to vector<1x16x72xbf16>
    %15 = vector.shape_cast %14 : vector<1x16x72xbf16> to vector<16x72xbf16>
    %16 = vector.extract_strided_slice %1 {offsets = [2, 0, 0], sizes = [1, 72, 16], strides = [1, 1, 1]} : vector<3x72x16xbf16> to vector<1x72x16xbf16>
    %17 = vector.shape_cast %16 : vector<1x72x16xbf16> to vector<72x16xbf16>
    %cst_8 = arith.constant dense<0.000000e+00> : vector<16x16xf32>
    %18 = tpu.matmul %15, %17, %cst_8 {dimension_numbers = #tpu.dot_dimension_numbers<[1], [0], [0], [1], [0, 0, 1, 1], [], []>} : vector<16x72xbf16>, vector<72x16xbf16>, vector<16x16xf32> -> vector<16x16xf32>
    %19 = arith.addf %13, %18 : vector<16x16xf32>
    %20 = vector.broadcast %2 : vector<1x16xf32> to vector<16x16xf32>
    %21 = arith.addf %19, %20 : vector<16x16xf32>
    %c0_9 = arith.constant 0 : index
    %c0_10 = arith.constant 0 : index
    %22 = vector.load %arg3[%c0_9, %c0_10] : memref<32x16xf32, #tpu.memory_space<vmem>>, vector<16x16xf32>
    tpu.vector_store %arg3[%c0_9, %c0_10], %21 {strides = array<i32>} : memref<32x16xf32, #tpu.memory_space<vmem>>, vector<16x16xf32>,
    %23 = vector.extract_strided_slice %0 {offsets = [1, 0, 0], sizes = [1, 16, 72], strides = [1, 1, 1]} : vector<2x18x72xbf16> to vector<1x16x72xbf16>
    %24 = vector.shape_cast %23 : vector<1x16x72xbf16> to vector<16x72xbf16>
    %25 = vector.extract_strided_slice %1 {offsets = [0, 0, 0], sizes = [1, 72, 16], strides = [1, 1, 1]} : vector<3x72x16xbf16> to vector<1x72x16xbf16>
    %26 = vector.shape_cast %25 : vector<1x72x16xbf16> to vector<72x16xbf16>
    %cst_11 = arith.constant dense<0.000000e+00> : vector<16x16xf32>
    %27 = tpu.matmul %24, %26, %cst_11 {dimension_numbers = #tpu.dot_dimension_numbers<[1], [0], [0], [1], [0, 0, 1, 1], [], []>} : vector<16x72xbf16>, vector<72x16xbf16>, vector<16x16xf32> -> vector<16x16xf32>
    %28 = vector.extract_strided_slice %0 {offsets = [1, 1, 0], sizes = [1, 16, 72], strides = [1, 1, 1]} : vector<2x18x72xbf16> to vector<1x16x72xbf16>
    %29 = vector.shape_cast %28 : vector<1x16x72xbf16> to vector<16x72xbf16>
    %30 = vector.extract_strided_slice %1 {offsets = [1, 0, 0], sizes = [1, 72, 16], strides = [1, 1, 1]} : vector<3x72x16xbf16> to vector<1x72x16xbf16>
    %31 = vector.shape_cast %30 : vector<1x72x16xbf16> to vector<72x16xbf16>
    %cst_12 = arith.constant dense<0.000000e+00> : vector<16x16xf32>
    %32 = tpu.matmul %29, %31, %cst_12 {dimension_numbers = #tpu.dot_dimension_numbers<[1], [0], [0], [1], [0, 0, 1, 1], [], []>} : vector<16x72xbf16>, vector<72x16xbf16>, vector<16x16xf32> -> vector<16x16xf32>
    %33 = arith.addf %27, %32 : vector<16x16xf32>
    %34 = vector.extract_strided_slice %0 {offsets = [1, 2, 0], sizes = [1, 16, 72], strides = [1, 1, 1]} : vector<2x18x72xbf16> to vector<1x16x72xbf16>
    %35 = vector.shape_cast %34 : vector<1x16x72xbf16> to vector<16x72xbf16>
    %36 = vector.extract_strided_slice %1 {offsets = [2, 0, 0], sizes = [1, 72, 16], strides = [1, 1, 1]} : vector<3x72x16xbf16> to vector<1x72x16xbf16>
    %37 = vector.shape_cast %36 : vector<1x72x16xbf16> to vector<72x16xbf16>
    %cst_13 = arith.constant dense<0.000000e+00> : vector<16x16xf32>
    %38 = tpu.matmul %35, %37, %cst_13 {dimension_numbers = #tpu.dot_dimension_numbers<[1], [0], [0], [1], [0, 0, 1, 1], [], []>} : vector<16x72xbf16>, vector<72x16xbf16>, vector<16x16xf32> -> vector<16x16xf32>
    %39 = arith.addf %33, %38 : vector<16x16xf32>
    %40 = vector.broadcast %2 : vector<1x16xf32> to vector<16x16xf32>
    %41 = arith.addf %39, %40 : vector<16x16xf32>
    %c16 = arith.constant 16 : index
    %c0_14 = arith.constant 0 : index
    %42 = vector.load %arg3[%c16, %c0_14] : memref<32x16xf32, #tpu.memory_space<vmem>>, vector<16x16xf32>
    tpu.vector_store %arg3[%c16, %c0_14], %41 {strides = array<i32>} : memref<32x16xf32, #tpu.memory_space<vmem>>, vector<16x16xf32>,
    return
  }
}

</mosaic_0001>

<llo_original>
// kernel: depth_decoder_forward.6
$region0: #{depth_decoder_forward.6}
  #allocation0 [shape = 'u32[]', space=smem, size = 0x4, offset = 0x4, fixed_abs, tag = 'smem constant byte address 0x4 - core index']
  #allocation1 [shape = 'u32[72,128]{1,0:T(1,128)}', space=vmem, size = 0x9000, scoped, tag = 'internal scratch']
  %s0 = inlined_call_operand.vmem [shape: bf16[2,16], index: 0, kind: input, shape index: {}]
  %s1 = inlined_call_operand.vmem [shape: bf16[16,32], index: 1, kind: input, shape index: {}]
  %s2 = inlined_call_operand.vmem [shape: f32[1,32], index: 2, kind: input, shape index: {}]
  %s3 = inlined_call_operand.vmem [shape: bf16[2,32], index: 3, kind: output, shape index: {}]
  %s4 = sld [smem:[#allocation0]]
  $region22: #{depth_decoder_forward.6} parent=0
    _
  %s6 = ssub.s32 1, %s4
  %s7 = scalar_select 0, %s6, %s4
  // Predicated region
  $region2: #{depth_decoder_forward.6} parent=0 // pred_check
    _
  $region3: #{depth_decoder_forward.6} parent=0 // pred_check_branch
    %9 = sbr.rel (0) target = $region5
  $region4: #{depth_decoder_forward.6} parent=0 // pred_region
    _
  $region5: #{depth_decoder_forward.6} parent=0 // pred_fallthru
    _
  // Predicated region
  $region6: #{depth_decoder_forward.6} parent=0 // pred_check
    _
  $region7: #{depth_decoder_forward.6} parent=0 // pred_check_branch
    %11 = sbr.rel (0) target = $region9
  $region8: #{depth_decoder_forward.6} parent=0 // pred_region
    _
  $region9: #{depth_decoder_forward.6} parent=0 // pred_fallthru
    _
  // Predicated region
  $region10: #{depth_decoder_forward.6} parent=0 // pred_check
    _
  $region11: #{depth_decoder_forward.6} parent=0 // pred_check_branch
    %13 = sbr.rel (0) target = $region13
  $region12: #{depth_decoder_forward.6} parent=0 // pred_region
    _
  $region13: #{depth_decoder_forward.6} parent=0 // pred_fallthru
    _
  %v15 = vld [vmem:[%s0] sm:$0x1]
  %v16 = vld [vmem:[%s1] sm:$0xf]
  %v17 = vld [vmem:[%s1 + $0x4] sm:$0xf]
  %v18 = vld [vmem:[%s2] sm:$0x1]
  %v20 = vperm.slane %v18, 0
  %v24 = vunpack.c.l.b16 %v16
  %v25 = vunpack.c.l.b16 %v17
  %v26 = vpack.c.b16 %v25, %v24
  %vm28 = vcmask 130048
  %v30 = vsel %vm28, %v15, 0
  %32 = vmatpush.bf16.msra.mxu0 0
  %33 = vmatpush.bf16.msra.mxu0 0
  %34 = vmatpush.bf16.msra.mxu0 0
  %35 = vmatpush.bf16.msra.mxu0 0
  %36 = vmatpush.bf16.msra.mxu0 0
  %37 = vmatpush.bf16.msra.mxu0 0
  %38 = vmatpush.bf16.msra.mxu0 0
  %39 = vmatpush.bf16.msra.mxu0 %v26
  %40 = vmatmul.bf16.gmra.mxu0 %v30
  %v41 = vpop.f32.mrf.mxu0
  %v42 = vadd.f32 %v20, %v41
  %v43 = vpop.f32.mrf.mxu0
  %44 = vdwg.mxu0
  %vm45 = vcmp.ge.f32.partialorder %v42, 0.0
  %v46 = vmul.f32 %v42, 0.2
  %v47 = vsel %vm45, %v42, %v46
  %v48 = vpack.c.bf16 %v47, %v47
  %vm49 = vcmask 253952
  %50 = vst.msk [vmem:[%s3] sm:$0x1] %vm49, %v48
  // Predicated region
  $region14: #{depth_decoder_forward.6} parent=0 // pred_check
    _
  $region15: #{depth_decoder_forward.6} parent=0 // pred_check_branch
    %52 = sbr.rel (0) target = $region17
  $region16: #{depth_decoder_forward.6} parent=0 // pred_region
    _
  $region17: #{depth_decoder_forward.6} parent=0 // pred_fallthru
    _
  // Predicated region
  $region18: #{depth_decoder_forward.6} parent=0 // pred_check
    _
  $region19: #{depth_decoder_forward.6} parent=0 // pred_check_branch
    %54 = sbr.rel (0) target = $region21
  $region20: #{depth_decoder_forward.6} parent=0 // pred_region
    _
  $region21: #{depth_decoder_forward.6} parent=0 // pred_fallthru
    _

// kernel: depth_decoder_forward.7
$region0: #{depth_decoder_forward.7}
  #allocation0 [shape = 'u32[]', space=smem, size = 0x4, offset = 0x4, fixed_abs, tag = 'smem constant byte address 0x4 - core index']
  #allocation1 [shape = 'u32[72,128]{1,0:T(1,128)}', space=vmem, size = 0x9000, scoped, tag = 'internal scratch']
  %s0 = inlined_call_operand.vmem [shape: bf16[2,3,96], index: 0, kind: input, shape index: {}]
  %s1 = inlined_call_operand.hbm [shape: bf16[3,96,128], index: 1, kind: input, shape index: {}]
  %s2 = inlined_call_operand.vmem [shape: f32[1,128], index: 2, kind: input, shape index: {}]
  %s3 = inlined_call_operand.vmem [shape: f32[1,128], index: 3, kind: input, shape index: {}]
  %s4 = inlined_call_operand.hbm [shape: f32[128,128], index: 4, kind: input, shape index: {}]
  %s5 = inlined_call_operand.vmem [shape: bf16[2,128], index: 5, kind: output, shape index: {}]
  %s6 = sld [smem:[#allocation0]]
  $region38: #{depth_decoder_forward.7} parent=0
    _
  %s8 = ssub.s32 1, %s6
  %s9 = scalar_select 0, %s8, %s6
  $region1: #{depth_decoder_forward.7} parent=0
    #allocation2 [shape = 'u8[73728]{0}', space=vmem, size = 0x12000, scoped, tag = 'input window, operand 1, single buffered']
    #allocation3 [shape = 's32[1]{0}', space=sflag, size = 0x4, scoped, tag = 'scoped memory for depth_decoder_forward.7']
    #allocation4 [shape = 'u8[65536]{0}', space=vmem, size = 0x10000, scoped, tag = 'input window, operand 4, single buffered']
    #allocation5 [shape = 's32[1]{0}', space=sflag, size = 0x4, scoped, tag = 'scoped memory for depth_decoder_forward.7']
    %10 = vsyncpa [#allocation3], 0
    %11 = vsyncpa [#allocation5], 0
    // Predicated region
    $region2: #{depth_decoder_forward.7} parent=1 // pred_check
      _
    $region3: #{depth_decoder_forward.7} parent=1 // pred_check_branch
      %13 = sbr.rel (0) target = $region5
    $region4: #{depth_decoder_forward.7} parent=1 // pred_region
      _
    $region5: #{depth_decoder_forward.7} parent=1 // pred_fallthru
      _
    // Predicated region
    $region6: #{depth_decoder_forward.7} parent=1 // pred_check
      _
    $region7: #{depth_decoder_forward.7} parent=1 // pred_check_branch
      %15 = sbr.rel (0) target = $region9
    $region8: #{depth_decoder_forward.7} parent=1 // pred_region
      %17 = vsyncadd [#allocation3], 0
      %s18 = sshll.u32 %s1, 4
      %s19 = int_to_ptr.hbm [resolvable:$true] %s18
      %s20 = sshll.u32 [#allocation2], 4
      %s21 = int_to_ptr.vmem [resolvable:$true] %s20
      %26 = dma.hbm_to_vmem [thread:$0]  %s19, 2304, %s21, [#allocation3], 64, 64, 4
    $region9: #{depth_decoder_forward.7} parent=1 // pred_fallthru
      _
    // Predicated region
    $region10: #{depth_decoder_forward.7} parent=1 // pred_check
      _
    $region11: #{depth_decoder_forward.7} parent=1 // pred_check_branch
      %28 = sbr.rel (0) target = $region13
    $region12: #{depth_decoder_forward.7} parent=1 // pred_region
      _
    $region13: #{depth_decoder_forward.7} parent=1 // pred_fallthru
      _
    // Predicated region
    $region14: #{depth_decoder_forward.7} parent=1 // pred_check
      _
    $region15: #{depth_decoder_forward.7} parent=1 // pred_check_branch
      %30 = sbr.rel (0) target = $region17
    $region16: #{depth_decoder_forward.7} parent=1 // pred_region
      _
    $region17: #{depth_decoder_forward.7} parent=1 // pred_fallthru
      _
    // Predicated region
    $region18: #{depth_decoder_forward.7} parent=1 // pred_check
      _
    $region19: #{depth_decoder_forward.7} parent=1 // pred_check_branch
      %32 = sbr.rel (0) target = $region21
    $region20: #{depth_decoder_forward.7} parent=1 // pred_region
      %34 = vsyncadd [#allocation5], 0
      %s35 = sshll.u32 %s4, 4
      %s36 = int_to_ptr.hbm [resolvable:$true] %s35
      %s37 = sshll.u32 [#allocation4], 4
      %s38 = int_to_ptr.vmem [resolvable:$true] %s37
      %43 = dma.hbm_to_vmem [thread:$0]  %s36, 2048, %s38, [#allocation5], 128, 128, 8
    $region21: #{depth_decoder_forward.7} parent=1 // pred_fallthru
      _
    // Predicated region
    $region22: #{depth_decoder_forward.7} parent=1 // pred_check
      _
    $region23: #{depth_decoder_forward.7} parent=1 // pred_check_branch
      %45 = sbr.rel (0) target = $region25
    $region24: #{depth_decoder_forward.7} parent=1 // pred_region
      %47 = dma.done [#allocation3], 2304
    $region25: #{depth_decoder_forward.7} parent=1 // pred_fallthru
      _
    // Predicated region
    $region26: #{depth_decoder_forward.7} parent=1 // pred_check
      _
    $region27: #{depth_decoder_forward.7} parent=1 // pred_check_branch
      %49 = sbr.rel (0) target = $region29
    $region28: #{depth_decoder_forward.7} parent=1 // pred_region
      %51 = dma.done [#allocation5], 2048
    $region29: #{depth_decoder_forward.7} parent=1 // pred_fallthru
      _
    %v53 = vld [vmem:[%s0] sm:$0x3]
    %v54 = vld [vmem:[%s0 + $0x2] sm:$0x3]
    %v55 = vld [vmem:[#allocation2] sm:$0xf]
    %v56 = vld [vmem:[#allocation2 + $0x4] sm:$0xf]
    %v57 = vld [vmem:[#allocation2 + $0x8] sm:$0xf]
    %v58 = vld [vmem:[#allocation2 + $0xc] sm:$0xf]
    %v59 = vld [vmem:[#allocation2 + $0x10] sm:$0xf]
    %v60 = vld [vmem:[#allocation2 + $0x14] sm:$0xf]
    %v61 = vld [vmem:[#allocation2 + $0x18] sm:$0xf]
    %v62 = vld [vmem:[#allocation2 + $0x1c] sm:$0xf]
    %v63 = vld [vmem:[#allocation2 + $0x20] sm:$0xf]
    %v64 = vld [vmem:[#allocation2 + $0x24] sm:$0xf]
    %v65 = vld [vmem:[#allocation2 + $0x28] sm:$0xf]
    %v66 = vld [vmem:[#allocation2 + $0x2c] sm:$0xf]
    %v67 = vld [vmem:[#allocation2 + $0x30] sm:$0xf]
    %v68 = vld [vmem:[#allocation2 + $0x34] sm:$0xf]
    %v69 = vld [vmem:[#allocation2 + $0x38] sm:$0xf]
    %v70 = vld [vmem:[#allocation2 + $0x3c] sm:$0xf]
    %v71 = vld [vmem:[#allocation2 + $0x40] sm:$0xf]
    %v72 = vld [vmem:[#allocation2 + $0x44] sm:$0xf]
    %v73 = vld [vmem:[#allocation2 + $0x48] sm:$0xf]
    %v74 = vld [vmem:[#allocation2 + $0x4c] sm:$0xf]
    %v75 = vld [vmem:[#allocation2 + $0x50] sm:$0xf]
    %v76 = vld [vmem:[#allocation2 + $0x54] sm:$0xf]
    %v77 = vld [vmem:[#allocation2 + $0x58] sm:$0xf]
    %v78 = vld [vmem:[#allocation2 + $0x5c] sm:$0xf]
    %v79 = vld [vmem:[#allocation2 + $0x60] sm:$0xf]
    %v80 = vld [vmem:[#allocation2 + $0x64] sm:$0xf]
    %v81 = vld [vmem:[#allocation2 + $0x68] sm:$0xf]
    %v82 = vld [vmem:[#allocation2 + $0x6c] sm:$0xf]
    %v83 = vld [vmem:[#allocation2 + $0x70] sm:$0xf]
    %v84 = vld [vmem:[#allocation2 + $0x74] sm:$0xf]
    %v85 = vld [vmem:[#allocation2 + $0x78] sm:$0xf]
    %v86 = vld [vmem:[#allocation2 + $0x7c] sm:$0xf]
    %v87 = vld [vmem:[#allocation2 + $0x80] sm:$0xf]
    %v88 = vld [vmem:[#allocation2 + $0x84] sm:$0xf]
    %v89 = vld [vmem:[#allocation2 + $0x88] sm:$0xf]
    %v90 = vld [vmem:[#allocation2 + $0x8c] sm:$0xf]
    %92 = vst [vmem:[#allocation1] ss:$4 sm:$0xff] %v53
    %v93 = vld.sshfl [vmem:[#allocation1] sm:$0xff pattern:$0x73625140]
    %v94 = vshrl.u32 %v93, 16
    %v108 = vunpack.c.l.b16 %v67
    %v109 = vunpack.c.l.b16 %v68
    %v110 = vunpack.c.l.b16 %v69
    %v111 = vunpack.c.l.b16 %v70
    %v112 = vunpack.c.l.b16 %v71
    %v113 = vunpack.c.l.b16 %v72
    %v114 = vunpack.c.l.b16 %v73
    %v115 = vunpack.c.l.b16 %v74
    %v116 = vunpack.c.l.b16 %v75
    %v117 = vunpack.c.l.b16 %v76
    %v118 = vunpack.c.l.b16 %v77
    %v119 = vunpack.c.l.b16 %v78
    %v120 = vpack.c.b16 %v109, %v108
    %v121 = vpack.c.b16 %v111, %v110
    %v122 = vpack.c.b16 %v113, %v112
    %v123 = vpack.c.b16 %v115, %v114
    %v124 = vpack.c.b16 %v117, %v116
    %v125 = vpack.c.b16 %v119, %v118
    %vm132 = vcmask 785408
    %v134 = vsel %vm132, %v94, 0
    %136 = vmatpush.bf16.msra.mxu0 0
    %137 = vmatpush.bf16.msra.mxu0 0
    %138 = vmatpush.bf16.msra.mxu0 %v125
    %139 = vmatpush.bf16.msra.mxu0 %v124
    %140 = vmatpush.bf16.msra.mxu0 %v123
    %141 = vmatpush.bf16.msra.mxu0 %v122
    %142 = vmatpush.bf16.msra.mxu0 %v121
    %143 = vmatpush.bf16.msra.mxu0 %v120
    %144 = vmatmul.bf16.gmra.mxu0 %v134
    %v145 = vpop.f32.mrf.mxu0
    %v146 = vadd.f32 0.0, %v145
    %v147 = vpop.f32.mrf.mxu0
    %148 = vdwg.mxu0
    %v161 = vunpack.c.l.b16 %v55
    %v162 = vunpack.c.l.b16 %v56
    %v163 = vunpack.c.l.b16 %v57
    %v164 = vunpack.c.l.b16 %v58
    %v165 = vunpack.c.l.b16 %v59
    %v166 = vunpack.c.l.b16 %v60
    %v167 = vunpack.c.l.b16 %v61
    %v168 = vunpack.c.l.b16 %v62
    %v169 = vunpack.c.l.b16 %v63
    %v170 = vunpack.c.l.b16 %v64
    %v171 = vunpack.c.l.b16 %v65
    %v172 = vunpack.c.l.b16 %v66
    %v173 = vpack.c.b16 %v162, %v161
    %v174 = vpack.c.b16 %v164, %v163
    %v175 = vpack.c.b16 %v166, %v165
    %v176 = vpack.c.b16 %v168, %v167
    %v177 = vpack.c.b16 %v170, %v169
    %v178 = vpack.c.b16 %v172, %v171
    %v185 = vsel %vm132, %v53, 0
    %187 = vmatpush.bf16.msra.mxu0 0
    %188 = vmatpush.bf16.msra.mxu0 0
    %189 = vmatpush.bf16.msra.mxu0 %v178
    %190 = vmatpush.bf16.msra.mxu0 %v177
    %191 = vmatpush.bf16.msra.mxu0 %v176
    %192 = vmatpush.bf16.msra.mxu0 %v175
    %193 = vmatpush.bf16.msra.mxu0 %v174
    %194 = vmatpush.bf16.msra.mxu0 %v173
    %195 = vmatmul.bf16.gmra.mxu0 %v185
    %v196 = vpop.f32.mrf.mxu0
    %v197 = vadd.f32 %v146, %v196
    %v198 = vpop.f32.mrf.mxu0
    %199 = vdwg.mxu0
    %200 = vst [vmem:[#allocation1] ss:$4 sm:$0xff] %v53
    %v201 = vld.sshfl [vmem:[#allocation1] sm:$0xff pattern:$0x73625140]
    %v203 = vrot.slane %v201, 1
    %v216 = vunpack.c.l.b16 %v79
    %v217 = vunpack.c.l.b16 %v80
    %v218 = vunpack.c.l.b16 %v81
    %v219 = vunpack.c.l.b16 %v82
    %v220 = vunpack.c.l.b16 %v83
    %v221 = vunpack.c.l.b16 %v84
    %v222 = vunpack.c.l.b16 %v85
    %v223 = vunpack.c.l.b16 %v86
    %v224 = vunpack.c.l.b16 %v87
    %v225 = vunpack.c.l.b16 %v88
    %v226 = vunpack.c.l.b16 %v89
    %v227 = vunpack.c.l.b16 %v90
    %v228 = vpack.c.b16 %v217, %v216
    %v229 = vpack.c.b16 %v219, %v218
    %v230 = vpack.c.b16 %v221, %v220
    %v231 = vpack.c.b16 %v223, %v222
    %v232 = vpack.c.b16 %v225, %v224
    %v233 = vpack.c.b16 %v227, %v226
    %v241 = vsel %vm132, %v203, 0
    %243 = vmatpush.bf16.msra.mxu0 0
    %244 = vmatpush.bf16.msra.mxu0 0
    %245 = vmatpush.bf16.msra.mxu0 %v233
    %246 = vmatpush.bf16.msra.mxu0 %v232
    %247 = vmatpush.bf16.msra.mxu0 %v231
    %248 = vmatpush.bf16.msra.mxu0 %v230
    %249 = vmatpush.bf16.msra.mxu0 %v229
    %250 = vmatpush.bf16.msra.mxu0 %v228
    %251 = vmatmul.bf16.gmra.mxu0 %v241
    %v252 = vpop.f32.mrf.mxu0
    %v253 = vadd.f32 0.0, %v252
    %v254 = vpop.f32.mrf.mxu0
    %255 = vdwg.mxu0
    %v256 = vadd.f32 %v197, %v253
    %258 = vst [vmem:[#allocation1] ss:$4 sm:$0xff] %v54
    %v259 = vld.sshfl [vmem:[#allocation1] sm:$0xff pattern:$0x73625140]
    %v260 = vshrl.u32 %v259, 16
    %v263 = vsel %vm132, %v260, 0
    %265 = vmatpush.bf16.msra.mxu0 0
    %266 = vmatpush.bf16.msra.mxu0 0
    %267 = vmatpush.bf16.msra.mxu0 %v125
    %268 = vmatpush.bf16.msra.mxu0 %v124
    %269 = vmatpush.bf16.msra.mxu0 %v123
    %270 = vmatpush.bf16.msra.mxu0 %v122
    %271 = vmatpush.bf16.msra.mxu0 %v121
    %272 = vmatpush.bf16.msra.mxu0 %v120
    %273 = vmatmul.bf16.gmra.mxu0 %v263
    %v274 = vpop.f32.mrf.mxu0
    %v275 = vadd.f32 0.0, %v274
    %v276 = vpop.f32.mrf.mxu0
    %277 = vdwg.mxu0
    %v278 = vsel %vm132, %v54, 0
    %280 = vmatpush.bf16.msra.mxu0 0
    %281 = vmatpush.bf16.msra.mxu0 0
    %282 = vmatpush.bf16.msra.mxu0 %v178
    %283 = vmatpush.bf16.msra.mxu0 %v177
    %284 = vmatpush.bf16.msra.mxu0 %v176
    %285 = vmatpush.bf16.msra.mxu0 %v175
    %286 = vmatpush.bf16.msra.mxu0 %v174
    %287 = vmatpush.bf16.msra.mxu0 %v173
    %288 = vmatmul.bf16.gmra.mxu0 %v278
    %v289 = vpop.f32.mrf.mxu0
    %v290 = vadd.f32 %v275, %v289
    %v291 = vpop.f32.mrf.mxu0
    %292 = vdwg.mxu0
    %293 = vst [vmem:[#allocation1] ss:$4 sm:$0xff] %v54
    %v294 = vld.sshfl [vmem:[#allocation1] sm:$0xff pattern:$0x73625140]
    %v296 = vrot.slane %v294, 1
    %v298 = vsel %vm132, %v296, 0
    %300 = vmatpush.bf16.msra.mxu0 0
    %301 = vmatpush.bf16.msra.mxu0 0
    %302 = vmatpush.bf16.msra.mxu0 %v233
    %303 = vmatpush.bf16.msra.mxu0 %v232
    %304 = vmatpush.bf16.msra.mxu0 %v231
    %305 = vmatpush.bf16.msra.mxu0 %v230
    %306 = vmatpush.bf16.msra.mxu0 %v229
    %307 = vmatpush.bf16.msra.mxu0 %v228
    %308 = vmatmul.bf16.gmra.mxu0 %v298
    %v309 = vpop.f32.mrf.mxu0
    %v310 = vadd.f32 0.0, %v309
    %v311 = vpop.f32.mrf.mxu0
    %312 = vdwg.mxu0
    %v313 = vadd.f32 %v290, %v310
    %v314 = vadd.f32 %v256, 0.0
    %v315 = vmul.f32 %v256, %v256
    %v316 = vadd.f32 %v315, 0.0
    %v317 = vadd.f32 %v313, 0.0
    %v318 = vadd.f32 %v314, %v317
    %v319 = vmul.f32 %v313, %v313
    %v320 = vadd.f32 %v319, 0.0
    %v321 = vadd.f32 %v316, %v320
    %v322 = vld [vmem:[#allocation4] sm:$0xff]
    %v323 = vld [vmem:[#allocation4 + $0x8] sm:$0xff]
    %v324 = vld [vmem:[#allocation4 + $0x10] sm:$0xff]
    %v325 = vld [vmem:[#allocation4 + $0x18] sm:$0xff]
    %v326 = vld [vmem:[#allocation4 + $0x20] sm:$0xff]
    %v327 = vld [vmem:[#allocation4 + $0x28] sm:$0xff]
    %v328 = vld [vmem:[#allocation4 + $0x30] sm:$0xff]
    %v329 = vld [vmem:[#allocation4 + $0x38] sm:$0xff]
    %v330 = vld [vmem:[#allocation4 + $0x40] sm:$0xff]
    %v331 = vld [vmem:[#allocation4 + $0x48] sm:$0xff]
    %v332 = vld [vmem:[#allocation4 + $0x50] sm:$0xff]
    %v333 = vld [vmem:[#allocation4 + $0x58] sm:$0xff]
    %v334 = vld [vmem:[#allocation4 + $0x60] sm:$0xff]
    %v335 = vld [vmem:[#allocation4 + $0x68] sm:$0xff]
    %v336 = vld [vmem:[#allocation4 + $0x70] sm:$0xff]
    %v337 = vld [vmem:[#allocation4 + $0x78] sm:$0xff]
    %338 = vmatpush.msra.mxu0 %v337
    %339 = vmatpush.msra.mxu0 %v336
    %340 = vmatpush.msra.mxu0 %v335
    %341 = vmatpush.msra.mxu0 %v334
    %342 = vmatpush.msra.mxu0 %v333
    %343 = vmatpush.msra.mxu0 %v332
    %344 = vmatpush.msra.mxu0 %v331
    %345 = vmatpush.msra.mxu0 %v330
    %346 = vmatpush.msra.mxu0 %v329
    %347 = vmatpush.msra.mxu0 %v328
    %348 = vmatpush.msra.mxu0 %v327
    %349 = vmatpush.msra.mxu0 %v326
    %350 = vmatpush.msra.mxu0 %v325
    %351 = vmatpush.msra.mxu0 %v324
    %352 = vmatpush.msra.mxu0 %v323
    %353 = vmatpush.msra.mxu0 %v322
    %354 = vmatmul.f32.gmra.mxu0 %v318
    %v355 = vpop.f32.mrf.mxu0
    %v356 = vadd.f32 0.0, %v355
    %357 = vdwg.mxu0
    %v358 = vmul.f32 %v356, 0.125
    %359 = vmatpush.msra.mxu0 %v337
    %360 = vmatpush.msra.mxu0 %v336
    %361 = vmatpush.msra.mxu0 %v335
    %362 = vmatpush.msra.mxu0 %v334
    %363 = vmatpush.msra.mxu0 %v333
    %364 = vmatpush.msra.mxu0 %v332
    %365 = vmatpush.msra.mxu0 %v331
    %366 = vmatpush.msra.mxu0 %v330
    %367 = vmatpush.msra.mxu0 %v329
    %368 = vmatpush.msra.mxu0 %v328
    %369 = vmatpush.msra.mxu0 %v327
    %370 = vmatpush.msra.mxu0 %v326
    %371 = vmatpush.msra.mxu0 %v325
    %372 = vmatpush.msra.mxu0 %v324
    %373 = vmatpush.msra.mxu0 %v323
    %374 = vmatpush.msra.mxu0 %v322
    %375 = vmatmul.f32.gmra.mxu0 %v321
    %v376 = vpop.f32.mrf.mxu0
    %v377 = vadd.f32 0.0, %v376
    %378 = vdwg.mxu0
    %v379 = vmul.f32 %v377, 0.125
    %v380 = vmul.f32 %v358, %v358
    %v381 = vsub.f32 %v379, %v380
    %v382 = vmax.f32 %v381, 0.0
    %v383 = vadd.f32 %v382, 1e-05
    %v384 = vrsqrt.pop %v383
    %v385 = vmul.f32 %v384, %v383
    %v386 = vmul.f32 %v385, %v384
    %v387 = vmul.f32 0.5, %v386
    %v388 = vsub.f32 1.5, %v387
    %v389 = vmul.f32 %v384, %v388
    %vm390 = vweird.f32 %v383
    %vm391 = vweird.f32 %v384
    %vm392 = vmor %vm390, %vm391
    %v393 = vsel %vm392, %v384, %v389
    %v394 = vld [vmem:[%s2] sm:$0x1]
    %v395 = vmul.f32 %v393, %v394
    %v396 = vld [vmem:[%s3] sm:$0x1]
    %v397 = vmul.f32 %v358, %v395
    %v398 = vsub.f32 %v396, %v397
    %v399 = vmul.f32 %v256, %v395
    %v400 = vadd.f32 %v399, %v398
    %vm401 = vcmp.ge.f32.partialorder %v400, 0.0
    %v402 = vmul.f32 %v400, 0.2
    %v403 = vsel %vm401, %v400, %v402
    %v404 = vpack.c.bf16 %v403, %v403
    %vm405 = vcmask 1040384
    %vm406 = vsmask.f32 256
    %vm407 = vmand %vm405, %vm406
    %v408 = vld [vmem:[%s5] sm:$0x1]
    %v409 = vsel %vm407, %v404, %v408
    %410 = vst [vmem:[%s5] sm:$0x1] %v409
    %v411 = vmul.f32 %v313, %v395
    %v412 = vadd.f32 %v411, %v398
    %vm413 = vcmp.ge.f32.partialorder %v412, 0.0
    %v414 = vmul.f32 %v412, 0.2
    %v415 = vsel %vm413, %v412, %v414
    %v416 = vpack.c.bf16 %v415, %v415
    %v418 = vrot.slane %v416, 3
    %vm419 = vcmask 1040384
    %v422 = vsel %vm419, %v416, %v418
    %v423 = vshll.u32 %v422, 16
    %vm426 = vsmask.f32 7938
    %vm427 = vmand %vm405, %vm426
    %v428 = vld [vmem:[%s5] sm:$0x1]
    %v429 = vsel %vm427, %v423, %v428
    %430 = vst [vmem:[%s5] sm:$0x1] %v429
    // Predicated region
    $region30: #{depth_decoder_forward.7} parent=1 // pred_check
      _
    $region31: #{depth_decoder_forward.7} parent=1 // pred_check_branch
      %432 = sbr.rel (0) target = $region33
    $region32: #{depth_decoder_forward.7} parent=1 // pred_region
      _
    $region33: #{depth_decoder_forward.7} parent=1 // pred_fallthru
      _
    // Predicated region
    $region34: #{depth_decoder_forward.7} parent=1 // pred_check
      _
    $region35: #{depth_decoder_forward.7} parent=1 // pred_check_branch
      %434 = sbr.rel (0) target = $region37
    $region36: #{depth_decoder_forward.7} parent=1 // pred_region
      _
    $region37: #{depth_decoder_forward.7} parent=1 // pred_fallthru
      _
    %435 = vsyncpa [#allocation3], 1
    %436 = vsyncpa [#allocation5], 1

// kernel: depth_decoder_forward.8
$region0: #{depth_decoder_forward.8}
  #allocation0 [shape = 'u32[]', space=smem, size = 0x4, offset = 0x4, fixed_abs, tag = 'smem constant byte address 0x4 - core index']
  #allocation1 [shape = 'u32[72,128]{1,0:T(1,128)}', space=vmem, size = 0x9000, scoped, tag = 'internal scratch']
  %s0 = inlined_call_operand.vmem [shape: bf16[2,6,192], index: 0, kind: input, shape index: {}]
  %s1 = inlined_call_operand.vmem [shape: bf16[3,192,64], index: 1, kind: input, shape index: {}]
  %s2 = inlined_call_operand.vmem [shape: f32[1,64], index: 2, kind: input, shape index: {}]
  %s3 = inlined_call_operand.vmem [shape: f32[1,64], index: 3, kind: input, shape index: {}]
  %s4 = inlined_call_operand.vmem [shape: f32[64,64], index: 4, kind: input, shape index: {}]
  %s5 = inlined_call_operand.vmem [shape: bf16[8,64], index: 5, kind: output, shape index: {}]
  %s6 = sld [smem:[#allocation0]]
  $region30: #{depth_decoder_forward.8} parent=0
    _
  %s8 = ssub.s32 1, %s6
  %s9 = scalar_select 0, %s8, %s6
  // Predicated region
  $region2: #{depth_decoder_forward.8} parent=0 // pred_check
    _
  $region3: #{depth_decoder_forward.8} parent=0 // pred_check_branch
    %11 = sbr.rel (0) target = $region5
  $region4: #{depth_decoder_forward.8} parent=0 // pred_region
    _
  $region5: #{depth_decoder_forward.8} parent=0 // pred_fallthru
    _
  // Predicated region
  $region6: #{depth_decoder_forward.8} parent=0 // pred_check
    _
  $region7: #{depth_decoder_forward.8} parent=0 // pred_check_branch
    %13 = sbr.rel (0) target = $region9
  $region8: #{depth_decoder_forward.8} parent=0 // pred_region
    _
  $region9: #{depth_decoder_forward.8} parent=0 // pred_fallthru
    _
  // Predicated region
  $region10: #{depth_decoder_forward.8} parent=0 // pred_check
    _
  $region11: #{depth_decoder_forward.8} parent=0 // pred_check_branch
    %15 = sbr.rel (0) target = $region13
  $region12: #{depth_decoder_forward.8} parent=0 // pred_region
    _
  $region13: #{depth_decoder_forward.8} parent=0 // pred_fallthru
    _
  // Predicated region
  $region14: #{depth_decoder_forward.8} parent=0 // pred_check
    _
  $region15: #{depth_decoder_forward.8} parent=0 // pred_check_branch
    %17 = sbr.rel (0) target = $region17
  $region16: #{depth_decoder_forward.8} parent=0 // pred_region
    _
  $region17: #{depth_decoder_forward.8} parent=0 // pred_fallthru
    _
  // Predicated region
  $region18: #{depth_decoder_forward.8} parent=0 // pred_check
    _
  $region19: #{depth_decoder_forward.8} parent=0 // pred_check_branch
    %19 = sbr.rel (0) target = $region21
  $region20: #{depth_decoder_forward.8} parent=0 // pred_region
    _
  $region21: #{depth_decoder_forward.8} parent=0 // pred_fallthru
    _
  %v21 = vld [vmem:[%s0] sm:$0x77]
  %v22 = vld [vmem:[%s0 + $0x8] sm:$0x77]
  %v23 = vld [vmem:[%s1] sm:$0xf]
  %v24 = vld [vmem:[%s1 + $0x4] sm:$0xf]
  %v25 = vld [vmem:[%s1 + $0x8] sm:$0xf]
  %v26 = vld [vmem:[%s1 + $0xc] sm:$0xf]
  %v27 = vld [vmem:[%s1 + $0x10] sm:$0xf]
  %v28 = vld [vmem:[%s1 + $0x14] sm:$0xf]
  %v29 = vld [vmem:[%s1 + $0x18] sm:$0xf]
  %v30 = vld [vmem:[%s1 + $0x1c] sm:$0xf]
  %v31 = vld [vmem:[%s1 + $0x20] sm:$0xf]
  %v32 = vld [vmem:[%s1 + $0x24] sm:$0xf]
  %v33 = vld [vmem:[%s1 + $0x28] sm:$0xf]
  %v34 = vld [vmem:[%s1 + $0x2c] sm:$0xf]
  %v35 = vld [vmem:[%s1 + $0x30] sm:$0xf]
  %v36 = vld [vmem:[%s1 + $0x34] sm:$0xf]
  %v37 = vld [vmem:[%s1 + $0x38] sm:$0xf]
  %v38 = vld [vmem:[%s1 + $0x3c] sm:$0xf]
  %v39 = vld [vmem:[%s1 + $0x40] sm:$0xf]
  %v40 = vld [vmem:[%s1 + $0x44] sm:$0xf]
  %v41 = vld [vmem:[%s1 + $0x48] sm:$0xf]
  %v42 = vld [vmem:[%s1 + $0x4c] sm:$0xf]
  %v43 = vld [vmem:[%s1 + $0x50] sm:$0xf]
  %v44 = vld [vmem:[%s1 + $0x54] sm:$0xf]
  %v45 = vld [vmem:[%s1 + $0x58] sm:$0xf]
  %v46 = vld [vmem:[%s1 + $0x5c] sm:$0xf]
  %v47 = vld [vmem:[%s1 + $0x60] sm:$0xf]
  %v48 = vld [vmem:[%s1 + $0x64] sm:$0xf]
  %v49 = vld [vmem:[%s1 + $0x68] sm:$0xf]
  %v50 = vld [vmem:[%s1 + $0x6c] sm:$0xf]
  %v51 = vld [vmem:[%s1 + $0x70] sm:$0xf]
  %v52 = vld [vmem:[%s1 + $0x74] sm:$0xf]
  %v53 = vld [vmem:[%s1 + $0x78] sm:$0xf]
  %v54 = vld [vmem:[%s1 + $0x7c] sm:$0xf]
  %v55 = vld [vmem:[%s1 + $0x80] sm:$0xf]
  %v56 = vld [vmem:[%s1 + $0x84] sm:$0xf]
  %v57 = vld [vmem:[%s1 + $0x88] sm:$0xf]
  %v58 = vld [vmem:[%s1 + $0x8c] sm:$0xf]
  %v59 = vld [vmem:[%s1 + $0x90] sm:$0xf]
  %v60 = vld [vmem:[%s1 + $0x94] sm:$0xf]
  %v61 = vld [vmem:[%s1 + $0x98] sm:$0xf]
  %v62 = vld [vmem:[%s1 + $0x9c] sm:$0xf]
  %v63 = vld [vmem:[%s1 + $0xa0] sm:$0xf]
  %v64 = vld [vmem:[%s1 + $0xa4] sm:$0xf]
  %v65 = vld [vmem:[%s1 + $0xa8] sm:$0xf]
  %v66 = vld [vmem:[%s1 + $0xac] sm:$0xf]
  %v67 = vld [vmem:[%s1 + $0xb0] sm:$0xf]
  %v68 = vld [vmem:[%s1 + $0xb4] sm:$0xf]
  %v69 = vld [vmem:[%s1 + $0xb8] sm:$0xf]
  %v70 = vld [vmem:[%s1 + $0xbc] sm:$0xf]
  %v71 = vld [vmem:[%s1 + $0xc0] sm:$0xf]
  %v72 = vld [vmem:[%s1 + $0xc4] sm:$0xf]
  %v73 = vld [vmem:[%s1 + $0xc8] sm:$0xf]
  %v74 = vld [vmem:[%s1 + $0xcc] sm:$0xf]
  %v75 = vld [vmem:[%s1 + $0xd0] sm:$0xf]
  %v76 = vld [vmem:[%s1 + $0xd4] sm:$0xf]
  %v77 = vld [vmem:[%s1 + $0xd8] sm:$0xf]
  %v78 = vld [vmem:[%s1 + $0xdc] sm:$0xf]
  %v79 = vld [vmem:[%s1 + $0xe0] sm:$0xf]
  %v80 = vld [vmem:[%s1 + $0xe4] sm:$0xf]
  %v81 = vld [vmem:[%s1 + $0xe8] sm:$0xf]
  %v82 = vld [vmem:[%s1 + $0xec] sm:$0xf]
  %v83 = vld [vmem:[%s1 + $0xf0] sm:$0xf]
  %v84 = vld [vmem:[%s1 + $0xf4] sm:$0xf]
  %v85 = vld [vmem:[%s1 + $0xf8] sm:$0xf]
  %v86 = vld [vmem:[%s1 + $0xfc] sm:$0xf]
  %v87 = vld [vmem:[%s1 + $0x100] sm:$0xf]
  %v88 = vld [vmem:[%s1 + $0x104] sm:$0xf]
  %v89 = vld [vmem:[%s1 + $0x108] sm:$0xf]
  %v90 = vld [vmem:[%s1 + $0x10c] sm:$0xf]
  %v91 = vld [vmem:[%s1 + $0x110] sm:$0xf]
  %v92 = vld [vmem:[%s1 + $0x114] sm:$0xf]
  %v93 = vld [vmem:[%s1 + $0x118] sm:$0xf]
  %v94 = vld [vmem:[%s1 + $0x11c] sm:$0xf]
  %v96 = vunpack.c.l.b16 %v21
  %v97 = vunpack.c.h.b16 %v21
  %v98 = vpack.c.b16 %v96, %v96
  %v99 = vpack.c.b16 %v97, %v97
  %v101 = vshrl.u32 %v98, 16
  %v103 = vshll.u32 %v98, 16
  %v105 = vrot.slane %v103, 1
  %v106 = vor.u32 %v101, %v105
  %v108 = vshrl.u32 %v99, 16
  %v110 = vshll.u32 %v99, 16
  %v112 = vrot.slane %v110, 1
  %v113 = vor.u32 %v108, %v112
  %v139 = vunpack.c.l.b16 %v47
  %v140 = vunpack.c.l.b16 %v48
  %v141 = vunpack.c.l.b16 %v49
  %v142 = vunpack.c.l.b16 %v50
  %v143 = vunpack.c.l.b16 %v51
  %v144 = vunpack.c.l.b16 %v52
  %v145 = vunpack.c.l.b16 %v53
  %v146 = vunpack.c.l.b16 %v54
  %v147 = vunpack.c.l.b16 %v55
  %v148 = vunpack.c.l.b16 %v56
  %v149 = vunpack.c.l.b16 %v57
  %v150 = vunpack.c.l.b16 %v58
  %v151 = vunpack.c.l.b16 %v59
  %v152 = vunpack.c.l.b16 %v60
  %v153 = vunpack.c.l.b16 %v61
  %v154 = vunpack.c.l.b16 %v62
  %v155 = vunpack.c.l.b16 %v63
  %v156 = vunpack.c.l.b16 %v64
  %v157 = vunpack.c.l.b16 %v65
  %v158 = vunpack.c.l.b16 %v66
  %v159 = vunpack.c.l.b16 %v67
  %v160 = vunpack.c.l.b16 %v68
  %v161 = vunpack.c.l.b16 %v69
  %v162 = vunpack.c.l.b16 %v70
  %v163 = vpack.c.b16 %v140, %v139
  %v164 = vpack.c.b16 %v142, %v141
  %v165 = vpack.c.b16 %v144, %v143
  %v166 = vpack.c.b16 %v146, %v145
  %v167 = vpack.c.b16 %v148, %v147
  %v168 = vpack.c.b16 %v150, %v149
  %v169 = vpack.c.b16 %v152, %v151
  %v170 = vpack.c.b16 %v154, %v153
  %v171 = vpack.c.b16 %v156, %v155
  %v172 = vpack.c.b16 %v158, %v157
  %v173 = vpack.c.b16 %v160, %v159
  %v174 = vpack.c.b16 %v162, %v161
  %vm187 = vcmask 523264
  %v189 = vsel %vm187, %v113, 0
  %191 = vmatpush.bf16.msra.mxu0 %v170
  %192 = vmatpush.bf16.msra.mxu0 %v169
  %193 = vmatpush.bf16.msra.mxu0 %v168
  %194 = vmatpush.bf16.msra.mxu0 %v167
  %195 = vmatpush.bf16.msra.mxu0 %v166
  %196 = vmatpush.bf16.msra.mxu0 %v165
  %197 = vmatpush.bf16.msra.mxu0 %v164
  %198 = vmatpush.bf16.msra.mxu0 %v163
  %199 = vmatmul.bf16.gmra.mxu0 %v106
  %v200 = vpop.f32.mrf.mxu0
  %v201 = vadd.f32 0.0, %v200
  %v202 = vpop.f32.mrf.mxu0
  %203 = vdwg.mxu0
  %204 = vmatpush.bf16.msra.mxu0 0
  %205 = vmatpush.bf16.msra.mxu0 0
  %206 = vmatpush.bf16.msra.mxu0 0
  %207 = vmatpush.bf16.msra.mxu0 0
  %208 = vmatpush.bf16.msra.mxu0 %v174
  %209 = vmatpush.bf16.msra.mxu0 %v173
  %210 = vmatpush.bf16.msra.mxu0 %v172
  %211 = vmatpush.bf16.msra.mxu0 %v171
  %212 = vmatmul.bf16.gmra.mxu0 %v189
  %v213 = vpop.f32.mrf.mxu0
  %v214 = vadd.f32 %v201, %v213
  %v215 = vpop.f32.mrf.mxu0
  %216 = vdwg.mxu0
  %v242 = vunpack.c.l.b16 %v23
  %v243 = vunpack.c.l.b16 %v24
  %v244 = vunpack.c.l.b16 %v25
  %v245 = vunpack.c.l.b16 %v26
  %v246 = vunpack.c.l.b16 %v27
  %v247 = vunpack.c.l.b16 %v28
  %v248 = vunpack.c.l.b16 %v29
  %v249 = vunpack.c.l.b16 %v30
  %v250 = vunpack.c.l.b16 %v31
  %v251 = vunpack.c.l.b16 %v32
  %v252 = vunpack.c.l.b16 %v33
  %v253 = vunpack.c.l.b16 %v34
  %v254 = vunpack.c.l.b16 %v35
  %v255 = vunpack.c.l.b16 %v36
  %v256 = vunpack.c.l.b16 %v37
  %v257 = vunpack.c.l.b16 %v38
  %v258 = vunpack.c.l.b16 %v39
  %v259 = vunpack.c.l.b16 %v40
  %v260 = vunpack.c.l.b16 %v41
  %v261 = vunpack.c.l.b16 %v42
  %v262 = vunpack.c.l.b16 %v43
  %v263 = vunpack.c.l.b16 %v44
  %v264 = vunpack.c.l.b16 %v45
  %v265 = vunpack.c.l.b16 %v46
  %v266 = vpack.c.b16 %v243, %v242
  %v267 = vpack.c.b16 %v245, %v244
  %v268 = vpack.c.b16 %v247, %v246
  %v269 = vpack.c.b16 %v249, %v248
  %v270 = vpack.c.b16 %v251, %v250
  %v271 = vpack.c.b16 %v253, %v252
  %v272 = vpack.c.b16 %v255, %v254
  %v273 = vpack.c.b16 %v257, %v256
  %v274 = vpack.c.b16 %v259, %v258
  %v275 = vpack.c.b16 %v261, %v260
  %v276 = vpack.c.b16 %v263, %v262
  %v277 = vpack.c.b16 %v265, %v264
  %v290 = vsel %vm187, %v99, 0
  %292 = vmatpush.bf16.msra.mxu0 %v273
  %293 = vmatpush.bf16.msra.mxu0 %v272
  %294 = vmatpush.bf16.msra.mxu0 %v271
  %295 = vmatpush.bf16.msra.mxu0 %v270
  %296 = vmatpush.bf16.msra.mxu0 %v269
  %297 = vmatpush.bf16.msra.mxu0 %v268
  %298 = vmatpush.bf16.msra.mxu0 %v267
  %299 = vmatpush.bf16.msra.mxu0 %v266
  %300 = vmatmul.bf16.gmra.mxu0 %v98
  %v301 = vpop.f32.mrf.mxu0
  %v302 = vadd.f32 %v214, %v301
  %v303 = vpop.f32.mrf.mxu0
  %304 = vdwg.mxu0
  %305 = vmatpush.bf16.msra.mxu0 0
  %306 = vmatpush.bf16.msra.mxu0 0
  %307 = vmatpush.bf16.msra.mxu0 0
  %308 = vmatpush.bf16.msra.mxu0 0
  %309 = vmatpush.bf16.msra.mxu0 %v277
  %310 = vmatpush.bf16.msra.mxu0 %v276
  %311 = vmatpush.bf16.msra.mxu0 %v275
  %312 = vmatpush.bf16.msra.mxu0 %v274
  %313 = vmatmul.bf16.gmra.mxu0 %v290
  %v314 = vpop.f32.mrf.mxu0
  %v315 = vadd.f32 %v302, %v314
  %v316 = vpop.f32.mrf.mxu0
  %317 = vdwg.mxu0
  %v318 = vrot.slane %v98, 1
  %v319 = vrot.slane %v99, 1
  %v345 = vunpack.c.l.b16 %v71
  %v346 = vunpack.c.l.b16 %v72
  %v347 = vunpack.c.l.b16 %v73
  %v348 = vunpack.c.l.b16 %v74
  %v349 = vunpack.c.l.b16 %v75
  %v350 = vunpack.c.l.b16 %v76
  %v351 = vunpack.c.l.b16 %v77
  %v352 = vunpack.c.l.b16 %v78
  %v353 = vunpack.c.l.b16 %v79
  %v354 = vunpack.c.l.b16 %v80
  %v355 = vunpack.c.l.b16 %v81
  %v356 = vunpack.c.l.b16 %v82
  %v357 = vunpack.c.l.b16 %v83
  %v358 = vunpack.c.l.b16 %v84
  %v359 = vunpack.c.l.b16 %v85
  %v360 = vunpack.c.l.b16 %v86
  %v361 = vunpack.c.l.b16 %v87
  %v362 = vunpack.c.l.b16 %v88
  %v363 = vunpack.c.l.b16 %v89
  %v364 = vunpack.c.l.b16 %v90
  %v365 = vunpack.c.l.b16 %v91
  %v366 = vunpack.c.l.b16 %v92
  %v367 = vunpack.c.l.b16 %v93
  %v368 = vunpack.c.l.b16 %v94
  %v369 = vpack.c.b16 %v346, %v345
  %v370 = vpack.c.b16 %v348, %v347
  %v371 = vpack.c.b16 %v350, %v349
  %v372 = vpack.c.b16 %v352, %v351
  %v373 = vpack.c.b16 %v354, %v353
  %v374 = vpack.c.b16 %v356, %v355
  %v375 = vpack.c.b16 %v358, %v357
  %v376 = vpack.c.b16 %v360, %v359
  %v377 = vpack.c.b16 %v362, %v361
  %v378 = vpack.c.b16 %v364, %v363
  %v379 = vpack.c.b16 %v366, %v365
  %v380 = vpack.c.b16 %v368, %v367
  %v394 = vsel %vm187, %v319, 0
  %396 = vmatpush.bf16.msra.mxu0 %v376
  %397 = vmatpush.bf16.msra.mxu0 %v375
  %398 = vmatpush.bf16.msra.mxu0 %v374
  %399 = vmatpush.bf16.msra.mxu0 %v373
  %400 = vmatpush.bf16.msra.mxu0 %v372
  %401 = vmatpush.bf16.msra.mxu0 %v371
  %402 = vmatpush.bf16.msra.mxu0 %v370
  %403 = vmatpush.bf16.msra.mxu0 %v369
  %404 = vmatmul.bf16.gmra.mxu0 %v318
  %v405 = vpop.f32.mrf.mxu0
  %v406 = vadd.f32 0.0, %v405
  %v407 = vpop.f32.mrf.mxu0
  %408 = vdwg.mxu0
  %409 = vmatpush.bf16.msra.mxu0 0
  %410 = vmatpush.bf16.msra.mxu0 0
  %411 = vmatpush.bf16.msra.mxu0 0
  %412 = vmatpush.bf16.msra.mxu0 0
  %413 = vmatpush.bf16.msra.mxu0 %v380
  %414 = vmatpush.bf16.msra.mxu0 %v379
  %415 = vmatpush.bf16.msra.mxu0 %v378
  %416 = vmatpush.bf16.msra.mxu0 %v377
  %417 = vmatmul.bf16.gmra.mxu0 %v394
  %v418 = vpop.f32.mrf.mxu0
  %v419 = vadd.f32 %v406, %v418
  %v420 = vpop.f32.mrf.mxu0
  %421 = vdwg.mxu0
  %v422 = vadd.f32 %v315, %v419
  %v424 = vunpack.c.l.b16 %v22
  %v425 = vunpack.c.h.b16 %v22
  %v426 = vpack.c.b16 %v424, %v424
  %v427 = vpack.c.b16 %v425, %v425
  %v429 = vshrl.u32 %v426, 16
  %v431 = vshll.u32 %v426, 16
  %v433 = vrot.slane %v431, 1
  %v434 = vor.u32 %v429, %v433
  %v436 = vshrl.u32 %v427, 16
  %v438 = vshll.u32 %v427, 16
  %v440 = vrot.slane %v438, 1
  %v441 = vor.u32 %v436, %v440
  %v444 = vsel %vm187, %v441, 0
  %446 = vmatpush.bf16.msra.mxu0 %v170
  %447 = vmatpush.bf16.msra.mxu0 %v169
  %448 = vmatpush.bf16.msra.mxu0 %v168
  %449 = vmatpush.bf16.msra.mxu0 %v167
  %450 = vmatpush.bf16.msra.mxu0 %v166
  %451 = vmatpush.bf16.msra.mxu0 %v165
  %452 = vmatpush.bf16.msra.mxu0 %v164
  %453 = vmatpush.bf16.msra.mxu0 %v163
  %454 = vmatmul.bf16.gmra.mxu0 %v434
  %v455 = vpop.f32.mrf.mxu0
  %v456 = vadd.f32 0.0, %v455
  %v457 = vpop.f32.mrf.mxu0
  %458 = vdwg.mxu0
  %459 = vmatpush.bf16.msra.mxu0 0
  %460 = vmatpush.bf16.msra.mxu0 0
  %461 = vmatpush.bf16.msra.mxu0 0
  %462 = vmatpush.bf16.msra.mxu0 0
  %463 = vmatpush.bf16.msra.mxu0 %v174
  %464 = vmatpush.bf16.msra.mxu0 %v173
  %465 = vmatpush.bf16.msra.mxu0 %v172
  %466 = vmatpush.bf16.msra.mxu0 %v171
  %467 = vmatmul.bf16.gmra.mxu0 %v444
  %v468 = vpop.f32.mrf.mxu0
  %v469 = vadd.f32 %v456, %v468
  %v470 = vpop.f32.mrf.mxu0
  %471 = vdwg.mxu0
  %v473 = vsel %vm187, %v427, 0
  %475 = vmatpush.bf16.msra.mxu0 %v273
  %476 = vmatpush.bf16.msra.mxu0 %v272
  %477 = vmatpush.bf16.msra.mxu0 %v271
  %478 = vmatpush.bf16.msra.mxu0 %v270
  %479 = vmatpush.bf16.msra.mxu0 %v269
  %480 = vmatpush.bf16.msra.mxu0 %v268
  %481 = vmatpush.bf16.msra.mxu0 %v267
  %482 = vmatpush.bf16.msra.mxu0 %v266
  %483 = vmatmul.bf16.gmra.mxu0 %v426
  %v484 = vpop.f32.mrf.mxu0
  %v485 = vadd.f32 %v469, %v484
  %v486 = vpop.f32.mrf.mxu0
  %487 = vdwg.mxu0
  %488 = vmatpush.bf16.msra.mxu0 0
  %489 = vmatpush.bf16.msra.mxu0 0
  %490 = vmatpush.bf16.msra.mxu0 0
  %491 = vmatpush.bf16.msra.mxu0 0
  %492 = vmatpush.bf16.msra.mxu0 %v277
  %493 = vmatpush.bf16.msra.mxu0 %v276
  %494 = vmatpush.bf16.msra.mxu0 %v275
  %495 = vmatpush.bf16.msra.mxu0 %v274
  %496 = vmatmul.bf16.gmra.mxu0 %v473
  %v497 = vpop.f32.mrf.mxu0
  %v498 = vadd.f32 %v485, %v497
  %v499 = vpop.f32.mrf.mxu0
  %500 = vdwg.mxu0
  %v501 = vrot.slane %v426, 1
  %v502 = vrot.slane %v427, 1
  %v505 = vsel %vm187, %v502, 0
  %507 = vmatpush.bf16.msra.mxu0 %v376
  %508 = vmatpush.bf16.msra.mxu0 %v375
  %509 = vmatpush.bf16.msra.mxu0 %v374
  %510 = vmatpush.bf16.msra.mxu0 %v373
  %511 = vmatpush.bf16.msra.mxu0 %v372
  %512 = vmatpush.bf16.msra.mxu0 %v371
  %513 = vmatpush.bf16.msra.mxu0 %v370
  %514 = vmatpush.bf16.msra.mxu0 %v369
  %515 = vmatmul.bf16.gmra.mxu0 %v501
  %v516 = vpop.f32.mrf.mxu0
  %v517 = vadd.f32 0.0, %v516
  %v518 = vpop.f32.mrf.mxu0
  %519 = vdwg.mxu0
  %520 = vmatpush.bf16.msra.mxu0 0
  %521 = vmatpush.bf16.msra.mxu0 0
  %522 = vmatpush.bf16.msra.mxu0 0
  %523 = vmatpush.bf16.msra.mxu0 0
  %524 = vmatpush.bf16.msra.mxu0 %v380
  %525 = vmatpush.bf16.msra.mxu0 %v379
  %526 = vmatpush.bf16.msra.mxu0 %v378
  %527 = vmatpush.bf16.msra.mxu0 %v377
  %528 = vmatmul.bf16.gmra.mxu0 %v505
  %v529 = vpop.f32.mrf.mxu0
  %v530 = vadd.f32 %v517, %v529
  %v531 = vpop.f32.mrf.mxu0
  %532 = vdwg.mxu0
  %v533 = vadd.f32 %v498, %v530
  %vm534 = vcmask 519168
  %v535 = vsel %vm534, %v422, 0.0
  %v536 = vrot.slane %v535, 4
  %v537 = vadd.f32 %v535, %v536
  %v538 = vrot.slane %v537, 2
  %v539 = vadd.f32 %v537, %v538
  %v540 = vrot.slane %v539, 1
  %v541 = vadd.f32 %v539, %v540
  %v542 = vmul.f32 %v422, %v422
  %v543 = vsel %vm534, %v542, 0.0
  %v544 = vrot.slane %v543, 4
  %v545 = vadd.f32 %v543, %v544
  %v546 = vrot.slane %v545, 2
  %v547 = vadd.f32 %v545, %v546
  %v548 = vrot.slane %v547, 1
  %v549 = vadd.f32 %v547, %v548
  %v550 = vsel %vm534, %v533, 0.0
  %v551 = vrot.slane %v550, 4
  %v552 = vadd.f32 %v550, %v551
  %v553 = vrot.slane %v552, 2
  %v554 = vadd.f32 %v552, %v553
  %v555 = vrot.slane %v554, 1
  %v556 = vadd.f32 %v554, %v555
  %v557 = vadd.f32 %v541, %v556
  %v558 = vmul.f32 %v533, %v533
  %v559 = vsel %vm534, %v558, 0.0
  %v560 = vrot.slane %v559, 4
  %v561 = vadd.f32 %v559, %v560
  %v562 = vrot.slane %v561, 2
  %v563 = vadd.f32 %v561, %v562
  %v564 = vrot.slane %v563, 1
  %v565 = vadd.f32 %v563, %v564
  %v566 = vadd.f32 %v549, %v565
  %v567 = vld [vmem:[%s4] sm:$0xff]
  %v568 = vld [vmem:[%s4 + $0x8] sm:$0xff]
  %v569 = vld [vmem:[%s4 + $0x10] sm:$0xff]
  %v570 = vld [vmem:[%s4 + $0x18] sm:$0xff]
  %v571 = vld [vmem:[%s4 + $0x20] sm:$0xff]
  %v572 = vld [vmem:[%s4 + $0x28] sm:$0xff]
  %v573 = vld [vmem:[%s4 + $0x30] sm:$0xff]
  %v574 = vld [vmem:[%s4 + $0x38] sm:$0xff]
  %v576 = vsel %vm187, %v557, 0
  %578 = vmatpush.msra.mxu0 0.0
  %579 = vmatpush.msra.mxu0 0.0
  %580 = vmatpush.msra.mxu0 0.0
  %581 = vmatpush.msra.mxu0 0.0
  %582 = vmatpush.msra.mxu0 0.0
  %583 = vmatpush.msra.mxu0 0.0
  %584 = vmatpush.msra.mxu0 0.0
  %585 = vmatpush.msra.mxu0 0.0
  %586 = vmatpush.msra.mxu0 %v574
  %587 = vmatpush.msra.mxu0 %v573
  %588 = vmatpush.msra.mxu0 %v572
  %589 = vmatpush.msra.mxu0 %v571
  %590 = vmatpush.msra.mxu0 %v570
  %591 = vmatpush.msra.mxu0 %v569
  %592 = vmatpush.msra.mxu0 %v568
  %593 = vmatpush.msra.mxu0 %v567
  %594 = vmatmul.f32.gmra.mxu0 %v576
  %v595 = vpop.f32.mrf.mxu0
  %v596 = vadd.f32 0.0, %v595
  %597 = vdwg.mxu0
  %v598 = vmul.f32 %v596, 0.03125
  %v600 = vsel %vm187, %v566, 0
  %602 = vmatpush.msra.mxu0 0.0
  %603 = vmatpush.msra.mxu0 0.0
  %604 = vmatpush.msra.mxu0 0.0
  %605 = vmatpush.msra.mxu0 0.0
  %606 = vmatpush.msra.mxu0 0.0
  %607 = vmatpush.msra.mxu0 0.0
  %608 = vmatpush.msra.mxu0 0.0
  %609 = vmatpush.msra.mxu0 0.0
  %610 = vmatpush.msra.mxu0 %v574
  %611 = vmatpush.msra.mxu0 %v573
  %612 = vmatpush.msra.mxu0 %v572
  %613 = vmatpush.msra.mxu0 %v571
  %614 = vmatpush.msra.mxu0 %v570
  %615 = vmatpush.msra.mxu0 %v569
  %616 = vmatpush.msra.mxu0 %v568
  %617 = vmatpush.msra.mxu0 %v567
  %618 = vmatmul.f32.gmra.mxu0 %v600
  %v619 = vpop.f32.mrf.mxu0
  %v620 = vadd.f32 0.0, %v619
  %621 = vdwg.mxu0
  %v622 = vmul.f32 %v620, 0.03125
  %v623 = vmul.f32 %v598, %v598
  %v624 = vsub.f32 %v622, %v623
  %v625 = vmax.f32 %v624, 0.0
  %v626 = vadd.f32 %v625, 1e-05
  %v627 = vrsqrt.pop %v626
  %v628 = vmul.f32 %v627, %v626
  %v629 = vmul.f32 %v628, %v627
  %v630 = vmul.f32 0.5, %v629
  %v631 = vsub.f32 1.5, %v630
  %v632 = vmul.f32 %v627, %v631
  %vm633 = vweird.f32 %v626
  %vm634 = vweird.f32 %v627
  %vm635 = vmor %vm633, %vm634
  %v636 = vsel %vm635, %v627, %v632
  %v637 = vld [vmem:[%s2] sm:$0x1]
  %v638 = vmul.f32 %v636, %v637
  %v639 = vld [vmem:[%s3] sm:$0x1]
  %v640 = vmul.f32 %v598, %v638
  %v641 = vsub.f32 %v639, %v640
  %v642 = vperm.slane %v638, 0
  %v643 = vmul.f32 %v422, %v642
  %v645 = vperm.slane %v641, 0
  %v647 = vadd.f32 %v643, %v645
  %vm648 = vcmp.ge.f32.partialorder %v647, 0.0
  %v649 = vmul.f32 %v647, 0.2
  %v650 = vsel %vm648, %v647, %v649
  %v651 = vpack.c.bf16 %v650, %v650
  %vm652 = vcmask 517120
  %653 = vst.msk [vmem:[%s5] sm:$0x3] %vm652, %v651
  %v654 = vmul.f32 %v533, %v642
  %v655 = vadd.f32 %v654, %v645
  %vm656 = vcmp.ge.f32.partialorder %v655, 0.0
  %v657 = vmul.f32 %v655, 0.2
  %v658 = vsel %vm656, %v655, %v657
  %v659 = vpack.c.bf16 %v658, %v658
  %v661 = vrot.slane %v659, 6
  %vm663 = vcmask 519170
  %664 = vst.msk [vmem:[%s5] sm:$0xc] %vm663, %v661
  // Predicated region
  $region22: #{depth_decoder_forward.8} parent=0 // pred_check
    _
  $region23: #{depth_decoder_forward.8} parent=0 // pred_check_branch
    %666 = sbr.rel (0) target = $region25
  $region24: #{depth_decoder_forward.8} parent=0 // pred_region
    _
  $region25: #{depth_decoder_forward.8} parent=0 // pred_fallthru
    _
  // Predicated region
  $region26: #{depth_decoder_forward.8} parent=0 // pred_check
    _
  $region27: #{depth_decoder_forward.8} parent=0 // pred_check_branch
    %668 = sbr.rel (0) target = $region29
  $region28: #{depth_decoder_forward.8} parent=0 // pred_region
    _
  $region29: #{depth_decoder_forward.8} parent=0 // pred_fallthru
    _

// kernel: depth_decoder_forward.9
$region0: #{depth_decoder_forward.9}
  #allocation0 [shape = 'u32[]', space=smem, size = 0x4, offset = 0x4, fixed_abs, tag = 'smem constant byte address 0x4 - core index']
  #allocation1 [shape = 'u32[72,128]{1,0:T(1,128)}', space=vmem, size = 0x9000, scoped, tag = 'internal scratch']
  %s0 = inlined_call_operand.vmem [shape: bf16[2,10,160], index: 0, kind: input, shape index: {}]
  %s1 = inlined_call_operand.vmem [shape: bf16[3,160,64], index: 1, kind: input, shape index: {}]
  %s2 = inlined_call_operand.vmem [shape: f32[1,64], index: 2, kind: input, shape index: {}]
  %s3 = inlined_call_operand.vmem [shape: f32[1,64], index: 3, kind: input, shape index: {}]
  %s4 = inlined_call_operand.vmem [shape: f32[64,64], index: 4, kind: input, shape index: {}]
  %s5 = inlined_call_operand.vmem [shape: bf16[16,64], index: 5, kind: output, shape index: {}]
  %s6 = sld [smem:[#allocation0]]
  $region30: #{depth_decoder_forward.9} parent=0
    _
  %s8 = ssub.s32 1, %s6
  %s9 = scalar_select 0, %s8, %s6
  // Predicated region
  $region2: #{depth_decoder_forward.9} parent=0 // pred_check
    _
  $region3: #{depth_decoder_forward.9} parent=0 // pred_check_branch
    %11 = sbr.rel (0) target = $region5
  $region4: #{depth_decoder_forward.9} parent=0 // pred_region
    _
  $region5: #{depth_decoder_forward.9} parent=0 // pred_fallthru
    _
  // Predicated region
  $region6: #{depth_decoder_forward.9} parent=0 // pred_check
    _
  $region7: #{depth_decoder_forward.9} parent=0 // pred_check_branch
    %13 = sbr.rel (0) target = $region9
  $region8: #{depth_decoder_forward.9} parent=0 // pred_region
    _
  $region9: #{depth_decoder_forward.9} parent=0 // pred_fallthru
    _
  // Predicated region
  $region10: #{depth_decoder_forward.9} parent=0 // pred_check
    _
  $region11: #{depth_decoder_forward.9} parent=0 // pred_check_branch
    %15 = sbr.rel (0) target = $region13
  $region12: #{depth_decoder_forward.9} parent=0 // pred_region
    _
  $region13: #{depth_decoder_forward.9} parent=0 // pred_fallthru
    _
  // Predicated region
  $region14: #{depth_decoder_forward.9} parent=0 // pred_check
    _
  $region15: #{depth_decoder_forward.9} parent=0 // pred_check_branch
    %17 = sbr.rel (0) target = $region17
  $region16: #{depth_decoder_forward.9} parent=0 // pred_region
    _
  $region17: #{depth_decoder_forward.9} parent=0 // pred_fallthru
    _
  // Predicated region
  $region18: #{depth_decoder_forward.9} parent=0 // pred_check
    _
  $region19: #{depth_decoder_forward.9} parent=0 // pred_check_branch
    %19 = sbr.rel (0) target = $region21
  $region20: #{depth_decoder_forward.9} parent=0 // pred_region
    _
  $region21: #{depth_decoder_forward.9} parent=0 // pred_fallthru
    _
  %v21 = vld [vmem:[%s0] sm:$0xff]
  %v22 = vld [vmem:[%s0 + $0x8] sm:$0x11]
  %v23 = vld [vmem:[%s0 + $0x10] sm:$0xff]
  %v24 = vld [vmem:[%s0 + $0x18] sm:$0x11]
  %v25 = vld [vmem:[%s1] sm:$0xf]
  %v26 = vld [vmem:[%s1 + $0x4] sm:$0xf]
  %v27 = vld [vmem:[%s1 + $0x8] sm:$0xf]
  %v28 = vld [vmem:[%s1 + $0xc] sm:$0xf]
  %v29 = vld [vmem:[%s1 + $0x10] sm:$0xf]
  %v30 = vld [vmem:[%s1 + $0x14] sm:$0xf]
  %v31 = vld [vmem:[%s1 + $0x18] sm:$0xf]
  %v32 = vld [vmem:[%s1 + $0x1c] sm:$0xf]
  %v33 = vld [vmem:[%s1 + $0x20] sm:$0xf]
  %v34 = vld [vmem:[%s1 + $0x24] sm:$0xf]
  %v35 = vld [vmem:[%s1 + $0x28] sm:$0xf]
  %v36 = vld [vmem:[%s1 + $0x2c] sm:$0xf]
  %v37 = vld [vmem:[%s1 + $0x30] sm:$0xf]
  %v38 = vld [vmem:[%s1 + $0x34] sm:$0xf]
  %v39 = vld [vmem:[%s1 + $0x38] sm:$0xf]
  %v40 = vld [vmem:[%s1 + $0x3c] sm:$0xf]
  %v41 = vld [vmem:[%s1 + $0x40] sm:$0xf]
  %v42 = vld [vmem:[%s1 + $0x44] sm:$0xf]
  %v43 = vld [vmem:[%s1 + $0x48] sm:$0xf]
  %v44 = vld [vmem:[%s1 + $0x4c] sm:$0xf]
  %v45 = vld [vmem:[%s1 + $0x50] sm:$0xf]
  %v46 = vld [vmem:[%s1 + $0x54] sm:$0xf]
  %v47 = vld [vmem:[%s1 + $0x58] sm:$0xf]
  %v48 = vld [vmem:[%s1 + $0x5c] sm:$0xf]
  %v49 = vld [vmem:[%s1 + $0x60] sm:$0xf]
  %v50 = vld [vmem:[%s1 + $0x64] sm:$0xf]
  %v51 = vld [vmem:[%s1 + $0x68] sm:$0xf]
  %v52 = vld [vmem:[%s1 + $0x6c] sm:$0xf]
  %v53 = vld [vmem:[%s1 + $0x70] sm:$0xf]
  %v54 = vld [vmem:[%s1 + $0x74] sm:$0xf]
  %v55 = vld [vmem:[%s1 + $0x78] sm:$0xf]
  %v56 = vld [vmem:[%s1 + $0x7c] sm:$0xf]
  %v57 = vld [vmem:[%s1 + $0x80] sm:$0xf]
  %v58 = vld [vmem:[%s1 + $0x84] sm:$0xf]
  %v59 = vld [vmem:[%s1 + $0x88] sm:$0xf]
  %v60 = vld [vmem:[%s1 + $0x8c] sm:$0xf]
  %v61 = vld [vmem:[%s1 + $0x90] sm:$0xf]
  %v62 = vld [vmem:[%s1 + $0x94] sm:$0xf]
  %v63 = vld [vmem:[%s1 + $0x98] sm:$0xf]
  %v64 = vld [vmem:[%s1 + $0x9c] sm:$0xf]
  %v65 = vld [vmem:[%s1 + $0xa0] sm:$0xf]
  %v66 = vld [vmem:[%s1 + $0xa4] sm:$0xf]
  %v67 = vld [vmem:[%s1 + $0xa8] sm:$0xf]
  %v68 = vld [vmem:[%s1 + $0xac] sm:$0xf]
  %v69 = vld [vmem:[%s1 + $0xb0] sm:$0xf]
  %v70 = vld [vmem:[%s1 + $0xb4] sm:$0xf]
  %v71 = vld [vmem:[%s1 + $0xb8] sm:$0xf]
  %v72 = vld [vmem:[%s1 + $0xbc] sm:$0xf]
  %v73 = vld [vmem:[%s1 + $0xc0] sm:$0xf]
  %v74 = vld [vmem:[%s1 + $0xc4] sm:$0xf]
  %v75 = vld [vmem:[%s1 + $0xc8] sm:$0xf]
  %v76 = vld [vmem:[%s1 + $0xcc] sm:$0xf]
  %v77 = vld [vmem:[%s1 + $0xd0] sm:$0xf]
  %v78 = vld [vmem:[%s1 + $0xd4] sm:$0xf]
  %v79 = vld [vmem:[%s1 + $0xd8] sm:$0xf]
  %v80 = vld [vmem:[%s1 + $0xdc] sm:$0xf]
  %v81 = vld [vmem:[%s1 + $0xe0] sm:$0xf]
  %v82 = vld [vmem:[%s1 + $0xe4] sm:$0xf]
  %v83 = vld [vmem:[%s1 + $0xe8] sm:$0xf]
  %v84 = vld [vmem:[%s1 + $0xec] sm:$0xf]
  %v87 = vunpack.c.l.b16 %v21
  %v88 = vunpack.c.h.b16 %v21
  %v89 = vunpack.c.l.b16 %v22
  %v90 = vunpack.c.h.b16 %v22
  %v91 = vpack.c.b16 %v89, %v87
  %v92 = vpack.c.b16 %v90, %v88
  %v94 = vshrl.u32 %v91, 16
  %v96 = vshll.u32 %v91, 16
  %v98 = vrot.slane %v96, 1
  %v99 = vor.u32 %v94, %v98
  %v101 = vshrl.u32 %v92, 16
  %v103 = vshll.u32 %v92, 16
  %v105 = vrot.slane %v103, 1
  %v106 = vor.u32 %v101, %v105
  %v128 = vunpack.c.l.b16 %v45
  %v129 = vunpack.c.l.b16 %v46
  %v130 = vunpack.c.l.b16 %v47
  %v131 = vunpack.c.l.b16 %v48
  %v132 = vunpack.c.l.b16 %v49
  %v133 = vunpack.c.l.b16 %v50
  %v134 = vunpack.c.l.b16 %v51
  %v135 = vunpack.c.l.b16 %v52
  %v136 = vunpack.c.l.b16 %v53
  %v137 = vunpack.c.l.b16 %v54
  %v138 = vunpack.c.l.b16 %v55
  %v139 = vunpack.c.l.b16 %v56
  %v140 = vunpack.c.l.b16 %v57
  %v141 = vunpack.c.l.b16 %v58
  %v142 = vunpack.c.l.b16 %v59
  %v143 = vunpack.c.l.b16 %v60
  %v144 = vunpack.c.l.b16 %v61
  %v145 = vunpack.c.l.b16 %v62
  %v146 = vunpack.c.l.b16 %v63
  %v147 = vunpack.c.l.b16 %v64
  %v148 = vpack.c.b16 %v129, %v128
  %v149 = vpack.c.b16 %v131, %v130
  %v150 = vpack.c.b16 %v133, %v132
  %v151 = vpack.c.b16 %v135, %v134
  %v152 = vpack.c.b16 %v137, %v136
  %v153 = vpack.c.b16 %v139, %v138
  %v154 = vpack.c.b16 %v141, %v140
  %v155 = vpack.c.b16 %v143, %v142
  %v156 = vpack.c.b16 %v145, %v144
  %v157 = vpack.c.b16 %v147, %v146
  %vm168 = vcmask 261120
  %v170 = vsel %vm168, %v106, 0
  %172 = vmatpush.bf16.msra.mxu0 %v155
  %173 = vmatpush.bf16.msra.mxu0 %v154
  %174 = vmatpush.bf16.msra.mxu0 %v153
  %175 = vmatpush.bf16.msra.mxu0 %v152
  %176 = vmatpush.bf16.msra.mxu0 %v151
  %177 = vmatpush.bf16.msra.mxu0 %v150
  %178 = vmatpush.bf16.msra.mxu0 %v149
  %179 = vmatpush.bf16.msra.mxu0 %v148
  %180 = vmatmul.bf16.gmra.mxu0 %v99
  %v181 = vpop.f32.mrf.mxu0
  %v182 = vadd.f32 0.0, %v181
  %v183 = vpop.f32.mrf.mxu0
  %184 = vdwg.mxu0
  %185 = vmatpush.bf16.msra.mxu0 0
  %186 = vmatpush.bf16.msra.mxu0 0
  %187 = vmatpush.bf16.msra.mxu0 0
  %188 = vmatpush.bf16.msra.mxu0 0
  %189 = vmatpush.bf16.msra.mxu0 0
  %190 = vmatpush.bf16.msra.mxu0 0
  %191 = vmatpush.bf16.msra.mxu0 %v157
  %192 = vmatpush.bf16.msra.mxu0 %v156
  %193 = vmatmul.bf16.gmra.mxu0 %v170
  %v194 = vpop.f32.mrf.mxu0
  %v195 = vadd.f32 %v182, %v194
  %v196 = vpop.f32.mrf.mxu0
  %197 = vdwg.mxu0
  %v198 = vpack.c.b16 %v87, %v87
  %v199 = vpack.c.b16 %v88, %v88
  %v221 = vunpack.c.l.b16 %v25
  %v222 = vunpack.c.l.b16 %v26
  %v223 = vunpack.c.l.b16 %v27
  %v224 = vunpack.c.l.b16 %v28
  %v225 = vunpack.c.l.b16 %v29
  %v226 = vunpack.c.l.b16 %v30
  %v227 = vunpack.c.l.b16 %v31
  %v228 = vunpack.c.l.b16 %v32
  %v229 = vunpack.c.l.b16 %v33
  %v230 = vunpack.c.l.b16 %v34
  %v231 = vunpack.c.l.b16 %v35
  %v232 = vunpack.c.l.b16 %v36
  %v233 = vunpack.c.l.b16 %v37
  %v234 = vunpack.c.l.b16 %v38
  %v235 = vunpack.c.l.b16 %v39
  %v236 = vunpack.c.l.b16 %v40
  %v237 = vunpack.c.l.b16 %v41
  %v238 = vunpack.c.l.b16 %v42
  %v239 = vunpack.c.l.b16 %v43
  %v240 = vunpack.c.l.b16 %v44
  %v241 = vpack.c.b16 %v222, %v221
  %v242 = vpack.c.b16 %v224, %v223
  %v243 = vpack.c.b16 %v226, %v225
  %v244 = vpack.c.b16 %v228, %v227
  %v245 = vpack.c.b16 %v230, %v229
  %v246 = vpack.c.b16 %v232, %v231
  %v247 = vpack.c.b16 %v234, %v233
  %v248 = vpack.c.b16 %v236, %v235
  %v249 = vpack.c.b16 %v238, %v237
  %v250 = vpack.c.b16 %v240, %v239
  %v262 = vsel %vm168, %v199, 0
  %264 = vmatpush.bf16.msra.mxu0 %v248
  %265 = vmatpush.bf16.msra.mxu0 %v247
  %266 = vmatpush.bf16.msra.mxu0 %v246
  %267 = vmatpush.bf16.msra.mxu0 %v245
  %268 = vmatpush.bf16.msra.mxu0 %v244
  %269 = vmatpush.bf16.msra.mxu0 %v243
  %270 = vmatpush.bf16.msra.mxu0 %v242
  %271 = vmatpush.bf16.msra.mxu0 %v241
  %272 = vmatmul.bf16.gmra.mxu0 %v198
  %v273 = vpop.f32.mrf.mxu0
  %v274 = vadd.f32 %v195, %v273
  %v275 = vpop.f32.mrf.mxu0
  %276 = vdwg.mxu0
  %277 = vmatpush.bf16.msra.mxu0 0
  %278 = vmatpush.bf16.msra.mxu0 0
  %279 = vmatpush.bf16.msra.mxu0 0
  %280 = vmatpush.bf16.msra.mxu0 0
  %281 = vmatpush.bf16.msra.mxu0 0
  %282 = vmatpush.bf16.msra.mxu0 0
  %283 = vmatpush.bf16.msra.mxu0 %v250
  %284 = vmatpush.bf16.msra.mxu0 %v249
  %285 = vmatmul.bf16.gmra.mxu0 %v262
  %v286 = vpop.f32.mrf.mxu0
  %v287 = vadd.f32 %v274, %v286
  %v288 = vpop.f32.mrf.mxu0
  %289 = vdwg.mxu0
  %v290 = vrot.slane %v91, 1
  %v291 = vrot.slane %v92, 1
  %v313 = vunpack.c.l.b16 %v65
  %v314 = vunpack.c.l.b16 %v66
  %v315 = vunpack.c.l.b16 %v67
  %v316 = vunpack.c.l.b16 %v68
  %v317 = vunpack.c.l.b16 %v69
  %v318 = vunpack.c.l.b16 %v70
  %v319 = vunpack.c.l.b16 %v71
  %v320 = vunpack.c.l.b16 %v72
  %v321 = vunpack.c.l.b16 %v73
  %v322 = vunpack.c.l.b16 %v74
  %v323 = vunpack.c.l.b16 %v75
  %v324 = vunpack.c.l.b16 %v76
  %v325 = vunpack.c.l.b16 %v77
  %v326 = vunpack.c.l.b16 %v78
  %v327 = vunpack.c.l.b16 %v79
  %v328 = vunpack.c.l.b16 %v80
  %v329 = vunpack.c.l.b16 %v81
  %v330 = vunpack.c.l.b16 %v82
  %v331 = vunpack.c.l.b16 %v83
  %v332 = vunpack.c.l.b16 %v84
  %v333 = vpack.c.b16 %v314, %v313
  %v334 = vpack.c.b16 %v316, %v315
  %v335 = vpack.c.b16 %v318, %v317
  %v336 = vpack.c.b16 %v320, %v319
  %v337 = vpack.c.b16 %v322, %v321
  %v338 = vpack.c.b16 %v324, %v323
  %v339 = vpack.c.b16 %v326, %v325
  %v340 = vpack.c.b16 %v328, %v327
  %v341 = vpack.c.b16 %v330, %v329
  %v342 = vpack.c.b16 %v332, %v331
  %v354 = vsel %vm168, %v291, 0
  %356 = vmatpush.bf16.msra.mxu0 %v340
  %357 = vmatpush.bf16.msra.mxu0 %v339
  %358 = vmatpush.bf16.msra.mxu0 %v338
  %359 = vmatpush.bf16.msra.mxu0 %v337
  %360 = vmatpush.bf16.msra.mxu0 %v336
  %361 = vmatpush.bf16.msra.mxu0 %v335
  %362 = vmatpush.bf16.msra.mxu0 %v334
  %363 = vmatpush.bf16.msra.mxu0 %v333
  %364 = vmatmul.bf16.gmra.mxu0 %v290
  %v365 = vpop.f32.mrf.mxu0
  %v366 = vadd.f32 0.0, %v365
  %v367 = vpop.f32.mrf.mxu0
  %368 = vdwg.mxu0
  %369 = vmatpush.bf16.msra.mxu0 0
  %370 = vmatpush.bf16.msra.mxu0 0
  %371 = vmatpush.bf16.msra.mxu0 0
  %372 = vmatpush.bf16.msra.mxu0 0
  %373 = vmatpush.bf16.msra.mxu0 0
  %374 = vmatpush.bf16.msra.mxu0 0
  %375 = vmatpush.bf16.msra.mxu0 %v342
  %376 = vmatpush.bf16.msra.mxu0 %v341
  %377 = vmatmul.bf16.gmra.mxu0 %v354
  %v378 = vpop.f32.mrf.mxu0
  %v379 = vadd.f32 %v366, %v378
  %v380 = vpop.f32.mrf.mxu0
  %381 = vdwg.mxu0
  %v382 = vadd.f32 %v287, %v379
  %v385 = vunpack.c.l.b16 %v23
  %v386 = vunpack.c.h.b16 %v23
  %v387 = vunpack.c.l.b16 %v24
  %v388 = vunpack.c.h.b16 %v24
  %v389 = vpack.c.b16 %v387, %v385
  %v390 = vpack.c.b16 %v388, %v386
  %v392 = vshrl.u32 %v389, 16
  %v394 = vshll.u32 %v389, 16
  %v396 = vrot.slane %v394, 1
  %v397 = vor.u32 %v392, %v396
  %v399 = vshrl.u32 %v390, 16
  %v401 = vshll.u32 %v390, 16
  %v403 = vrot.slane %v401, 1
  %v404 = vor.u32 %v399, %v403
  %v407 = vsel %vm168, %v404, 0
  %409 = vmatpush.bf16.msra.mxu0 %v155
  %410 = vmatpush.bf16.msra.mxu0 %v154
  %411 = vmatpush.bf16.msra.mxu0 %v153
  %412 = vmatpush.bf16.msra.mxu0 %v152
  %413 = vmatpush.bf16.msra.mxu0 %v151
  %414 = vmatpush.bf16.msra.mxu0 %v150
  %415 = vmatpush.bf16.msra.mxu0 %v149
  %416 = vmatpush.bf16.msra.mxu0 %v148
  %417 = vmatmul.bf16.gmra.mxu0 %v397
  %v418 = vpop.f32.mrf.mxu0
  %v419 = vadd.f32 0.0, %v418
  %v420 = vpop.f32.mrf.mxu0
  %421 = vdwg.mxu0
  %422 = vmatpush.bf16.msra.mxu0 0
  %423 = vmatpush.bf16.msra.mxu0 0
  %424 = vmatpush.bf16.msra.mxu0 0
  %425 = vmatpush.bf16.msra.mxu0 0
  %426 = vmatpush.bf16.msra.mxu0 0
  %427 = vmatpush.bf16.msra.mxu0 0
  %428 = vmatpush.bf16.msra.mxu0 %v157
  %429 = vmatpush.bf16.msra.mxu0 %v156
  %430 = vmatmul.bf16.gmra.mxu0 %v407
  %v431 = vpop.f32.mrf.mxu0
  %v432 = vadd.f32 %v419, %v431
  %v433 = vpop.f32.mrf.mxu0
  %434 = vdwg.mxu0
  %v435 = vpack.c.b16 %v385, %v385
  %v436 = vpack.c.b16 %v386, %v386
  %v439 = vsel %vm168, %v436, 0
  %441 = vmatpush.bf16.msra.mxu0 %v248
  %442 = vmatpush.bf16.msra.mxu0 %v247
  %443 = vmatpush.bf16.msra.mxu0 %v246
  %444 = vmatpush.bf16.msra.mxu0 %v245
  %445 = vmatpush.bf16.msra.mxu0 %v244
  %446 = vmatpush.bf16.msra.mxu0 %v243
  %447 = vmatpush.bf16.msra.mxu0 %v242
  %448 = vmatpush.bf16.msra.mxu0 %v241
  %449 = vmatmul.bf16.gmra.mxu0 %v435
  %v450 = vpop.f32.mrf.mxu0
  %v451 = vadd.f32 %v432, %v450
  %v452 = vpop.f32.mrf.mxu0
  %453 = vdwg.mxu0
  %454 = vmatpush.bf16.msra.mxu0 0
  %455 = vmatpush.bf16.msra.mxu0 0
  %456 = vmatpush.bf16.msra.mxu0 0
  %457 = vmatpush.bf16.msra.mxu0 0
  %458 = vmatpush.bf16.msra.mxu0 0
  %459 = vmatpush.bf16.msra.mxu0 0
  %460 = vmatpush.bf16.msra.mxu0 %v250
  %461 = vmatpush.bf16.msra.mxu0 %v249
  %462 = vmatmul.bf16.gmra.mxu0 %v439
  %v463 = vpop.f32.mrf.mxu0
  %v464 = vadd.f32 %v451, %v463
  %v465 = vpop.f32.mrf.mxu0
  %466 = vdwg.mxu0
  %v467 = vrot.slane %v389, 1
  %v468 = vrot.slane %v390, 1
  %v471 = vsel %vm168, %v468, 0
  %473 = vmatpush.bf16.msra.mxu0 %v340
  %474 = vmatpush.bf16.msra.mxu0 %v339
  %475 = vmatpush.bf16.msra.mxu0 %v338
  %476 = vmatpush.bf16.msra.mxu0 %v337
  %477 = vmatpush.bf16.msra.mxu0 %v336
  %478 = vmatpush.bf16.msra.mxu0 %v335
  %479 = vmatpush.bf16.msra.mxu0 %v334
  %480 = vmatpush.bf16.msra.mxu0 %v333
  %481 = vmatmul.bf16.gmra.mxu0 %v467
  %v482 = vpop.f32.mrf.mxu0
  %v483 = vadd.f32 0.0, %v482
  %v484 = vpop.f32.mrf.mxu0
  %485 = vdwg.mxu0
  %486 = vmatpush.bf16.msra.mxu0 0
  %487 = vmatpush.bf16.msra.mxu0 0
  %488 = vmatpush.bf16.msra.mxu0 0
  %489 = vmatpush.bf16.msra.mxu0 0
  %490 = vmatpush.bf16.msra.mxu0 0
  %491 = vmatpush.bf16.msra.mxu0 0
  %492 = vmatpush.bf16.msra.mxu0 %v342
  %493 = vmatpush.bf16.msra.mxu0 %v341
  %494 = vmatmul.bf16.gmra.mxu0 %v471
  %v495 = vpop.f32.mrf.mxu0
  %v496 = vadd.f32 %v483, %v495
  %v497 = vpop.f32.mrf.mxu0
  %498 = vdwg.mxu0
  %v499 = vadd.f32 %v464, %v496
  %vm500 = vcmask 523264
  %v501 = vsel %vm500, %v382, 0.0
  %v502 = vrot.slane %v501, 4
  %v503 = vadd.f32 %v501, %v502
  %v504 = vrot.slane %v503, 2
  %v505 = vadd.f32 %v503, %v504
  %v506 = vrot.slane %v505, 1
  %v507 = vadd.f32 %v505, %v506
  %v508 = vmul.f32 %v382, %v382
  %v509 = vsel %vm500, %v508, 0.0
  %v510 = vrot.slane %v509, 4
  %v511 = vadd.f32 %v509, %v510
  %v512 = vrot.slane %v511, 2
  %v513 = vadd.f32 %v511, %v512
  %v514 = vrot.slane %v513, 1
  %v515 = vadd.f32 %v513, %v514
  %v516 = vsel %vm500, %v499, 0.0
  %v517 = vrot.slane %v516, 4
  %v518 = vadd.f32 %v516, %v517
  %v519 = vrot.slane %v518, 2
  %v520 = vadd.f32 %v518, %v519
  %v521 = vrot.slane %v520, 1
  %v522 = vadd.f32 %v520, %v521
  %v523 = vadd.f32 %v507, %v522
  %v524 = vmul.f32 %v499, %v499
  %v525 = vsel %vm500, %v524, 0.0
  %v526 = vrot.slane %v525, 4
  %v527 = vadd.f32 %v525, %v526
  %v528 = vrot.slane %v527, 2
  %v529 = vadd.f32 %v527, %v528
  %v530 = vrot.slane %v529, 1
  %v531 = vadd.f32 %v529, %v530
  %v532 = vadd.f32 %v515, %v531
  %v533 = vld [vmem:[%s4] sm:$0xff]
  %v534 = vld [vmem:[%s4 + $0x8] sm:$0xff]
  %v535 = vld [vmem:[%s4 + $0x10] sm:$0xff]
  %v536 = vld [vmem:[%s4 + $0x18] sm:$0xff]
  %v537 = vld [vmem:[%s4 + $0x20] sm:$0xff]
  %v538 = vld [vmem:[%s4 + $0x28] sm:$0xff]
  %v539 = vld [vmem:[%s4 + $0x30] sm:$0xff]
  %v540 = vld [vmem:[%s4 + $0x38] sm:$0xff]
  %v542 = vsel %vm500, %v523, 0
  %544 = vmatpush.msra.mxu0 0.0
  %545 = vmatpush.msra.mxu0 0.0
  %546 = vmatpush.msra.mxu0 0.0
  %547 = vmatpush.msra.mxu0 0.0
  %548 = vmatpush.msra.mxu0 0.0
  %549 = vmatpush.msra.mxu0 0.0
  %550 = vmatpush.msra.mxu0 0.0
  %551 = vmatpush.msra.mxu0 0.0
  %552 = vmatpush.msra.mxu0 %v540
  %553 = vmatpush.msra.mxu0 %v539
  %554 = vmatpush.msra.mxu0 %v538
  %555 = vmatpush.msra.mxu0 %v537
  %556 = vmatpush.msra.mxu0 %v536
  %557 = vmatpush.msra.mxu0 %v535
  %558 = vmatpush.msra.mxu0 %v534
  %559 = vmatpush.msra.mxu0 %v533
  %560 = vmatmul.f32.gmra.mxu0 %v542
  %v561 = vpop.f32.mrf.mxu0
  %v562 = vadd.f32 0.0, %v561
  %563 = vdwg.mxu0
  %v564 = vmul.f32 %v562, 0.0078125
  %v566 = vsel %vm500, %v532, 0
  %568 = vmatpush.msra.mxu0 0.0
  %569 = vmatpush.msra.mxu0 0.0
  %570 = vmatpush.msra.mxu0 0.0
  %571 = vmatpush.msra.mxu0 0.0
  %572 = vmatpush.msra.mxu0 0.0
  %573 = vmatpush.msra.mxu0 0.0
  %574 = vmatpush.msra.mxu0 0.0
  %575 = vmatpush.msra.mxu0 0.0
  %576 = vmatpush.msra.mxu0 %v540
  %577 = vmatpush.msra.mxu0 %v539
  %578 = vmatpush.msra.mxu0 %v538
  %579 = vmatpush.msra.mxu0 %v537
  %580 = vmatpush.msra.mxu0 %v536
  %581 = vmatpush.msra.mxu0 %v535
  %582 = vmatpush.msra.mxu0 %v534
  %583 = vmatpush.msra.mxu0 %v533
  %584 = vmatmul.f32.gmra.mxu0 %v566
  %v585 = vpop.f32.mrf.mxu0
  %v586 = vadd.f32 0.0, %v585
  %587 = vdwg.mxu0
  %v588 = vmul.f32 %v586, 0.0078125
  %v589 = vmul.f32 %v564, %v564
  %v590 = vsub.f32 %v588, %v589
  %v591 = vmax.f32 %v590, 0.0
  %v592 = vadd.f32 %v591, 1e-05
  %v593 = vrsqrt.pop %v592
  %v594 = vmul.f32 %v593, %v592
  %v595 = vmul.f32 %v594, %v593
  %v596 = vmul.f32 0.5, %v595
  %v597 = vsub.f32 1.5, %v596
  %v598 = vmul.f32 %v593, %v597
  %vm599 = vweird.f32 %v592
  %vm600 = vweird.f32 %v593
  %vm601 = vmor %vm599, %vm600
  %v602 = vsel %vm601, %v593, %v598
  %v603 = vld [vmem:[%s2] sm:$0x1]
  %v604 = vmul.f32 %v602, %v603
  %v605 = vld [vmem:[%s3] sm:$0x1]
  %v606 = vmul.f32 %v564, %v604
  %v607 = vsub.f32 %v605, %v606
  %v608 = vperm.slane %v604, 0
  %v609 = vmul.f32 %v382, %v608
  %v611 = vperm.slane %v607, 0
  %v613 = vadd.f32 %v609, %v611
  %vm614 = vcmp.ge.f32.partialorder %v613, 0.0
  %v615 = vmul.f32 %v613, 0.2
  %v616 = vsel %vm614, %v613, %v615
  %v617 = vpack.c.bf16 %v616, %v616
  %vm618 = vcmask 519168
  %619 = vst.msk [vmem:[%s5] sm:$0xf] %vm618, %v617
  %v620 = vmul.f32 %v499, %v608
  %v621 = vadd.f32 %v620, %v611
  %vm622 = vcmp.ge.f32.partialorder %v621, 0.0
  %v623 = vmul.f32 %v621, 0.2
  %v624 = vsel %vm622, %v621, %v623
  %v625 = vpack.c.bf16 %v624, %v624
  %626 = vst.msk [vmem:[%s5 + $0x4] sm:$0xf] %vm618, %v625
  // Predicated region
  $region22: #{depth_decoder_forward.9} parent=0 // pred_check
    _
  $region23: #{depth_decoder_forward.9} parent=0 // pred_check_branch
    %628 = sbr.rel (0) target = $region25
  $region24: #{depth_decoder_forward.9} parent=0 // pred_region
    _
  $region25: #{depth_decoder_forward.9} parent=0 // pred_fallthru
    _
  // Predicated region
  $region26: #{depth_decoder_forward.9} parent=0 // pred_check
    _
  $region27: #{depth_decoder_forward.9} parent=0 // pred_check_branch
    %630 = sbr.rel (0) target = $region29
  $region28: #{depth_decoder_forward.9} parent=0 // pred_region
    _
  $region29: #{depth_decoder_forward.9} parent=0 // pred_fallthru
    _

// kernel: depth_decoder_forward.10
$region0: #{depth_decoder_forward.10}
  #allocation0 [shape = 'u32[]', space=smem, size = 0x4, offset = 0x4, fixed_abs, tag = 'smem constant byte address 0x4 - core index']
  #allocation1 [shape = 'u32[72,128]{1,0:T(1,128)}', space=vmem, size = 0x9000, scoped, tag = 'internal scratch']
  %s0 = inlined_call_operand.vmem [shape: bf16[2,18,144], index: 0, kind: input, shape index: {}]
  %s1 = inlined_call_operand.vmem [shape: bf16[3,144,64], index: 1, kind: input, shape index: {}]
  %s2 = inlined_call_operand.vmem [shape: f32[1,64], index: 2, kind: input, shape index: {}]
  %s3 = inlined_call_operand.vmem [shape: f32[1,64], index: 3, kind: input, shape index: {}]
  %s4 = inlined_call_operand.vmem [shape: f32[64,64], index: 4, kind: input, shape index: {}]
  %s5 = inlined_call_operand.vmem [shape: bf16[32,64], index: 5, kind: output, shape index: {}]
  %s6 = sld [smem:[#allocation0]]
  $region30: #{depth_decoder_forward.10} parent=0
    _
  %s8 = ssub.s32 1, %s6
  %s9 = scalar_select 0, %s8, %s6
  // Predicated region
  $region2: #{depth_decoder_forward.10} parent=0 // pred_check
    _
  $region3: #{depth_decoder_forward.10} parent=0 // pred_check_branch
    %11 = sbr.rel (0) target = $region5
  $region4: #{depth_decoder_forward.10} parent=0 // pred_region
    _
  $region5: #{depth_decoder_forward.10} parent=0 // pred_fallthru
    _
  // Predicated region
  $region6: #{depth_decoder_forward.10} parent=0 // pred_check
    _
  $region7: #{depth_decoder_forward.10} parent=0 // pred_check_branch
    %13 = sbr.rel (0) target = $region9
  $region8: #{depth_decoder_forward.10} parent=0 // pred_region
    _
  $region9: #{depth_decoder_forward.10} parent=0 // pred_fallthru
    _
  // Predicated region
  $region10: #{depth_decoder_forward.10} parent=0 // pred_check
    _
  $region11: #{depth_decoder_forward.10} parent=0 // pred_check_branch
    %15 = sbr.rel (0) target = $region13
  $region12: #{depth_decoder_forward.10} parent=0 // pred_region
    _
  $region13: #{depth_decoder_forward.10} parent=0 // pred_fallthru
    _
  // Predicated region
  $region14: #{depth_decoder_forward.10} parent=0 // pred_check
    _
  $region15: #{depth_decoder_forward.10} parent=0 // pred_check_branch
    %17 = sbr.rel (0) target = $region17
  $region16: #{depth_decoder_forward.10} parent=0 // pred_region
    _
  $region17: #{depth_decoder_forward.10} parent=0 // pred_fallthru
    _
  // Predicated region
  $region18: #{depth_decoder_forward.10} parent=0 // pred_check
    _
  $region19: #{depth_decoder_forward.10} parent=0 // pred_check_branch
    %19 = sbr.rel (0) target = $region21
  $region20: #{depth_decoder_forward.10} parent=0 // pred_region
    _
  $region21: #{depth_decoder_forward.10} parent=0 // pred_fallthru
    _
  %v21 = vld [vmem:[%s0] sm:$0xff]
  %v22 = vld [vmem:[%s0 + $0x8] sm:$0xff]
  %v23 = vld [vmem:[%s0 + $0x10] sm:$0x11]
  %v24 = vld [vmem:[%s0 + $0x18] sm:$0xff]
  %v25 = vld [vmem:[%s0 + $0x20] sm:$0xff]
  %v26 = vld [vmem:[%s0 + $0x28] sm:$0x11]
  %v27 = vld [vmem:[%s1] sm:$0xf]
  %v28 = vld [vmem:[%s1 + $0x4] sm:$0xf]
  %v29 = vld [vmem:[%s1 + $0x8] sm:$0xf]
  %v30 = vld [vmem:[%s1 + $0xc] sm:$0xf]
  %v31 = vld [vmem:[%s1 + $0x10] sm:$0xf]
  %v32 = vld [vmem:[%s1 + $0x14] sm:$0xf]
  %v33 = vld [vmem:[%s1 + $0x18] sm:$0xf]
  %v34 = vld [vmem:[%s1 + $0x1c] sm:$0xf]
  %v35 = vld [vmem:[%s1 + $0x20] sm:$0xf]
  %v36 = vld [vmem:[%s1 + $0x24] sm:$0xf]
  %v37 = vld [vmem:[%s1 + $0x28] sm:$0xf]
  %v38 = vld [vmem:[%s1 + $0x2c] sm:$0xf]
  %v39 = vld [vmem:[%s1 + $0x30] sm:$0xf]
  %v40 = vld [vmem:[%s1 + $0x34] sm:$0xf]
  %v41 = vld [vmem:[%s1 + $0x38] sm:$0xf]
  %v42 = vld [vmem:[%s1 + $0x3c] sm:$0xf]
  %v43 = vld [vmem:[%s1 + $0x40] sm:$0xf]
  %v44 = vld [vmem:[%s1 + $0x44] sm:$0xf]
  %v45 = vld [vmem:[%s1 + $0x48] sm:$0xf]
  %v46 = vld [vmem:[%s1 + $0x4c] sm:$0xf]
  %v47 = vld [vmem:[%s1 + $0x50] sm:$0xf]
  %v48 = vld [vmem:[%s1 + $0x54] sm:$0xf]
  %v49 = vld [vmem:[%s1 + $0x58] sm:$0xf]
  %v50 = vld [vmem:[%s1 + $0x5c] sm:$0xf]
  %v51 = vld [vmem:[%s1 + $0x60] sm:$0xf]
  %v52 = vld [vmem:[%s1 + $0x64] sm:$0xf]
  %v53 = vld [vmem:[%s1 + $0x68] sm:$0xf]
  %v54 = vld [vmem:[%s1 + $0x6c] sm:$0xf]
  %v55 = vld [vmem:[%s1 + $0x70] sm:$0xf]
  %v56 = vld [vmem:[%s1 + $0x74] sm:$0xf]
  %v57 = vld [vmem:[%s1 + $0x78] sm:$0xf]
  %v58 = vld [vmem:[%s1 + $0x7c] sm:$0xf]
  %v59 = vld [vmem:[%s1 + $0x80] sm:$0xf]
  %v60 = vld [vmem:[%s1 + $0x84] sm:$0xf]
  %v61 = vld [vmem:[%s1 + $0x88] sm:$0xf]
  %v62 = vld [vmem:[%s1 + $0x8c] sm:$0xf]
  %v63 = vld [vmem:[%s1 + $0x90] sm:$0xf]
  %v64 = vld [vmem:[%s1 + $0x94] sm:$0xf]
  %v65 = vld [vmem:[%s1 + $0x98] sm:$0xf]
  %v66 = vld [vmem:[%s1 + $0x9c] sm:$0xf]
  %v67 = vld [vmem:[%s1 + $0xa0] sm:$0xf]
  %v68 = vld [vmem:[%s1 + $0xa4] sm:$0xf]
  %v69 = vld [vmem:[%s1 + $0xa8] sm:$0xf]
  %v70 = vld [vmem:[%s1 + $0xac] sm:$0xf]
  %v71 = vld [vmem:[%s1 + $0xb0] sm:$0xf]
  %v72 = vld [vmem:[%s1 + $0xb4] sm:$0xf]
  %v73 = vld [vmem:[%s1 + $0xb8] sm:$0xf]
  %v74 = vld [vmem:[%s1 + $0xbc] sm:$0xf]
  %v75 = vld [vmem:[%s1 + $0xc0] sm:$0xf]
  %v76 = vld [vmem:[%s1 + $0xc4] sm:$0xf]
  %v77 = vld [vmem:[%s1 + $0xc8] sm:$0xf]
  %v78 = vld [vmem:[%s1 + $0xcc] sm:$0xf]
  %v79 = vld [vmem:[%s1 + $0xd0] sm:$0xf]
  %v80 = vld [vmem:[%s1 + $0xd4] sm:$0xf]
  %v84 = vunpack.c.l.b16 %v21
  %v85 = vunpack.c.h.b16 %v21
  %v86 = vunpack.c.l.b16 %v22
  %v87 = vunpack.c.h.b16 %v22
  %v88 = vunpack.c.l.b16 %v23
  %v89 = vunpack.c.h.b16 %v23
  %v90 = vpack.c.b16 %v86, %v84
  %v91 = vpack.c.b16 %v87, %v85
  %v92 = vpack.c.b16 %v88, %v88
  %v93 = vpack.c.b16 %v89, %v89
  %vm94 = vsmask.f32 7424
  %v96 = vshrl.u32 %v90, 16
  %v98 = vshll.u32 %v90, 16
  %v100 = vrot.slane %v98, 1
  %v101 = vor.u32 %v96, %v100
  %v103 = vshll.u32 %v92, 16
  %v105 = vrot.slane %v103, 1
  %v106 = vsel %vm94, %v101, %v105
  %v108 = vshrl.u32 %v91, 16
  %v110 = vshll.u32 %v91, 16
  %v112 = vrot.slane %v110, 1
  %v113 = vor.u32 %v108, %v112
  %v115 = vshll.u32 %v93, 16
  %v117 = vrot.slane %v115, 1
  %v118 = vsel %vm94, %v113, %v117
  %v138 = vunpack.c.l.b16 %v45
  %v139 = vunpack.c.l.b16 %v46
  %v140 = vunpack.c.l.b16 %v47
  %v141 = vunpack.c.l.b16 %v48
  %v142 = vunpack.c.l.b16 %v49
  %v143 = vunpack.c.l.b16 %v50
  %v144 = vunpack.c.l.b16 %v51
  %v145 = vunpack.c.l.b16 %v52
  %v146 = vunpack.c.l.b16 %v53
  %v147 = vunpack.c.l.b16 %v54
  %v148 = vunpack.c.l.b16 %v55
  %v149 = vunpack.c.l.b16 %v56
  %v150 = vunpack.c.l.b16 %v57
  %v151 = vunpack.c.l.b16 %v58
  %v152 = vunpack.c.l.b16 %v59
  %v153 = vunpack.c.l.b16 %v60
  %v154 = vunpack.c.l.b16 %v61
  %v155 = vunpack.c.l.b16 %v62
  %v156 = vpack.c.b16 %v139, %v138
  %v157 = vpack.c.b16 %v141, %v140
  %v158 = vpack.c.b16 %v143, %v142
  %v159 = vpack.c.b16 %v145, %v144
  %v160 = vpack.c.b16 %v147, %v146
  %v161 = vpack.c.b16 %v149, %v148
  %v162 = vpack.c.b16 %v151, %v150
  %v163 = vpack.c.b16 %v153, %v152
  %v164 = vpack.c.b16 %v155, %v154
  %vm174 = vcmask 130048
  %v176 = vsel %vm174, %v118, 0
  %178 = vmatpush.bf16.msra.mxu0 %v163
  %179 = vmatpush.bf16.msra.mxu0 %v162
  %180 = vmatpush.bf16.msra.mxu0 %v161
  %181 = vmatpush.bf16.msra.mxu0 %v160
  %182 = vmatpush.bf16.msra.mxu0 %v159
  %183 = vmatpush.bf16.msra.mxu0 %v158
  %184 = vmatpush.bf16.msra.mxu0 %v157
  %185 = vmatpush.bf16.msra.mxu0 %v156
  %186 = vmatmul.bf16.gmra.mxu0 %v106
  %v187 = vpop.f32.mrf.mxu0
  %v188 = vadd.f32 0.0, %v187
  %v189 = vpop.f32.mrf.mxu0
  %v190 = vadd.f32 0.0, %v189
  %191 = vdwg.mxu0
  %192 = vmatpush.bf16.msra.mxu0 0
  %193 = vmatpush.bf16.msra.mxu0 0
  %194 = vmatpush.bf16.msra.mxu0 0
  %195 = vmatpush.bf16.msra.mxu0 0
  %196 = vmatpush.bf16.msra.mxu0 0
  %197 = vmatpush.bf16.msra.mxu0 0
  %198 = vmatpush.bf16.msra.mxu0 0
  %199 = vmatpush.bf16.msra.mxu0 %v164
  %200 = vmatmul.bf16.gmra.mxu0 %v176
  %v201 = vpop.f32.mrf.mxu0
  %v202 = vadd.f32 %v188, %v201
  %v203 = vpop.f32.mrf.mxu0
  %v204 = vadd.f32 %v190, %v203
  %205 = vdwg.mxu0
  %v225 = vunpack.c.l.b16 %v27
  %v226 = vunpack.c.l.b16 %v28
  %v227 = vunpack.c.l.b16 %v29
  %v228 = vunpack.c.l.b16 %v30
  %v229 = vunpack.c.l.b16 %v31
  %v230 = vunpack.c.l.b16 %v32
  %v231 = vunpack.c.l.b16 %v33
  %v232 = vunpack.c.l.b16 %v34
  %v233 = vunpack.c.l.b16 %v35
  %v234 = vunpack.c.l.b16 %v36
  %v235 = vunpack.c.l.b16 %v37
  %v236 = vunpack.c.l.b16 %v38
  %v237 = vunpack.c.l.b16 %v39
  %v238 = vunpack.c.l.b16 %v40
  %v239 = vunpack.c.l.b16 %v41
  %v240 = vunpack.c.l.b16 %v42
  %v241 = vunpack.c.l.b16 %v43
  %v242 = vunpack.c.l.b16 %v44
  %v243 = vpack.c.b16 %v226, %v225
  %v244 = vpack.c.b16 %v228, %v227
  %v245 = vpack.c.b16 %v230, %v229
  %v246 = vpack.c.b16 %v232, %v231
  %v247 = vpack.c.b16 %v234, %v233
  %v248 = vpack.c.b16 %v236, %v235
  %v249 = vpack.c.b16 %v238, %v237
  %v250 = vpack.c.b16 %v240, %v239
  %v251 = vpack.c.b16 %v242, %v241
  %v261 = vsel %vm174, %v91, 0
  %263 = vmatpush.bf16.msra.mxu0 %v250
  %264 = vmatpush.bf16.msra.mxu0 %v249
  %265 = vmatpush.bf16.msra.mxu0 %v248
  %266 = vmatpush.bf16.msra.mxu0 %v247
  %267 = vmatpush.bf16.msra.mxu0 %v246
  %268 = vmatpush.bf16.msra.mxu0 %v245
  %269 = vmatpush.bf16.msra.mxu0 %v244
  %270 = vmatpush.bf16.msra.mxu0 %v243
  %271 = vmatmul.bf16.gmra.mxu0 %v90
  %v272 = vpop.f32.mrf.mxu0
  %v273 = vadd.f32 %v202, %v272
  %v274 = vpop.f32.mrf.mxu0
  %v275 = vadd.f32 %v204, %v274
  %276 = vdwg.mxu0
  %277 = vmatpush.bf16.msra.mxu0 0
  %278 = vmatpush.bf16.msra.mxu0 0
  %279 = vmatpush.bf16.msra.mxu0 0
  %280 = vmatpush.bf16.msra.mxu0 0
  %281 = vmatpush.bf16.msra.mxu0 0
  %282 = vmatpush.bf16.msra.mxu0 0
  %283 = vmatpush.bf16.msra.mxu0 0
  %284 = vmatpush.bf16.msra.mxu0 %v251
  %285 = vmatmul.bf16.gmra.mxu0 %v261
  %v286 = vpop.f32.mrf.mxu0
  %v287 = vadd.f32 %v273, %v286
  %v288 = vpop.f32.mrf.mxu0
  %v289 = vadd.f32 %v275, %v288
  %290 = vdwg.mxu0
  %vm291 = vcmask 1046528
  %v292 = vrot.slane %v90, 1
  %v293 = vrot.slane %v92, 1
  %v294 = vsel %vm291, %v292, %v293
  %v295 = vrot.slane %v91, 1
  %v296 = vrot.slane %v93, 1
  %v297 = vsel %vm291, %v295, %v296
  %v317 = vunpack.c.l.b16 %v63
  %v318 = vunpack.c.l.b16 %v64
  %v319 = vunpack.c.l.b16 %v65
  %v320 = vunpack.c.l.b16 %v66
  %v321 = vunpack.c.l.b16 %v67
  %v322 = vunpack.c.l.b16 %v68
  %v323 = vunpack.c.l.b16 %v69
  %v324 = vunpack.c.l.b16 %v70
  %v325 = vunpack.c.l.b16 %v71
  %v326 = vunpack.c.l.b16 %v72
  %v327 = vunpack.c.l.b16 %v73
  %v328 = vunpack.c.l.b16 %v74
  %v329 = vunpack.c.l.b16 %v75
  %v330 = vunpack.c.l.b16 %v76
  %v331 = vunpack.c.l.b16 %v77
  %v332 = vunpack.c.l.b16 %v78
  %v333 = vunpack.c.l.b16 %v79
  %v334 = vunpack.c.l.b16 %v80
  %v335 = vpack.c.b16 %v318, %v317
  %v336 = vpack.c.b16 %v320, %v319
  %v337 = vpack.c.b16 %v322, %v321
  %v338 = vpack.c.b16 %v324, %v323
  %v339 = vpack.c.b16 %v326, %v325
  %v340 = vpack.c.b16 %v328, %v327
  %v341 = vpack.c.b16 %v330, %v329
  %v342 = vpack.c.b16 %v332, %v331
  %v343 = vpack.c.b16 %v334, %v333
  %v354 = vsel %vm174, %v297, 0
  %356 = vmatpush.bf16.msra.mxu0 %v342
  %357 = vmatpush.bf16.msra.mxu0 %v341
  %358 = vmatpush.bf16.msra.mxu0 %v340
  %359 = vmatpush.bf16.msra.mxu0 %v339
  %360 = vmatpush.bf16.msra.mxu0 %v338
  %361 = vmatpush.bf16.msra.mxu0 %v337
  %362 = vmatpush.bf16.msra.mxu0 %v336
  %363 = vmatpush.bf16.msra.mxu0 %v335
  %364 = vmatmul.bf16.gmra.mxu0 %v294
  %v365 = vpop.f32.mrf.mxu0
  %v366 = vadd.f32 0.0, %v365
  %v367 = vpop.f32.mrf.mxu0
  %v368 = vadd.f32 0.0, %v367
  %369 = vdwg.mxu0
  %370 = vmatpush.bf16.msra.mxu0 0
  %371 = vmatpush.bf16.msra.mxu0 0
  %372 = vmatpush.bf16.msra.mxu0 0
  %373 = vmatpush.bf16.msra.mxu0 0
  %374 = vmatpush.bf16.msra.mxu0 0
  %375 = vmatpush.bf16.msra.mxu0 0
  %376 = vmatpush.bf16.msra.mxu0 0
  %377 = vmatpush.bf16.msra.mxu0 %v343
  %378 = vmatmul.bf16.gmra.mxu0 %v354
  %v379 = vpop.f32.mrf.mxu0
  %v380 = vadd.f32 %v366, %v379
  %v381 = vpop.f32.mrf.mxu0
  %v382 = vadd.f32 %v368, %v381
  %383 = vdwg.mxu0
  %v384 = vadd.f32 %v287, %v380
  %v385 = vadd.f32 %v289, %v382
  %v389 = vunpack.c.l.b16 %v24
  %v390 = vunpack.c.h.b16 %v24
  %v391 = vunpack.c.l.b16 %v25
  %v392 = vunpack.c.h.b16 %v25
  %v393 = vunpack.c.l.b16 %v26
  %v394 = vunpack.c.h.b16 %v26
  %v395 = vpack.c.b16 %v391, %v389
  %v396 = vpack.c.b16 %v392, %v390
  %v397 = vpack.c.b16 %v393, %v393
  %v398 = vpack.c.b16 %v394, %v394
  %v400 = vshrl.u32 %v395, 16
  %v402 = vshll.u32 %v395, 16
  %v404 = vrot.slane %v402, 1
  %v405 = vor.u32 %v400, %v404
  %v407 = vshll.u32 %v397, 16
  %v409 = vrot.slane %v407, 1
  %v410 = vsel %vm94, %v405, %v409
  %v412 = vshrl.u32 %v396, 16
  %v414 = vshll.u32 %v396, 16
  %v416 = vrot.slane %v414, 1
  %v417 = vor.u32 %v412, %v416
  %v419 = vshll.u32 %v398, 16
  %v421 = vrot.slane %v419, 1
  %v422 = vsel %vm94, %v417, %v421
  %v425 = vsel %vm174, %v422, 0
  %427 = vmatpush.bf16.msra.mxu0 %v163
  %428 = vmatpush.bf16.msra.mxu0 %v162
  %429 = vmatpush.bf16.msra.mxu0 %v161
  %430 = vmatpush.bf16.msra.mxu0 %v160
  %431 = vmatpush.bf16.msra.mxu0 %v159
  %432 = vmatpush.bf16.msra.mxu0 %v158
  %433 = vmatpush.bf16.msra.mxu0 %v157
  %434 = vmatpush.bf16.msra.mxu0 %v156
  %435 = vmatmul.bf16.gmra.mxu0 %v410
  %v436 = vpop.f32.mrf.mxu0
  %v437 = vadd.f32 0.0, %v436
  %v438 = vpop.f32.mrf.mxu0
  %v439 = vadd.f32 0.0, %v438
  %440 = vdwg.mxu0
  %441 = vmatpush.bf16.msra.mxu0 0
  %442 = vmatpush.bf16.msra.mxu0 0
  %443 = vmatpush.bf16.msra.mxu0 0
  %444 = vmatpush.bf16.msra.mxu0 0
  %445 = vmatpush.bf16.msra.mxu0 0
  %446 = vmatpush.bf16.msra.mxu0 0
  %447 = vmatpush.bf16.msra.mxu0 0
  %448 = vmatpush.bf16.msra.mxu0 %v164
  %449 = vmatmul.bf16.gmra.mxu0 %v425
  %v450 = vpop.f32.mrf.mxu0
  %v451 = vadd.f32 %v437, %v450
  %v452 = vpop.f32.mrf.mxu0
  %v453 = vadd.f32 %v439, %v452
  %454 = vdwg.mxu0
  %v456 = vsel %vm174, %v396, 0
  %458 = vmatpush.bf16.msra.mxu0 %v250
  %459 = vmatpush.bf16.msra.mxu0 %v249
  %460 = vmatpush.bf16.msra.mxu0 %v248
  %461 = vmatpush.bf16.msra.mxu0 %v247
  %462 = vmatpush.bf16.msra.mxu0 %v246
  %463 = vmatpush.bf16.msra.mxu0 %v245
  %464 = vmatpush.bf16.msra.mxu0 %v244
  %465 = vmatpush.bf16.msra.mxu0 %v243
  %466 = vmatmul.bf16.gmra.mxu0 %v395
  %v467 = vpop.f32.mrf.mxu0
  %v468 = vadd.f32 %v451, %v467
  %v469 = vpop.f32.mrf.mxu0
  %v470 = vadd.f32 %v453, %v469
  %471 = vdwg.mxu0
  %472 = vmatpush.bf16.msra.mxu0 0
  %473 = vmatpush.bf16.msra.mxu0 0
  %474 = vmatpush.bf16.msra.mxu0 0
  %475 = vmatpush.bf16.msra.mxu0 0
  %476 = vmatpush.bf16.msra.mxu0 0
  %477 = vmatpush.bf16.msra.mxu0 0
  %478 = vmatpush.bf16.msra.mxu0 0
  %479 = vmatpush.bf16.msra.mxu0 %v251
  %480 = vmatmul.bf16.gmra.mxu0 %v456
  %v481 = vpop.f32.mrf.mxu0
  %v482 = vadd.f32 %v468, %v481
  %v483 = vpop.f32.mrf.mxu0
  %v484 = vadd.f32 %v470, %v483
  %485 = vdwg.mxu0
  %v486 = vrot.slane %v395, 1
  %v487 = vrot.slane %v397, 1
  %v488 = vsel %vm291, %v486, %v487
  %v489 = vrot.slane %v396, 1
  %v490 = vrot.slane %v398, 1
  %v491 = vsel %vm291, %v489, %v490
  %v494 = vsel %vm174, %v491, 0
  %496 = vmatpush.bf16.msra.mxu0 %v342
  %497 = vmatpush.bf16.msra.mxu0 %v341
  %498 = vmatpush.bf16.msra.mxu0 %v340
  %499 = vmatpush.bf16.msra.mxu0 %v339
  %500 = vmatpush.bf16.msra.mxu0 %v338
  %501 = vmatpush.bf16.msra.mxu0 %v337
  %502 = vmatpush.bf16.msra.mxu0 %v336
  %503 = vmatpush.bf16.msra.mxu0 %v335
  %504 = vmatmul.bf16.gmra.mxu0 %v488
  %v505 = vpop.f32.mrf.mxu0
  %v506 = vadd.f32 0.0, %v505
  %v507 = vpop.f32.mrf.mxu0
  %v508 = vadd.f32 0.0, %v507
  %509 = vdwg.mxu0
  %510 = vmatpush.bf16.msra.mxu0 0
  %511 = vmatpush.bf16.msra.mxu0 0
  %512 = vmatpush.bf16.msra.mxu0 0
  %513 = vmatpush.bf16.msra.mxu0 0
  %514 = vmatpush.bf16.msra.mxu0 0
  %515 = vmatpush.bf16.msra.mxu0 0
  %516 = vmatpush.bf16.msra.mxu0 0
  %517 = vmatpush.bf16.msra.mxu0 %v343
  %518 = vmatmul.bf16.gmra.mxu0 %v494
  %v519 = vpop.f32.mrf.mxu0
  %v520 = vadd.f32 %v506, %v519
  %v521 = vpop.f32.mrf.mxu0
  %v522 = vadd.f32 %v508, %v521
  %523 = vdwg.mxu0
  %v524 = vadd.f32 %v482, %v520
  %v525 = vadd.f32 %v484, %v522
  %vm526 = vcmask 523264
  %v527 = vsel %vm526, %v384, 0.0
  %v528 = vsel %vm526, %v385, 0.0
  %v529 = vadd.f32 %v527, %v528
  %v530 = vrot.slane %v529, 4
  %v531 = vadd.f32 %v529, %v530
  %v532 = vrot.slane %v531, 2
  %v533 = vadd.f32 %v531, %v532
  %v534 = vrot.slane %v533, 1
  %v535 = vadd.f32 %v533, %v534
  %v536 = vmul.f32 %v384, %v384
  %v537 = vmul.f32 %v385, %v385
  %v538 = vsel %vm526, %v536, 0.0
  %v539 = vsel %vm526, %v537, 0.0
  %v540 = vadd.f32 %v538, %v539
  %v541 = vrot.slane %v540, 4
  %v542 = vadd.f32 %v540, %v541
  %v543 = vrot.slane %v542, 2
  %v544 = vadd.f32 %v542, %v543
  %v545 = vrot.slane %v544, 1
  %v546 = vadd.f32 %v544, %v545
  %v547 = vsel %vm526, %v524, 0.0
  %v548 = vsel %vm526, %v525, 0.0
  %v549 = vadd.f32 %v547, %v548
  %v550 = vrot.slane %v549, 4
  %v551 = vadd.f32 %v549, %v550
  %v552 = vrot.slane %v551, 2
  %v553 = vadd.f32 %v551, %v552
  %v554 = vrot.slane %v553, 1
  %v555 = vadd.f32 %v553, %v554
  %v556 = vadd.f32 %v535, %v555
  %v557 = vmul.f32 %v524, %v524
  %v558 = vmul.f32 %v525, %v525
  %v559 = vsel %vm526, %v557, 0.0
  %v560 = vsel %vm526, %v558, 0.0
  %v561 = vadd.f32 %v559, %v560
  %v562 = vrot.slane %v561, 4
  %v563 = vadd.f32 %v561, %v562
  %v564 = vrot.slane %v563, 2
  %v565 = vadd.f32 %v563, %v564
  %v566 = vrot.slane %v565, 1
  %v567 = vadd.f32 %v565, %v566
  %v568 = vadd.f32 %v546, %v567
  %v569 = vld [vmem:[%s4] sm:$0xff]
  %v570 = vld [vmem:[%s4 + $0x8] sm:$0xff]
  %v571 = vld [vmem:[%s4 + $0x10] sm:$0xff]
  %v572 = vld [vmem:[%s4 + $0x18] sm:$0xff]
  %v573 = vld [vmem:[%s4 + $0x20] sm:$0xff]
  %v574 = vld [vmem:[%s4 + $0x28] sm:$0xff]
  %v575 = vld [vmem:[%s4 + $0x30] sm:$0xff]
  %v576 = vld [vmem:[%s4 + $0x38] sm:$0xff]
  %v578 = vsel %vm526, %v556, 0
  %580 = vmatpush.msra.mxu0 0.0
  %581 = vmatpush.msra.mxu0 0.0
  %582 = vmatpush.msra.mxu0 0.0
  %583 = vmatpush.msra.mxu0 0.0
  %584 = vmatpush.msra.mxu0 0.0
  %585 = vmatpush.msra.mxu0 0.0
  %586 = vmatpush.msra.mxu0 0.0
  %587 = vmatpush.msra.mxu0 0.0
  %588 = vmatpush.msra.mxu0 %v576
  %589 = vmatpush.msra.mxu0 %v575
  %590 = vmatpush.msra.mxu0 %v574
  %591 = vmatpush.msra.mxu0 %v573
  %592 = vmatpush.msra.mxu0 %v572
  %593 = vmatpush.msra.mxu0 %v571
  %594 = vmatpush.msra.mxu0 %v570
  %595 = vmatpush.msra.mxu0 %v569
  %596 = vmatmul.f32.gmra.mxu0 %v578
  %v597 = vpop.f32.mrf.mxu0
  %v598 = vadd.f32 0.0, %v597
  %599 = vdwg.mxu0
  %v600 = vmul.f32 %v598, 0.001953125
  %v602 = vsel %vm526, %v568, 0
  %604 = vmatpush.msra.mxu0 0.0
  %605 = vmatpush.msra.mxu0 0.0
  %606 = vmatpush.msra.mxu0 0.0
  %607 = vmatpush.msra.mxu0 0.0
  %608 = vmatpush.msra.mxu0 0.0
  %609 = vmatpush.msra.mxu0 0.0
  %610 = vmatpush.msra.mxu0 0.0
  %611 = vmatpush.msra.mxu0 0.0
  %612 = vmatpush.msra.mxu0 %v576
  %613 = vmatpush.msra.mxu0 %v575
  %614 = vmatpush.msra.mxu0 %v574
  %615 = vmatpush.msra.mxu0 %v573
  %616 = vmatpush.msra.mxu0 %v572
  %617 = vmatpush.msra.mxu0 %v571
  %618 = vmatpush.msra.mxu0 %v570
  %619 = vmatpush.msra.mxu0 %v569
  %620 = vmatmul.f32.gmra.mxu0 %v602
  %v621 = vpop.f32.mrf.mxu0
  %v622 = vadd.f32 0.0, %v621
  %623 = vdwg.mxu0
  %v624 = vmul.f32 %v622, 0.001953125
  %v625 = vmul.f32 %v600, %v600
  %v626 = vsub.f32 %v624, %v625
  %v627 = vmax.f32 %v626, 0.0
  %v628 = vadd.f32 %v627, 1e-05
  %v629 = vrsqrt.pop %v628
  %v630 = vmul.f32 %v629, %v628
  %v631 = vmul.f32 %v630, %v629
  %v632 = vmul.f32 0.5, %v631
  %v633 = vsub.f32 1.5, %v632
  %v634 = vmul.f32 %v629, %v633
  %vm635 = vweird.f32 %v628
  %vm636 = vweird.f32 %v629
  %vm637 = vmor %vm635, %vm636
  %v638 = vsel %vm637, %v629, %v634
  %v639 = vld [vmem:[%s2] sm:$0x1]
  %v640 = vmul.f32 %v638, %v639
  %v641 = vld [vmem:[%s3] sm:$0x1]
  %v642 = vmul.f32 %v600, %v640
  %v643 = vsub.f32 %v641, %v642
  %v644 = vperm.slane %v640, 0
  %v645 = vmul.f32 %v384, %v644
  %v646 = vmul.f32 %v385, %v644
  %v648 = vperm.slane %v643, 0
  %v650 = vadd.f32 %v645, %v648
  %v651 = vadd.f32 %v646, %v648
  %vm652 = vcmp.ge.f32.partialorder %v650, 0.0
  %vm653 = vcmp.ge.f32.partialorder %v651, 0.0
  %v654 = vmul.f32 %v650, 0.2
  %v655 = vmul.f32 %v651, 0.2
  %v656 = vsel %vm652, %v650, %v654
  %v657 = vsel %vm653, %v651, %v655
  %v658 = vpack.c.bf16 %v656, %v656
  %v659 = vpack.c.bf16 %v657, %v657
  %vm660 = vcmask 519168
  %661 = vst.msk [vmem:[%s5] sm:$0xf] %vm660, %v658
  %662 = vst.msk [vmem:[%s5 + $0x4] sm:$0xf] %vm660, %v659
  %v663 = vmul.f32 %v524, %v644
  %v664 = vmul.f32 %v525, %v644
  %v665 = vadd.f32 %v663, %v648
  %v666 = vadd.f32 %v664, %v648
  %vm667 = vcmp.ge.f32.partialorder %v665, 0.0
  %vm668 = vcmp.ge.f32.partialorder %v666, 0.0
  %v669 = vmul.f32 %v665, 0.2
  %v670 = vmul.f32 %v666, 0.2
  %v671 = vsel %vm667, %v665, %v669
  %v672 = vsel %vm668, %v666, %v670
  %v673 = vpack.c.bf16 %v671, %v671
  %v674 = vpack.c.bf16 %v672, %v672
  %675 = vst.msk [vmem:[%s5 + $0x8] sm:$0xf] %vm660, %v673
  %676 = vst.msk [vmem:[%s5 + $0xc] sm:$0xf] %vm660, %v674
  // Predicated region
  $region22: #{depth_decoder_forward.10} parent=0 // pred_check
    _
  $region23: #{depth_decoder_forward.10} parent=0 // pred_check_branch
    %678 = sbr.rel (0) target = $region25
  $region24: #{depth_decoder_forward.10} parent=0 // pred_region
    _
  $region25: #{depth_decoder_forward.10} parent=0 // pred_fallthru
    _
  // Predicated region
  $region26: #{depth_decoder_forward.10} parent=0 // pred_check
    _
  $region27: #{depth_decoder_forward.10} parent=0 // pred_check_branch
    %680 = sbr.rel (0) target = $region29
  $region28: #{depth_decoder_forward.10} parent=0 // pred_region
    _
  $region29: #{depth_decoder_forward.10} parent=0 // pred_fallthru
    _

// kernel: depth_decoder_forward.11
$region0: #{depth_decoder_forward.11}
  #allocation0 [shape = 'u32[]', space=smem, size = 0x4, offset = 0x4, fixed_abs, tag = 'smem constant byte address 0x4 - core index']
  #allocation1 [shape = 'u32[72,128]{1,0:T(1,128)}', space=vmem, size = 0x9000, scoped, tag = 'internal scratch']
  %s0 = inlined_call_operand.vmem [shape: bf16[2,18,72], index: 0, kind: input, shape index: {}]
  %s1 = inlined_call_operand.vmem [shape: bf16[3,72,16], index: 1, kind: input, shape index: {}]
  %s2 = inlined_call_operand.vmem [shape: f32[1,16], index: 2, kind: input, shape index: {}]
  %s3 = inlined_call_operand.hbm [shape: f32[32,16], index: 3, kind: output, shape index: {}]
  %s4 = sld [smem:[#allocation0]]
  $region22: #{depth_decoder_forward.11} parent=0
    _
  %s6 = ssub.s32 1, %s4
  %s7 = scalar_select 0, %s6, %s4
  $region1: #{depth_decoder_forward.11} parent=0
    #allocation2 [shape = 'u8[16384]{0}', space=vmem, size = 0x4000, scoped, tag = 'output window, operand 0, single buffered']
    #allocation3 [shape = 's32[1]{0}', space=sflag, size = 0x4, scoped, tag = 'scoped memory for depth_decoder_forward.11']
    %8 = vsyncpa [#allocation3], 0
    // Predicated region
    $region2: #{depth_decoder_forward.11} parent=1 // pred_check
      _
    $region3: #{depth_decoder_forward.11} parent=1 // pred_check_branch
      %10 = sbr.rel (0) target = $region5
    $region4: #{depth_decoder_forward.11} parent=1 // pred_region
      _
    $region5: #{depth_decoder_forward.11} parent=1 // pred_fallthru
      _
    // Predicated region
    $region6: #{depth_decoder_forward.11} parent=1 // pred_check
      _
    $region7: #{depth_decoder_forward.11} parent=1 // pred_check_branch
      %12 = sbr.rel (0) target = $region9
    $region8: #{depth_decoder_forward.11} parent=1 // pred_region
      _
    $region9: #{depth_decoder_forward.11} parent=1 // pred_fallthru
      _
    // Predicated region
    $region10: #{depth_decoder_forward.11} parent=1 // pred_check
      _
    $region11: #{depth_decoder_forward.11} parent=1 // pred_check_branch
      %14 = sbr.rel (0) target = $region13
    $region12: #{depth_decoder_forward.11} parent=1 // pred_region
      _
    $region13: #{depth_decoder_forward.11} parent=1 // pred_fallthru
      _
    %v16 = vld [vmem:[%s0] sm:$0xf]
    %v17 = vld [vmem:[%s0 + $0x4] sm:$0xf]
    %v18 = vld [vmem:[%s0 + $0x8] sm:$0x1]
    %v19 = vld [vmem:[%s0 + $0xc] sm:$0xf]
    %v20 = vld [vmem:[%s0 + $0x10] sm:$0xf]
    %v21 = vld [vmem:[%s0 + $0x14] sm:$0x1]
    %v22 = vld [vmem:[%s1] sm:$0xf]
    %v23 = vld [vmem:[%s1 + $0x4] sm:$0xf]
    %v24 = vld [vmem:[%s1 + $0x8] sm:$0xf]
    %v25 = vld [vmem:[%s1 + $0xc] sm:$0xf]
    %v26 = vld [vmem:[%s1 + $0x10] sm:$0xf]
    %v27 = vld [vmem:[%s1 + $0x14] sm:$0xf]
    %v28 = vld [vmem:[%s1 + $0x18] sm:$0xf]
    %v29 = vld [vmem:[%s1 + $0x1c] sm:$0xf]
    %v30 = vld [vmem:[%s1 + $0x20] sm:$0xf]
    %v31 = vld [vmem:[%s1 + $0x24] sm:$0xf]
    %v32 = vld [vmem:[%s1 + $0x28] sm:$0xf]
    %v33 = vld [vmem:[%s1 + $0x2c] sm:$0xf]
    %v34 = vld [vmem:[%s1 + $0x30] sm:$0xf]
    %v35 = vld [vmem:[%s1 + $0x34] sm:$0xf]
    %v36 = vld [vmem:[%s1 + $0x38] sm:$0xf]
    %v37 = vld [vmem:[%s1 + $0x3c] sm:$0xf]
    %v38 = vld [vmem:[%s1 + $0x40] sm:$0xf]
    %v39 = vld [vmem:[%s1 + $0x44] sm:$0xf]
    %v40 = vld [vmem:[%s1 + $0x48] sm:$0xf]
    %v41 = vld [vmem:[%s1 + $0x4c] sm:$0xf]
    %v42 = vld [vmem:[%s1 + $0x50] sm:$0xf]
    %v43 = vld [vmem:[%s1 + $0x54] sm:$0xf]
    %v44 = vld [vmem:[%s1 + $0x58] sm:$0xf]
    %v45 = vld [vmem:[%s1 + $0x5c] sm:$0xf]
    %v46 = vld [vmem:[%s1 + $0x60] sm:$0xf]
    %v47 = vld [vmem:[%s1 + $0x64] sm:$0xf]
    %v48 = vld [vmem:[%s1 + $0x68] sm:$0xf]
    %v49 = vld [vmem:[%s2] sm:$0x1]
    %v53 = vunpack.c.l.b16 %v16
    %v54 = vunpack.c.l.b16 %v17
    %v55 = vunpack.c.l.b16 %v18
    %v56 = vpack.c.b16 %v54, %v53
    %v57 = vpack.c.b16 %v55, %v55
    %vm58 = vsmask.f32 7424
    %v60 = vshrl.u32 %v56, 16
    %v62 = vshll.u32 %v56, 16
    %v64 = vrot.slane %v62, 1
    %v65 = vor.u32 %v60, %v64
    %v67 = vshll.u32 %v57, 16
    %v69 = vrot.slane %v67, 1
    %v70 = vsel %vm58, %v65, %v69
    %v80 = vunpack.c.l.b16 %v31
    %v81 = vunpack.c.l.b16 %v32
    %v82 = vunpack.c.l.b16 %v33
    %v83 = vunpack.c.l.b16 %v34
    %v84 = vunpack.c.l.b16 %v35
    %v85 = vunpack.c.l.b16 %v36
    %v86 = vunpack.c.l.b16 %v37
    %v87 = vunpack.c.l.b16 %v38
    %v88 = vunpack.c.l.b16 %v39
    %v89 = vpack.c.b16 %v81, %v80
    %v90 = vpack.c.b16 %v83, %v82
    %v91 = vpack.c.b16 %v85, %v84
    %v92 = vpack.c.b16 %v87, %v86
    %v93 = vpack.c.b16 %v88, %v88
    %vm98 = vcmask 588800
    %v100 = vsel %vm98, %v70, 0
    %vm102 = vcmask 1043456
    %v104 = vsel %vm102, %v93, 0
    %106 = vmatpush.bf16.msra.mxu0 0
    %107 = vmatpush.bf16.msra.mxu0 0
    %108 = vmatpush.bf16.msra.mxu0 0
    %109 = vmatpush.bf16.msra.mxu0 %v104
    %110 = vmatpush.bf16.msra.mxu0 %v92
    %111 = vmatpush.bf16.msra.mxu0 %v91
    %112 = vmatpush.bf16.msra.mxu0 %v90
    %113 = vmatpush.bf16.msra.mxu0 %v89
    %114 = vmatmul.bf16.gmra.mxu0 %v100
    %v115 = vpop.f32.mrf.mxu0
    %v116 = vadd.f32 0.0, %v115
    %v117 = vpop.f32.mrf.mxu0
    %v118 = vadd.f32 0.0, %v117
    %119 = vdwg.mxu0
    %v129 = vunpack.c.l.b16 %v22
    %v130 = vunpack.c.l.b16 %v23
    %v131 = vunpack.c.l.b16 %v24
    %v132 = vunpack.c.l.b16 %v25
    %v133 = vunpack.c.l.b16 %v26
    %v134 = vunpack.c.l.b16 %v27
    %v135 = vunpack.c.l.b16 %v28
    %v136 = vunpack.c.l.b16 %v29
    %v137 = vunpack.c.l.b16 %v30
    %v138 = vpack.c.b16 %v130, %v129
    %v139 = vpack.c.b16 %v132, %v131
    %v140 = vpack.c.b16 %v134, %v133
    %v141 = vpack.c.b16 %v136, %v135
    %v142 = vpack.c.b16 %v137, %v137
    %v147 = vsel %vm98, %v56, 0
    %v150 = vsel %vm102, %v142, 0
    %152 = vmatpush.bf16.msra.mxu0 0
    %153 = vmatpush.bf16.msra.mxu0 0
    %154 = vmatpush.bf16.msra.mxu0 0
    %155 = vmatpush.bf16.msra.mxu0 %v150
    %156 = vmatpush.bf16.msra.mxu0 %v141
    %157 = vmatpush.bf16.msra.mxu0 %v140
    %158 = vmatpush.bf16.msra.mxu0 %v139
    %159 = vmatpush.bf16.msra.mxu0 %v138
    %160 = vmatmul.bf16.gmra.mxu0 %v147
    %v161 = vpop.f32.mrf.mxu0
    %v162 = vadd.f32 %v116, %v161
    %v163 = vpop.f32.mrf.mxu0
    %v164 = vadd.f32 %v118, %v163
    %165 = vdwg.mxu0
    %vm166 = vcmask 1046528
    %v167 = vrot.slane %v56, 1
    %v168 = vrot.slane %v57, 1
    %v169 = vsel %vm166, %v167, %v168
    %v179 = vunpack.c.l.b16 %v40
    %v180 = vunpack.c.l.b16 %v41
    %v181 = vunpack.c.l.b16 %v42
    %v182 = vunpack.c.l.b16 %v43
    %v183 = vunpack.c.l.b16 %v44
    %v184 = vunpack.c.l.b16 %v45
    %v185 = vunpack.c.l.b16 %v46
    %v186 = vunpack.c.l.b16 %v47
    %v187 = vunpack.c.l.b16 %v48
    %v188 = vpack.c.b16 %v180, %v179
    %v189 = vpack.c.b16 %v182, %v181
    %v190 = vpack.c.b16 %v184, %v183
    %v191 = vpack.c.b16 %v186, %v185
    %v192 = vpack.c.b16 %v187, %v187
    %v198 = vsel %vm98, %v169, 0
    %v201 = vsel %vm102, %v192, 0
    %203 = vmatpush.bf16.msra.mxu0 0
    %204 = vmatpush.bf16.msra.mxu0 0
    %205 = vmatpush.bf16.msra.mxu0 0
    %206 = vmatpush.bf16.msra.mxu0 %v201
    %207 = vmatpush.bf16.msra.mxu0 %v191
    %208 = vmatpush.bf16.msra.mxu0 %v190
    %209 = vmatpush.bf16.msra.mxu0 %v189
    %210 = vmatpush.bf16.msra.mxu0 %v188
    %211 = vmatmul.bf16.gmra.mxu0 %v198
    %v212 = vpop.f32.mrf.mxu0
    %v213 = vadd.f32 0.0, %v212
    %v214 = vpop.f32.mrf.mxu0
    %v215 = vadd.f32 0.0, %v214
    %216 = vdwg.mxu0
    %v217 = vadd.f32 %v162, %v213
    %v218 = vadd.f32 %v164, %v215
    %v220 = vperm.slane %v49, 0
    %v222 = vadd.f32 %v217, %v220
    %v223 = vadd.f32 %v218, %v220
    %vm224 = vcmask 130048
    %225 = vst.msk [vmem:[#allocation2] sm:$0xff] %vm224, %v222
    %226 = vst.msk [vmem:[#allocation2 + $0x8] sm:$0xff] %vm224, %v223
    %v230 = vunpack.c.l.b16 %v19
    %v231 = vunpack.c.l.b16 %v20
    %v232 = vunpack.c.l.b16 %v21
    %v233 = vpack.c.b16 %v231, %v230
    %v234 = vpack.c.b16 %v232, %v232
    %v236 = vshrl.u32 %v233, 16
    %v238 = vshll.u32 %v233, 16
    %v240 = vrot.slane %v238, 1
    %v241 = vor.u32 %v236, %v240
    %v243 = vshll.u32 %v234, 16
    %v245 = vrot.slane %v243, 1
    %v246 = vsel %vm58, %v241, %v245
    %v248 = vsel %vm98, %v246, 0
    %250 = vmatpush.bf16.msra.mxu0 0
    %251 = vmatpush.bf16.msra.mxu0 0
    %252 = vmatpush.bf16.msra.mxu0 0
    %253 = vmatpush.bf16.msra.mxu0 %v104
    %254 = vmatpush.bf16.msra.mxu0 %v92
    %255 = vmatpush.bf16.msra.mxu0 %v91
    %256 = vmatpush.bf16.msra.mxu0 %v90
    %257 = vmatpush.bf16.msra.mxu0 %v89
    %258 = vmatmul.bf16.gmra.mxu0 %v248
    %v259 = vpop.f32.mrf.mxu0
    %v260 = vadd.f32 0.0, %v259
    %v261 = vpop.f32.mrf.mxu0
    %v262 = vadd.f32 0.0, %v261
    %263 = vdwg.mxu0
    %v264 = vsel %vm98, %v233, 0
    %266 = vmatpush.bf16.msra.mxu0 0
    %267 = vmatpush.bf16.msra.mxu0 0
    %268 = vmatpush.bf16.msra.mxu0 0
    %269 = vmatpush.bf16.msra.mxu0 %v150
    %270 = vmatpush.bf16.msra.mxu0 %v141
    %271 = vmatpush.bf16.msra.mxu0 %v140
    %272 = vmatpush.bf16.msra.mxu0 %v139
    %273 = vmatpush.bf16.msra.mxu0 %v138
    %274 = vmatmul.bf16.gmra.mxu0 %v264
    %v275 = vpop.f32.mrf.mxu0
    %v276 = vadd.f32 %v260, %v275
    %v277 = vpop.f32.mrf.mxu0
    %v278 = vadd.f32 %v262, %v277
    %279 = vdwg.mxu0
    %v280 = vrot.slane %v233, 1
    %v281 = vrot.slane %v234, 1
    %v282 = vsel %vm166, %v280, %v281
    %v284 = vsel %vm98, %v282, 0
    %286 = vmatpush.bf16.msra.mxu0 0
    %287 = vmatpush.bf16.msra.mxu0 0
    %288 = vmatpush.bf16.msra.mxu0 0
    %289 = vmatpush.bf16.msra.mxu0 %v201
    %290 = vmatpush.bf16.msra.mxu0 %v191
    %291 = vmatpush.bf16.msra.mxu0 %v190
    %292 = vmatpush.bf16.msra.mxu0 %v189
    %293 = vmatpush.bf16.msra.mxu0 %v188
    %294 = vmatmul.bf16.gmra.mxu0 %v284
    %v295 = vpop.f32.mrf.mxu0
    %v296 = vadd.f32 0.0, %v295
    %v297 = vpop.f32.mrf.mxu0
    %v298 = vadd.f32 0.0, %v297
    %299 = vdwg.mxu0
    %v300 = vadd.f32 %v276, %v296
    %v301 = vadd.f32 %v278, %v298
    %v302 = vadd.f32 %v300, %v220
    %v303 = vadd.f32 %v301, %v220
    %304 = vst.msk [vmem:[#allocation2 + $0x10] sm:$0xff] %vm224, %v302
    %305 = vst.msk [vmem:[#allocation2 + $0x18] sm:$0xff] %vm224, %v303
    // Predicated region
    $region14: #{depth_decoder_forward.11} parent=1 // pred_check
      _
    $region15: #{depth_decoder_forward.11} parent=1 // pred_check_branch
      %307 = sbr.rel (0) target = $region17
    $region16: #{depth_decoder_forward.11} parent=1 // pred_region
      %309 = vsyncadd [#allocation3], 0
      %s310 = sshll.u32 [#allocation2], 4
      %s311 = int_to_ptr.vmem [resolvable:$true] %s310
      %s312 = sshll.u32 %s3, 4
      %s313 = int_to_ptr.hbm [resolvable:$true] %s312
      %318 = dma.vmem_to_hbm [thread:$0]  %s311, 512, %s313, [#allocation3], 128, 128, 8
    $region17: #{depth_decoder_forward.11} parent=1 // pred_fallthru
      _
    // Predicated region
    $region18: #{depth_decoder_forward.11} parent=1 // pred_check
      _
    $region19: #{depth_decoder_forward.11} parent=1 // pred_check_branch
      %320 = sbr.rel (0) target = $region21
    $region20: #{depth_decoder_forward.11} parent=1 // pred_region
      %322 = dma.done [#allocation3], 512
    $region21: #{depth_decoder_forward.11} parent=1 // pred_fallthru
      _
    %323 = vsyncpa [#allocation3], 1

</llo_original>
